<compile_context>
chip_gen: v6e
topology: v6e:2x2x1
jax: 0.10.0
libtpu: 0.0.40
codegen_flags: <defaults>
</compile_context>

<pallas_src>
import functools
import numpy as np
import jax
import jax.numpy as jnp
from jax import lax
from jax.experimental import pallas as pl
from jax.experimental.pallas import tpu as pltpu

# ---------------- small, module-consistent config ----------------
N_INPUT_TOKEN = 16     # vocabulary size of input embedding matrix
N_INPUT_EMB   = 32     # input embedding dim
N_HIDDEN      = 32     # LSTM hidden size H  (bi-dir feature = 2H = 64)
N_LAYERS      = 2
N_OUTPUT_EMB  = 32
N_OUTPUT_TOK  = 64
SEQ_LEN       = 8
BATCH         = 2

NEG_INF = -1e30


def _vmem_spec():
    return pl.BlockSpec(memory_space=pltpu.MemorySpace.VMEM)


# ====================== single fused Pallas kernel ======================

def wsd_fused_kernel(tok_ref, a_ref, b_ref, dec_ref, h0_scr, h1_scr,
                     *, S, B, H, V_in):
    """Entire WSD_BiLSTM forward in one VMEM-resident kernel.

    tok_ref: (S*B, 1) int32  token ids, sequence-major flatten (row = t*B+b)
    a_ref:   packed f32 blob, width 8H:
             [wih0_f(V_in) | wih0_b(V_in) | whh0(2H) | wih1_f(2H) | wih1_b(2H)
              | whh1(2H) | wqkv_pad(2H) | b0(1) | b1(1) | bqkv_pad(1)] rows
    b_ref:   packed f32 blob, width V_out:
             [wcd_out(2H) | wcd_ctx(2H) | dbias(1) | prev_perm(SB) | mask(SB)]
    dec_ref: (S*B, V_out) output, sequence-major flatten
    h0_scr/h1_scr: (S*B, 2H) VMEM scratch, per-layer bi-directional outputs
    """
    f32 = jnp.float32
    SB = S * B
    D2 = 2 * H                                     # bi-directional feature width

    # ---- static slices of the two packed parameter blobs ----
    r = 0
    w0f  = a_ref[r:r + V_in, :]; r += V_in          # layer-0 fwd input proj (emb folded)
    w0b  = a_ref[r:r + V_in, :]; r += V_in          # layer-0 bwd input proj (emb folded)
    whh0 = a_ref[r:r + D2, :];   r += D2            # block-structured recurrent weights
    w1f  = a_ref[r:r + D2, :];   r += D2
    w1b  = a_ref[r:r + D2, :];   r += D2
    whh1 = a_ref[r:r + D2, :];   r += D2
    wqkv = a_ref[r:r + D2, 0:3 * D2]; r += D2       # [Wq^T*scale | Wk^T | Wv^T]
    b0   = a_ref[r:r + 1, :];    r += 1
    b1   = a_ref[r:r + 1, :];    r += 1
    bqkv = a_ref[r:r + 1, 0:3 * D2]; r += 1

    s = 0
    wcd_out = b_ref[s:s + D2, :]; s += D2           # folded context2sense @ decoder (out half)
    wcd_ctx = b_ref[s:s + D2, :]; s += D2           # folded (ctx half)
    dbias   = b_ref[s:s + 1, :];  s += 1            # precomputed decoder_bias term
    prevm   = b_ref[s:s + SB, 0:SB]; s += SB        # time-reversal permutation (SB, SB)
    mask    = b_ref[s:s + SB, 0:SB]; s += SB        # 0 same batch elem, -1e30 otherwise

    # ---- embedding lookup folded into layer-0 weights: x0 is the one-hot ----
    onehot = (tok_ref[...] ==
              lax.broadcasted_iota(jnp.int32, (SB, V_in), 1)).astype(f32)

    # ---- one bidirectional LSTM layer: fwd+bwd fused into a single recurrence ----
    # Gate column layout (8 blocks of H): [i_f|i_b | f_f|f_b | o_f|o_b | g_f|g_b]
    def bilstm_layer(x, w_f, w_b, whh_bd, bias, h_scr):
        # Hoisted input projection for the whole sequence, both directions.
        # Backward-direction time reversal handled once via the permutation matmul.
        x_rev = jnp.dot(prevm, x, preferred_element_type=f32)
        gates_x = (jnp.dot(x, w_f, preferred_element_type=f32)
                   + jnp.dot(x_rev, w_b, preferred_element_type=f32)
                   + bias)                                             # (SB, 8H)

        h = jnp.zeros((B, D2), f32)       # carry [h_fwd | h_bwd]
        c = jnp.zeros((B, D2), f32)       # carry [c_fwd | c_bwd]
        for t in range(S):                # fully unrolled: S is static
            g = (gates_x[t * B:(t + 1) * B, :]
                 + jnp.dot(h, whh_bd, preferred_element_type=f32))     # (B, 8H)
            sg = jax.nn.sigmoid(g[:, 0:3 * D2])        # i/f/o gates, contiguous
            gg = jnp.tanh(g[:, 3 * D2:4 * D2])         # g gate, contiguous
            i_g = sg[:, 0:D2]
            f_g = sg[:, D2:2 * D2]
            o_g = sg[:, 2 * D2:3 * D2]
            c = f_g * c + i_g * gg
            h = o_g * jnp.tanh(c)
            # Store straight into the layer-output scratch: fwd half in forward
            # time order, bwd half time-reversed (this step consumed time S-1-t).
            h_scr[t * B:(t + 1) * B, 0:H] = h[:, 0:H]
            h_scr[(S - 1 - t) * B:(S - t) * B, H:D2] = h[:, H:D2]
        return h_scr[...]

    x1  = bilstm_layer(onehot, w0f, w0b, whh0, b0, h0_scr)             # (SB, 2H)
    out = bilstm_layer(x1,     w1f, w1b, whh1, b1, h1_scr)             # (SB, 2H)

    # ---- self-attention: fused QKV (scale pre-folded) + batch-masked softmax ----
    qkv = jnp.dot(out, wqkv, preferred_element_type=f32) + bqkv        # (SB, 6H)
    q = qkv[:, 0:D2]
    k = qkv[:, D2:2 * D2]
    v = qkv[:, 2 * D2:3 * D2]
    u = lax.dot_general(q, k, (((1,), (1,)), ((), ())),
                        preferred_element_type=f32)                    # (SB, SB)
    a = jax.nn.softmax(u + mask, axis=-1)     # cross-batch weights -> exactly 0
    ctx = jnp.dot(a, v, preferred_element_type=f32)                    # (SB, 2H)

    # ---- folded context2sense @ decoder, split to avoid the 4H lane concat ----
    dec_ref[...] = (jnp.dot(out, wcd_out, preferred_element_type=f32)
                    + jnp.dot(ctx, wcd_ctx, preferred_element_type=f32)
                    + dbias)                                           # (SB, V_out)


# ====================== one-time parameter relayout ======================

def prepare_fused_params(p):
    """Relayout PyTorch-layout params into two kernel-ready packed f32 blobs."""
    H = N_HIDDEN
    f32 = jnp.float32
    hi = jax.lax.Precision.HIGHEST   # exact folds (avoid default bf16 matmul passes)

    # torch gate row order is (i, f, g, o); target column-block order per
    # direction pair is [i_f|i_b | f_f|f_b | o_f|o_b | g_f|g_b].
    def fwd_cols(w_t):                        # w_t: (D, 4H) = torch_weight.T
        Z = jnp.zeros((w_t.shape[0], H), f32)
        i, f, g, o = (w_t[:, k * H:(k + 1) * H] for k in range(4))
        return jnp.concatenate([i, Z, f, Z, o, Z, g, Z], axis=1)       # (D, 8H)

    def bwd_cols(w_t):
        Z = jnp.zeros((w_t.shape[0], H), f32)
        i, f, g, o = (w_t[:, k * H:(k + 1) * H] for k in range(4))
        return jnp.concatenate([Z, i, Z, f, Z, o, Z, g], axis=1)       # (D, 8H)

    def bias_cols(bf, bb):                    # bf, bb: (4H,) combined bih+bhh
        blocks = []
        for k in (0, 1, 3, 2):                # i, f, o, g
            blocks.append(bf[k * H:(k + 1) * H])
            blocks.append(bb[k * H:(k + 1) * H])
        return jnp.concatenate(blocks).reshape(1, 8 * H)

    G8 = 8 * H

    # layer 0: fold the (frozen) embedding table into the input projection
    w0f = jnp.dot(p['emb'], fwd_cols(p['wih_0_fwd'].T), precision=hi)  # (V_in, 8H)
    w0b = jnp.dot(p['emb'], bwd_cols(p['wih_0_bwd'].T), precision=hi)
    whh0 = jnp.concatenate([fwd_cols(p['whh_0_fwd'].T),
                            bwd_cols(p['whh_0_bwd'].T)], axis=0)       # (2H, 8H)
    b0 = bias_cols(p['bih_0_fwd'] + p['bhh_0_fwd'],
                   p['bih_0_bwd'] + p['bhh_0_bwd'])

    # layer 1
    w1f = fwd_cols(p['wih_1_fwd'].T)                                   # (2H, 8H)
    w1b = bwd_cols(p['wih_1_bwd'].T)
    whh1 = jnp.concatenate([fwd_cols(p['whh_1_fwd'].T),
                            bwd_cols(p['whh_1_bwd'].T)], axis=0)
    b1 = bias_cols(p['bih_1_fwd'] + p['bhh_1_fwd'],
                   p['bih_1_bwd'] + p['bhh_1_bwd'])

    # attention QKV, with the 1/sqrt(2H) scale folded into q
    scale = 1.0 / float(np.sqrt(2.0 * H))
    wqkv = jnp.concatenate([p['wq'].T * scale, p['wk'].T, p['wv'].T], axis=1)  # (2H, 6H)
    bqkv = jnp.concatenate([p['bq'] * scale, p['bk'], p['bv']]).reshape(1, -1)
    wqkv_pad = jnp.pad(wqkv, ((0, 0), (0, G8 - wqkv.shape[1])))
    bqkv_pad = jnp.pad(bqkv, ((0, 0), (0, G8 - bqkv.shape[1])))

    blob_a = jnp.concatenate(
        [w0f, w0b, whh0, w1f, w1b, whh1, wqkv_pad, b0, b1, bqkv_pad],
        axis=0).astype(f32)                                            # (355, 8H)

    # decoder side: fold context2sense (no bias) and decoder (no bias) into one
    # (4H, V_out) map, split into out/ctx halves; precompute decoder_bias term.
    wcd = jnp.dot(p['wc'].T, p['wd'].T, precision=hi)                  # (4H, V_out)
    dbias = jnp.sum(p['wd'] * p['wb'], axis=-1).reshape(1, -1)         # (1, V_out)
    V_out = wcd.shape[1]

    SB = SEQ_LEN * BATCH
    assert V_out >= SB, "mask/permutation padding assumes V_out >= S*B"
    ridx = np.arange(SB)
    src = (SEQ_LEN - 1 - ridx // BATCH) * BATCH + ridx % BATCH
    prev_np = np.zeros((SB, SB), np.float32)
    prev_np[ridx, src] = 1.0                                           # time reversal
    rb = ridx.reshape(SB, 1) % BATCH
    cb = ridx.reshape(1, SB) % BATCH
    mask_np = np.where(rb == cb, 0.0, NEG_INF).astype(np.float32)      # cross-batch mask

    def pad_to(m, width):
        m = jnp.asarray(m, f32)
        return jnp.pad(m, ((0, 0), (0, width - m.shape[1])))

    blob_b = jnp.concatenate(
        [wcd[:2 * H, :], wcd[2 * H:, :], dbias,
         pad_to(prev_np, V_out), pad_to(mask_np, V_out)],
        axis=0).astype(f32)                                            # (161, V_out)

    return blob_a, blob_b


# ====================== wrapper ======================

@jax.jit
def wsd_bilstm_forward(x_tokens, blob_a, blob_b):
    """x_tokens: (S, B) int32 token ids -> (S, B, n_output_token) float32."""
    S, B = x_tokens.shape
    tok = x_tokens.reshape(S * B, 1).astype(jnp.int32)   # seq-major flatten (metadata only)
    kernel = functools.partial(wsd_fused_kernel, S=S, B=B, H=N_HIDDEN,
                               V_in=N_INPUT_TOKEN)
    dec_flat = pl.pallas_call(
        kernel,
        out_shape=jax.ShapeDtypeStruct((S * B, N_OUTPUT_TOK), jnp.float32),
        in_specs=[_vmem_spec()] * 3,
        out_specs=_vmem_spec(),
        scratch_shapes=[pltpu.VMEM((S * B, 2 * N_HIDDEN), jnp.float32),
                        pltpu.VMEM((S * B, 2 * N_HIDDEN), jnp.float32)],
    )(tok, blob_a, blob_b)
    # (S*B, V) -> (S, B, V) is a free, metadata-only reshape of a contiguous array.
    return dec_flat.reshape(S, B, N_OUTPUT_TOK)


# ====================== pure-JAX reference (for verification) ======================

def _lstm_dir_ref(x_seq, wih, whh, bih, bhh):
    H = whh.shape[1]
    B = x_seq.shape[1]

    def step(carry, x_t):
        hh, cc = carry
        gates = x_t @ wih.T + bih + hh @ whh.T + bhh
        i = jax.nn.sigmoid(gates[:, :H])
        f = jax.nn.sigmoid(gates[:, H:2 * H])
        g = jnp.tanh(gates[:, 2 * H:3 * H])
        o = jax.nn.sigmoid(gates[:, 3 * H:])
        cc = f * cc + i * g
        hh = o * jnp.tanh(cc)
        return (hh, cc), hh

    init = (jnp.zeros((B, H), jnp.float32), jnp.zeros((B, H), jnp.float32))
    return lax.scan(step, init, x_seq)[1]


def wsd_bilstm_ref(x_tokens, p):
    emb = jnp.take(p['emb'], x_tokens, axis=0)
    h = emb
    for l in range(N_LAYERS):
        fwd = _lstm_dir_ref(h, p[f'wih_{l}_fwd'], p[f'whh_{l}_fwd'],
                            p[f'bih_{l}_fwd'], p[f'bhh_{l}_fwd'])
        bwd = _lstm_dir_ref(h[::-1], p[f'wih_{l}_bwd'], p[f'whh_{l}_bwd'],
                            p[f'bih_{l}_bwd'], p[f'bhh_{l}_bwd'])[::-1]
        h = jnp.concatenate([fwd, bwd], axis=-1)
    out = h                                                        # (S, B, 2H)
    q = out @ p['wq'].T + p['bq']
    k = out @ p['wk'].T + p['bk']
    v = out @ p['wv'].T + p['bv']
    u = jnp.einsum('sbd,tbd->bst', q, k) / np.sqrt(2 * N_HIDDEN)   # (B, S, S)
    a = jax.nn.softmax(u, axis=-1)
    c = jnp.einsum('bst,tbd->sbd', a, v)                           # (S, B, 2H)
    cat = jnp.concatenate([out, c], axis=-1)
    sense = cat @ p['wc'].T
    dec = sense @ p['wd'].T
    bias = (p['wd'] * p['wb']).sum(-1)
    return dec + bias


# ====================== deterministic parameter construction ======================

def make_params(key):
    keys = iter(jax.random.split(key, 64))

    def u(shape, scale=0.1):
        return jax.random.uniform(next(keys), shape, jnp.float32, -scale, scale)

    p = {}
    p['emb'] = u((N_INPUT_TOKEN, N_INPUT_EMB), 1.0)      # "pretrained" input embeddings
    H = N_HIDDEN
    for l in range(N_LAYERS):
        in_dim = N_INPUT_EMB if l == 0 else 2 * H
        sc = 1.0 / float(np.sqrt(H))
        for d in ('fwd', 'bwd'):
            p[f'wih_{l}_{d}'] = u((4 * H, in_dim), sc)
            p[f'whh_{l}_{d}'] = u((4 * H, H), sc)
            p[f'bih_{l}_{d}'] = u((4 * H,), sc)
            p[f'bhh_{l}_{d}'] = u((4 * H,), sc)
    D2 = 2 * H
    for name in ('q', 'k', 'v'):
        p[f'w{name}'] = u((D2, D2))                      # uniform(-0.1, 0.1)
        p[f'b{name}'] = jnp.zeros((D2,), jnp.float32)    # bias.fill_(0)
    p['wc'] = u((N_OUTPUT_EMB, 2 * D2))                  # context2sense (no bias)
    p['wd'] = u((N_OUTPUT_TOK, N_OUTPUT_EMB))            # decoder (no bias)
    p['wb'] = u((1, N_OUTPUT_EMB))                       # decoder_bias weight
    return p


if __name__ == "__main__":
    key = jax.random.PRNGKey(0)
    pkey, xkey = jax.random.split(key)
    params = make_params(pkey)
    blob_a, blob_b = prepare_fused_params(params)        # one-time relayout
    x = jax.random.randint(xkey, (SEQ_LEN, BATCH), 0, N_INPUT_TOKEN, dtype=jnp.int32)

    dec = jax.block_until_ready(wsd_bilstm_forward(x, blob_a, blob_b))
    ref = jax.block_until_ready(wsd_bilstm_ref(x, params))

    assert dec.shape == (SEQ_LEN, BATCH, N_OUTPUT_TOK), dec.shape
    np.testing.assert_allclose(np.asarray(dec), np.asarray(ref), rtol=2e-3, atol=2e-3)
    print("KERNEL_OK")
</pallas_src>

<mosaic_0001>
module attributes {stable_mosaic.version = 11 : i64} {
  func.func @wsd_fused_kernel(%arg0: memref<16x1xi32, #tpu.memory_space<vmem>>, %arg1: memref<355x256xf32, #tpu.memory_space<vmem>>, %arg2: memref<161x64xf32, #tpu.memory_space<vmem>>, %arg3: memref<16x64xf32, #tpu.memory_space<vmem>>, %arg4: memref<16x64xf32, #tpu.memory_space<vmem>>, %arg5: memref<16x64xf32, #tpu.memory_space<vmem>>) attributes {dimension_semantics = [], scalar_prefetch = 0 : i64, scratch_operands = 2 : i64, tpu.core_type = #tpu.core_type<tc>} {
    %c0 = arith.constant 0 : index
    %c0_0 = arith.constant 0 : index
    %0 = vector.load %arg1[%c0, %c0_0] : memref<355x256xf32, #tpu.memory_space<vmem>>, vector<16x256xf32>
    %c16 = arith.constant 16 : index
    %c0_1 = arith.constant 0 : index
    %1 = vector.load %arg1[%c16, %c0_1] : memref<355x256xf32, #tpu.memory_space<vmem>>, vector<16x256xf32>
    %c32 = arith.constant 32 : index
    %c0_2 = arith.constant 0 : index
    %2 = vector.load %arg1[%c32, %c0_2] : memref<355x256xf32, #tpu.memory_space<vmem>>, vector<64x256xf32>
    %c96 = arith.constant 96 : index
    %c0_3 = arith.constant 0 : index
    %3 = vector.load %arg1[%c96, %c0_3] : memref<355x256xf32, #tpu.memory_space<vmem>>, vector<64x256xf32>
    %c160 = arith.constant 160 : index
    %c0_4 = arith.constant 0 : index
    %4 = vector.load %arg1[%c160, %c0_4] : memref<355x256xf32, #tpu.memory_space<vmem>>, vector<64x256xf32>
    %c224 = arith.constant 224 : index
    %c0_5 = arith.constant 0 : index
    %5 = vector.load %arg1[%c224, %c0_5] : memref<355x256xf32, #tpu.memory_space<vmem>>, vector<64x256xf32>
    %c288 = arith.constant 288 : index
    %c0_6 = arith.constant 0 : index
    %6 = vector.load %arg1[%c288, %c0_6] : memref<355x256xf32, #tpu.memory_space<vmem>>, vector<64x192xf32>
    %c352 = arith.constant 352 : index
    %c0_7 = arith.constant 0 : index
    %7 = vector.load %arg1[%c352, %c0_7] : memref<355x256xf32, #tpu.memory_space<vmem>>, vector<1x256xf32>
    %c353 = arith.constant 353 : index
    %c0_8 = arith.constant 0 : index
    %8 = vector.load %arg1[%c353, %c0_8] : memref<355x256xf32, #tpu.memory_space<vmem>>, vector<1x256xf32>
    %c354 = arith.constant 354 : index
    %c0_9 = arith.constant 0 : index
    %9 = vector.load %arg1[%c354, %c0_9] : memref<355x256xf32, #tpu.memory_space<vmem>>, vector<1x192xf32>
    %c0_10 = arith.constant 0 : index
    %c0_11 = arith.constant 0 : index
    %10 = vector.load %arg2[%c0_10, %c0_11] : memref<161x64xf32, #tpu.memory_space<vmem>>, vector<64x64xf32>
    %c64 = arith.constant 64 : index
    %c0_12 = arith.constant 0 : index
    %11 = vector.load %arg2[%c64, %c0_12] : memref<161x64xf32, #tpu.memory_space<vmem>>, vector<64x64xf32>
    %c128 = arith.constant 128 : index
    %c0_13 = arith.constant 0 : index
    %12 = vector.load %arg2[%c128, %c0_13] : memref<161x64xf32, #tpu.memory_space<vmem>>, vector<1x64xf32>
    %c129 = arith.constant 129 : index
    %c0_14 = arith.constant 0 : index
    %13 = vector.load %arg2[%c129, %c0_14] : memref<161x64xf32, #tpu.memory_space<vmem>>, vector<16x16xf32>
    %c145 = arith.constant 145 : index
    %c0_15 = arith.constant 0 : index
    %14 = vector.load %arg2[%c145, %c0_15] : memref<161x64xf32, #tpu.memory_space<vmem>>, vector<16x16xf32>
    %c0_16 = arith.constant 0 : index
    %c0_17 = arith.constant 0 : index
    %15 = vector.load %arg0[%c0_16, %c0_17] : memref<16x1xi32, #tpu.memory_space<vmem>>, vector<16x1xi32>
    %16 = tpu.iota {dimensions = array<i32: 1>} : vector<16x16xi32>
    %17 = vector.broadcast %15 : vector<16x1xi32> to vector<16x16xi32>
    %18 = arith.cmpi eq, %17, %16 : vector<16x16xi32>
    %19 = arith.extui %18 : vector<16x16xi1> to vector<16x16xi32>
    %20 = arith.sitofp %19 : vector<16x16xi32> to vector<16x16xf32>
    %cst = arith.constant dense<0.000000e+00> : vector<16x16xf32>
    %21 = tpu.matmul %13, %20, %cst {dimension_numbers = #tpu.dot_dimension_numbers<[1], [0], [0], [1], [0, 0, 1, 1], [], []>} : vector<16x16xf32>, vector<16x16xf32>, vector<16x16xf32> -> vector<16x16xf32>
    %cst_18 = arith.constant dense<0.000000e+00> : vector<16x256xf32>
    %22 = tpu.matmul %20, %0, %cst_18 {dimension_numbers = #tpu.dot_dimension_numbers<[1], [0], [0], [1], [0, 0, 1, 1], [], []>} : vector<16x16xf32>, vector<16x256xf32>, vector<16x256xf32> -> vector<16x256xf32>
    %cst_19 = arith.constant dense<0.000000e+00> : vector<16x256xf32>
    %23 = tpu.matmul %21, %1, %cst_19 {dimension_numbers = #tpu.dot_dimension_numbers<[1], [0], [0], [1], [0, 0, 1, 1], [], []>} : vector<16x16xf32>, vector<16x256xf32>, vector<16x256xf32> -> vector<16x256xf32>
    %24 = arith.addf %22, %23 : vector<16x256xf32>
    %25 = vector.broadcast %7 : vector<1x256xf32> to vector<16x256xf32>
    %26 = arith.addf %24, %25 : vector<16x256xf32>
    %cst_20 = arith.constant 0.000000e+00 : f32
    %27 = vector.broadcast %cst_20 : f32 to vector<2x64xf32>
    %cst_21 = arith.constant 0.000000e+00 : f32
    %28 = vector.broadcast %cst_21 : f32 to vector<2x64xf32>
    %29 = vector.extract_strided_slice %26 {offsets = [0, 0], sizes = [2, 256], strides = [1, 1]} : vector<16x256xf32> to vector<2x256xf32>
    %cst_22 = arith.constant dense<0.000000e+00> : vector<2x256xf32>
    %30 = tpu.matmul %27, %2, %cst_22 {dimension_numbers = #tpu.dot_dimension_numbers<[1], [0], [0], [1], [0, 0, 1, 1], [], []>} : vector<2x64xf32>, vector<64x256xf32>, vector<2x256xf32> -> vector<2x256xf32>
    %31 = arith.addf %29, %30 : vector<2x256xf32>
    %32 = vector.extract_strided_slice %31 {offsets = [0, 0], sizes = [2, 192], strides = [1, 1]} : vector<2x256xf32> to vector<2x192xf32>
    %33 = arith.negf %32 : vector<2x192xf32>
    %34 = math.exp %33 : vector<2x192xf32>
    %cst_23 = arith.constant 1.000000e+00 : f32
    %35 = vector.broadcast %cst_23 : f32 to vector<2x192xf32>
    %36 = arith.addf %35, %34 : vector<2x192xf32>
    %37 = arith.divf %35, %36 : vector<2x192xf32>
    %38 = vector.extract_strided_slice %31 {offsets = [0, 192], sizes = [2, 64], strides = [1, 1]} : vector<2x256xf32> to vector<2x64xf32>
    %39 = math.tanh %38 : vector<2x64xf32>
    %40 = vector.extract_strided_slice %37 {offsets = [0, 0], sizes = [2, 64], strides = [1, 1]} : vector<2x192xf32> to vector<2x64xf32>
    %41 = vector.extract_strided_slice %37 {offsets = [0, 64], sizes = [2, 64], strides = [1, 1]} : vector<2x192xf32> to vector<2x64xf32>
    %42 = vector.extract_strided_slice %37 {offsets = [0, 128], sizes = [2, 64], strides = [1, 1]} : vector<2x192xf32> to vector<2x64xf32>
    %43 = arith.mulf %41, %28 : vector<2x64xf32>
    %44 = arith.mulf %40, %39 : vector<2x64xf32>
    %45 = arith.addf %43, %44 : vector<2x64xf32>
    %46 = math.tanh %45 : vector<2x64xf32>
    %47 = arith.mulf %42, %46 : vector<2x64xf32>
    %48 = vector.extract_strided_slice %47 {offsets = [0, 0], sizes = [2, 32], strides = [1, 1]} : vector<2x64xf32> to vector<2x32xf32>
    %c0_24 = arith.constant 0 : index
    %c0_25 = arith.constant 0 : index
    %49 = vector.load %arg4[%c0_24, %c0_25] : memref<16x64xf32, #tpu.memory_space<vmem>>, vector<2x32xf32>
    tpu.vector_store %arg4[%c0_24, %c0_25], %48 {strides = array<i32>} : memref<16x64xf32, #tpu.memory_space<vmem>>, vector<2x32xf32>,
    %50 = vector.extract_strided_slice %47 {offsets = [0, 32], sizes = [2, 32], strides = [1, 1]} : vector<2x64xf32> to vector<2x32xf32>
    %c14 = arith.constant 14 : index
    %c32_26 = arith.constant 32 : index
    %51 = vector.load %arg4[%c14, %c32_26] : memref<16x64xf32, #tpu.memory_space<vmem>>, vector<2x32xf32>
    tpu.vector_store %arg4[%c14, %c32_26], %50 {strides = array<i32>} : memref<16x64xf32, #tpu.memory_space<vmem>>, vector<2x32xf32>,
    %52 = vector.extract_strided_slice %26 {offsets = [2, 0], sizes = [2, 256], strides = [1, 1]} : vector<16x256xf32> to vector<2x256xf32>
    %cst_27 = arith.constant dense<0.000000e+00> : vector<2x256xf32>
    %53 = tpu.matmul %47, %2, %cst_27 {dimension_numbers = #tpu.dot_dimension_numbers<[1], [0], [0], [1], [0, 0, 1, 1], [], []>} : vector<2x64xf32>, vector<64x256xf32>, vector<2x256xf32> -> vector<2x256xf32>
    %54 = arith.addf %52, %53 : vector<2x256xf32>
    %55 = vector.extract_strided_slice %54 {offsets = [0, 0], sizes = [2, 192], strides = [1, 1]} : vector<2x256xf32> to vector<2x192xf32>
    %56 = arith.negf %55 : vector<2x192xf32>
    %57 = math.exp %56 : vector<2x192xf32>
    %cst_28 = arith.constant 1.000000e+00 : f32
    %58 = vector.broadcast %cst_28 : f32 to vector<2x192xf32>
    %59 = arith.addf %58, %57 : vector<2x192xf32>
    %60 = arith.divf %58, %59 : vector<2x192xf32>
    %61 = vector.extract_strided_slice %54 {offsets = [0, 192], sizes = [2, 64], strides = [1, 1]} : vector<2x256xf32> to vector<2x64xf32>
    %62 = math.tanh %61 : vector<2x64xf32>
    %63 = vector.extract_strided_slice %60 {offsets = [0, 0], sizes = [2, 64], strides = [1, 1]} : vector<2x192xf32> to vector<2x64xf32>
    %64 = vector.extract_strided_slice %60 {offsets = [0, 64], sizes = [2, 64], strides = [1, 1]} : vector<2x192xf32> to vector<2x64xf32>
    %65 = vector.extract_strided_slice %60 {offsets = [0, 128], sizes = [2, 64], strides = [1, 1]} : vector<2x192xf32> to vector<2x64xf32>
    %66 = arith.mulf %64, %45 : vector<2x64xf32>
    %67 = arith.mulf %63, %62 : vector<2x64xf32>
    %68 = arith.addf %66, %67 : vector<2x64xf32>
    %69 = math.tanh %68 : vector<2x64xf32>
    %70 = arith.mulf %65, %69 : vector<2x64xf32>
    %71 = vector.extract_strided_slice %70 {offsets = [0, 0], sizes = [2, 32], strides = [1, 1]} : vector<2x64xf32> to vector<2x32xf32>
    %c2 = arith.constant 2 : index
    %c0_29 = arith.constant 0 : index
    %72 = vector.load %arg4[%c2, %c0_29] : memref<16x64xf32, #tpu.memory_space<vmem>>, vector<2x32xf32>
    tpu.vector_store %arg4[%c2, %c0_29], %71 {strides = array<i32>} : memref<16x64xf32, #tpu.memory_space<vmem>>, vector<2x32xf32>,
    %73 = vector.extract_strided_slice %70 {offsets = [0, 32], sizes = [2, 32], strides = [1, 1]} : vector<2x64xf32> to vector<2x32xf32>
    %c12 = arith.constant 12 : index
    %c32_30 = arith.constant 32 : index
    %74 = vector.load %arg4[%c12, %c32_30] : memref<16x64xf32, #tpu.memory_space<vmem>>, vector<2x32xf32>
    tpu.vector_store %arg4[%c12, %c32_30], %73 {strides = array<i32>} : memref<16x64xf32, #tpu.memory_space<vmem>>, vector<2x32xf32>,
    %75 = vector.extract_strided_slice %26 {offsets = [4, 0], sizes = [2, 256], strides = [1, 1]} : vector<16x256xf32> to vector<2x256xf32>
    %cst_31 = arith.constant dense<0.000000e+00> : vector<2x256xf32>
    %76 = tpu.matmul %70, %2, %cst_31 {dimension_numbers = #tpu.dot_dimension_numbers<[1], [0], [0], [1], [0, 0, 1, 1], [], []>} : vector<2x64xf32>, vector<64x256xf32>, vector<2x256xf32> -> vector<2x256xf32>
    %77 = arith.addf %75, %76 : vector<2x256xf32>
    %78 = vector.extract_strided_slice %77 {offsets = [0, 0], sizes = [2, 192], strides = [1, 1]} : vector<2x256xf32> to vector<2x192xf32>
    %79 = arith.negf %78 : vector<2x192xf32>
    %80 = math.exp %79 : vector<2x192xf32>
    %cst_32 = arith.constant 1.000000e+00 : f32
    %81 = vector.broadcast %cst_32 : f32 to vector<2x192xf32>
    %82 = arith.addf %81, %80 : vector<2x192xf32>
    %83 = arith.divf %81, %82 : vector<2x192xf32>
    %84 = vector.extract_strided_slice %77 {offsets = [0, 192], sizes = [2, 64], strides = [1, 1]} : vector<2x256xf32> to vector<2x64xf32>
    %85 = math.tanh %84 : vector<2x64xf32>
    %86 = vector.extract_strided_slice %83 {offsets = [0, 0], sizes = [2, 64], strides = [1, 1]} : vector<2x192xf32> to vector<2x64xf32>
    %87 = vector.extract_strided_slice %83 {offsets = [0, 64], sizes = [2, 64], strides = [1, 1]} : vector<2x192xf32> to vector<2x64xf32>
    %88 = vector.extract_strided_slice %83 {offsets = [0, 128], sizes = [2, 64], strides = [1, 1]} : vector<2x192xf32> to vector<2x64xf32>
    %89 = arith.mulf %87, %68 : vector<2x64xf32>
    %90 = arith.mulf %86, %85 : vector<2x64xf32>
    %91 = arith.addf %89, %90 : vector<2x64xf32>
    %92 = math.tanh %91 : vector<2x64xf32>
    %93 = arith.mulf %88, %92 : vector<2x64xf32>
    %94 = vector.extract_strided_slice %93 {offsets = [0, 0], sizes = [2, 32], strides = [1, 1]} : vector<2x64xf32> to vector<2x32xf32>
    %c4 = arith.constant 4 : index
    %c0_33 = arith.constant 0 : index
    %95 = vector.load %arg4[%c4, %c0_33] : memref<16x64xf32, #tpu.memory_space<vmem>>, vector<2x32xf32>
    tpu.vector_store %arg4[%c4, %c0_33], %94 {strides = array<i32>} : memref<16x64xf32, #tpu.memory_space<vmem>>, vector<2x32xf32>,
    %96 = vector.extract_strided_slice %93 {offsets = [0, 32], sizes = [2, 32], strides = [1, 1]} : vector<2x64xf32> to vector<2x32xf32>
    %c10 = arith.constant 10 : index
    %c32_34 = arith.constant 32 : index
    %97 = vector.load %arg4[%c10, %c32_34] : memref<16x64xf32, #tpu.memory_space<vmem>>, vector<2x32xf32>
    tpu.vector_store %arg4[%c10, %c32_34], %96 {strides = array<i32>} : memref<16x64xf32, #tpu.memory_space<vmem>>, vector<2x32xf32>,
    %98 = vector.extract_strided_slice %26 {offsets = [6, 0], sizes = [2, 256], strides = [1, 1]} : vector<16x256xf32> to vector<2x256xf32>
    %cst_35 = arith.constant dense<0.000000e+00> : vector<2x256xf32>
    %99 = tpu.matmul %93, %2, %cst_35 {dimension_numbers = #tpu.dot_dimension_numbers<[1], [0], [0], [1], [0, 0, 1, 1], [], []>} : vector<2x64xf32>, vector<64x256xf32>, vector<2x256xf32> -> vector<2x256xf32>
    %100 = arith.addf %98, %99 : vector<2x256xf32>
    %101 = vector.extract_strided_slice %100 {offsets = [0, 0], sizes = [2, 192], strides = [1, 1]} : vector<2x256xf32> to vector<2x192xf32>
    %102 = arith.negf %101 : vector<2x192xf32>
    %103 = math.exp %102 : vector<2x192xf32>
    %cst_36 = arith.constant 1.000000e+00 : f32
    %104 = vector.broadcast %cst_36 : f32 to vector<2x192xf32>
    %105 = arith.addf %104, %103 : vector<2x192xf32>
    %106 = arith.divf %104, %105 : vector<2x192xf32>
    %107 = vector.extract_strided_slice %100 {offsets = [0, 192], sizes = [2, 64], strides = [1, 1]} : vector<2x256xf32> to vector<2x64xf32>
    %108 = math.tanh %107 : vector<2x64xf32>
    %109 = vector.extract_strided_slice %106 {offsets = [0, 0], sizes = [2, 64], strides = [1, 1]} : vector<2x192xf32> to vector<2x64xf32>
    %110 = vector.extract_strided_slice %106 {offsets = [0, 64], sizes = [2, 64], strides = [1, 1]} : vector<2x192xf32> to vector<2x64xf32>
    %111 = vector.extract_strided_slice %106 {offsets = [0, 128], sizes = [2, 64], strides = [1, 1]} : vector<2x192xf32> to vector<2x64xf32>
    %112 = arith.mulf %110, %91 : vector<2x64xf32>
    %113 = arith.mulf %109, %108 : vector<2x64xf32>
    %114 = arith.addf %112, %113 : vector<2x64xf32>
    %115 = math.tanh %114 : vector<2x64xf32>
    %116 = arith.mulf %111, %115 : vector<2x64xf32>
    %117 = vector.extract_strided_slice %116 {offsets = [0, 0], sizes = [2, 32], strides = [1, 1]} : vector<2x64xf32> to vector<2x32xf32>
    %c6 = arith.constant 6 : index
    %c0_37 = arith.constant 0 : index
    %118 = vector.load %arg4[%c6, %c0_37] : memref<16x64xf32, #tpu.memory_space<vmem>>, vector<2x32xf32>
    tpu.vector_store %arg4[%c6, %c0_37], %117 {strides = array<i32>} : memref<16x64xf32, #tpu.memory_space<vmem>>, vector<2x32xf32>,
    %119 = vector.extract_strided_slice %116 {offsets = [0, 32], sizes = [2, 32], strides = [1, 1]} : vector<2x64xf32> to vector<2x32xf32>
    %c8 = arith.constant 8 : index
    %c32_38 = arith.constant 32 : index
    %120 = vector.load %arg4[%c8, %c32_38] : memref<16x64xf32, #tpu.memory_space<vmem>>, vector<2x32xf32>
    tpu.vector_store %arg4[%c8, %c32_38], %119 {strides = array<i32>} : memref<16x64xf32, #tpu.memory_space<vmem>>, vector<2x32xf32>,
    %121 = vector.extract_strided_slice %26 {offsets = [8, 0], sizes = [2, 256], strides = [1, 1]} : vector<16x256xf32> to vector<2x256xf32>
    %cst_39 = arith.constant dense<0.000000e+00> : vector<2x256xf32>
    %122 = tpu.matmul %116, %2, %cst_39 {dimension_numbers = #tpu.dot_dimension_numbers<[1], [0], [0], [1], [0, 0, 1, 1], [], []>} : vector<2x64xf32>, vector<64x256xf32>, vector<2x256xf32> -> vector<2x256xf32>
    %123 = arith.addf %121, %122 : vector<2x256xf32>
    %124 = vector.extract_strided_slice %123 {offsets = [0, 0], sizes = [2, 192], strides = [1, 1]} : vector<2x256xf32> to vector<2x192xf32>
    %125 = arith.negf %124 : vector<2x192xf32>
    %126 = math.exp %125 : vector<2x192xf32>
    %cst_40 = arith.constant 1.000000e+00 : f32
    %127 = vector.broadcast %cst_40 : f32 to vector<2x192xf32>
    %128 = arith.addf %127, %126 : vector<2x192xf32>
    %129 = arith.divf %127, %128 : vector<2x192xf32>
    %130 = vector.extract_strided_slice %123 {offsets = [0, 192], sizes = [2, 64], strides = [1, 1]} : vector<2x256xf32> to vector<2x64xf32>
    %131 = math.tanh %130 : vector<2x64xf32>
    %132 = vector.extract_strided_slice %129 {offsets = [0, 0], sizes = [2, 64], strides = [1, 1]} : vector<2x192xf32> to vector<2x64xf32>
    %133 = vector.extract_strided_slice %129 {offsets = [0, 64], sizes = [2, 64], strides = [1, 1]} : vector<2x192xf32> to vector<2x64xf32>
    %134 = vector.extract_strided_slice %129 {offsets = [0, 128], sizes = [2, 64], strides = [1, 1]} : vector<2x192xf32> to vector<2x64xf32>
    %135 = arith.mulf %133, %114 : vector<2x64xf32>
    %136 = arith.mulf %132, %131 : vector<2x64xf32>
    %137 = arith.addf %135, %136 : vector<2x64xf32>
    %138 = math.tanh %137 : vector<2x64xf32>
    %139 = arith.mulf %134, %138 : vector<2x64xf32>
    %140 = vector.extract_strided_slice %139 {offsets = [0, 0], sizes = [2, 32], strides = [1, 1]} : vector<2x64xf32> to vector<2x32xf32>
    %c8_41 = arith.constant 8 : index
    %c0_42 = arith.constant 0 : index
    %141 = vector.load %arg4[%c8_41, %c0_42] : memref<16x64xf32, #tpu.memory_space<vmem>>, vector<2x32xf32>
    tpu.vector_store %arg4[%c8_41, %c0_42], %140 {strides = array<i32>} : memref<16x64xf32, #tpu.memory_space<vmem>>, vector<2x32xf32>,
    %142 = vector.extract_strided_slice %139 {offsets = [0, 32], sizes = [2, 32], strides = [1, 1]} : vector<2x64xf32> to vector<2x32xf32>
    %c6_43 = arith.constant 6 : index
    %c32_44 = arith.constant 32 : index
    %143 = vector.load %arg4[%c6_43, %c32_44] : memref<16x64xf32, #tpu.memory_space<vmem>>, vector<2x32xf32>
    tpu.vector_store %arg4[%c6_43, %c32_44], %142 {strides = array<i32>} : memref<16x64xf32, #tpu.memory_space<vmem>>, vector<2x32xf32>,
    %144 = vector.extract_strided_slice %26 {offsets = [10, 0], sizes = [2, 256], strides = [1, 1]} : vector<16x256xf32> to vector<2x256xf32>
    %cst_45 = arith.constant dense<0.000000e+00> : vector<2x256xf32>
    %145 = tpu.matmul %139, %2, %cst_45 {dimension_numbers = #tpu.dot_dimension_numbers<[1], [0], [0], [1], [0, 0, 1, 1], [], []>} : vector<2x64xf32>, vector<64x256xf32>, vector<2x256xf32> -> vector<2x256xf32>
    %146 = arith.addf %144, %145 : vector<2x256xf32>
    %147 = vector.extract_strided_slice %146 {offsets = [0, 0], sizes = [2, 192], strides = [1, 1]} : vector<2x256xf32> to vector<2x192xf32>
    %148 = arith.negf %147 : vector<2x192xf32>
    %149 = math.exp %148 : vector<2x192xf32>
    %cst_46 = arith.constant 1.000000e+00 : f32
    %150 = vector.broadcast %cst_46 : f32 to vector<2x192xf32>
    %151 = arith.addf %150, %149 : vector<2x192xf32>
    %152 = arith.divf %150, %151 : vector<2x192xf32>
    %153 = vector.extract_strided_slice %146 {offsets = [0, 192], sizes = [2, 64], strides = [1, 1]} : vector<2x256xf32> to vector<2x64xf32>
    %154 = math.tanh %153 : vector<2x64xf32>
    %155 = vector.extract_strided_slice %152 {offsets = [0, 0], sizes = [2, 64], strides = [1, 1]} : vector<2x192xf32> to vector<2x64xf32>
    %156 = vector.extract_strided_slice %152 {offsets = [0, 64], sizes = [2, 64], strides = [1, 1]} : vector<2x192xf32> to vector<2x64xf32>
    %157 = vector.extract_strided_slice %152 {offsets = [0, 128], sizes = [2, 64], strides = [1, 1]} : vector<2x192xf32> to vector<2x64xf32>
    %158 = arith.mulf %156, %137 : vector<2x64xf32>
    %159 = arith.mulf %155, %154 : vector<2x64xf32>
    %160 = arith.addf %158, %159 : vector<2x64xf32>
    %161 = math.tanh %160 : vector<2x64xf32>
    %162 = arith.mulf %157, %161 : vector<2x64xf32>
    %163 = vector.extract_strided_slice %162 {offsets = [0, 0], sizes = [2, 32], strides = [1, 1]} : vector<2x64xf32> to vector<2x32xf32>
    %c10_47 = arith.constant 10 : index
    %c0_48 = arith.constant 0 : index
    %164 = vector.load %arg4[%c10_47, %c0_48] : memref<16x64xf32, #tpu.memory_space<vmem>>, vector<2x32xf32>
    tpu.vector_store %arg4[%c10_47, %c0_48], %163 {strides = array<i32>} : memref<16x64xf32, #tpu.memory_space<vmem>>, vector<2x32xf32>,
    %165 = vector.extract_strided_slice %162 {offsets = [0, 32], sizes = [2, 32], strides = [1, 1]} : vector<2x64xf32> to vector<2x32xf32>
    %c4_49 = arith.constant 4 : index
    %c32_50 = arith.constant 32 : index
    %166 = vector.load %arg4[%c4_49, %c32_50] : memref<16x64xf32, #tpu.memory_space<vmem>>, vector<2x32xf32>
    tpu.vector_store %arg4[%c4_49, %c32_50], %165 {strides = array<i32>} : memref<16x64xf32, #tpu.memory_space<vmem>>, vector<2x32xf32>,
    %167 = vector.extract_strided_slice %26 {offsets = [12, 0], sizes = [2, 256], strides = [1, 1]} : vector<16x256xf32> to vector<2x256xf32>
    %cst_51 = arith.constant dense<0.000000e+00> : vector<2x256xf32>
    %168 = tpu.matmul %162, %2, %cst_51 {dimension_numbers = #tpu.dot_dimension_numbers<[1], [0], [0], [1], [0, 0, 1, 1], [], []>} : vector<2x64xf32>, vector<64x256xf32>, vector<2x256xf32> -> vector<2x256xf32>
    %169 = arith.addf %167, %168 : vector<2x256xf32>
    %170 = vector.extract_strided_slice %169 {offsets = [0, 0], sizes = [2, 192], strides = [1, 1]} : vector<2x256xf32> to vector<2x192xf32>
    %171 = arith.negf %170 : vector<2x192xf32>
    %172 = math.exp %171 : vector<2x192xf32>
    %cst_52 = arith.constant 1.000000e+00 : f32
    %173 = vector.broadcast %cst_52 : f32 to vector<2x192xf32>
    %174 = arith.addf %173, %172 : vector<2x192xf32>
    %175 = arith.divf %173, %174 : vector<2x192xf32>
    %176 = vector.extract_strided_slice %169 {offsets = [0, 192], sizes = [2, 64], strides = [1, 1]} : vector<2x256xf32> to vector<2x64xf32>
    %177 = math.tanh %176 : vector<2x64xf32>
    %178 = vector.extract_strided_slice %175 {offsets = [0, 0], sizes = [2, 64], strides = [1, 1]} : vector<2x192xf32> to vector<2x64xf32>
    %179 = vector.extract_strided_slice %175 {offsets = [0, 64], sizes = [2, 64], strides = [1, 1]} : vector<2x192xf32> to vector<2x64xf32>
    %180 = vector.extract_strided_slice %175 {offsets = [0, 128], sizes = [2, 64], strides = [1, 1]} : vector<2x192xf32> to vector<2x64xf32>
    %181 = arith.mulf %179, %160 : vector<2x64xf32>
    %182 = arith.mulf %178, %177 : vector<2x64xf32>
    %183 = arith.addf %181, %182 : vector<2x64xf32>
    %184 = math.tanh %183 : vector<2x64xf32>
    %185 = arith.mulf %180, %184 : vector<2x64xf32>
    %186 = vector.extract_strided_slice %185 {offsets = [0, 0], sizes = [2, 32], strides = [1, 1]} : vector<2x64xf32> to vector<2x32xf32>
    %c12_53 = arith.constant 12 : index
    %c0_54 = arith.constant 0 : index
    %187 = vector.load %arg4[%c12_53, %c0_54] : memref<16x64xf32, #tpu.memory_space<vmem>>, vector<2x32xf32>
    tpu.vector_store %arg4[%c12_53, %c0_54], %186 {strides = array<i32>} : memref<16x64xf32, #tpu.memory_space<vmem>>, vector<2x32xf32>,
    %188 = vector.extract_strided_slice %185 {offsets = [0, 32], sizes = [2, 32], strides = [1, 1]} : vector<2x64xf32> to vector<2x32xf32>
    %c2_55 = arith.constant 2 : index
    %c32_56 = arith.constant 32 : index
    %189 = vector.load %arg4[%c2_55, %c32_56] : memref<16x64xf32, #tpu.memory_space<vmem>>, vector<2x32xf32>
    tpu.vector_store %arg4[%c2_55, %c32_56], %188 {strides = array<i32>} : memref<16x64xf32, #tpu.memory_space<vmem>>, vector<2x32xf32>,
    %190 = vector.extract_strided_slice %26 {offsets = [14, 0], sizes = [2, 256], strides = [1, 1]} : vector<16x256xf32> to vector<2x256xf32>
    %cst_57 = arith.constant dense<0.000000e+00> : vector<2x256xf32>
    %191 = tpu.matmul %185, %2, %cst_57 {dimension_numbers = #tpu.dot_dimension_numbers<[1], [0], [0], [1], [0, 0, 1, 1], [], []>} : vector<2x64xf32>, vector<64x256xf32>, vector<2x256xf32> -> vector<2x256xf32>
    %192 = arith.addf %190, %191 : vector<2x256xf32>
    %193 = vector.extract_strided_slice %192 {offsets = [0, 0], sizes = [2, 192], strides = [1, 1]} : vector<2x256xf32> to vector<2x192xf32>
    %194 = arith.negf %193 : vector<2x192xf32>
    %195 = math.exp %194 : vector<2x192xf32>
    %cst_58 = arith.constant 1.000000e+00 : f32
    %196 = vector.broadcast %cst_58 : f32 to vector<2x192xf32>
    %197 = arith.addf %196, %195 : vector<2x192xf32>
    %198 = arith.divf %196, %197 : vector<2x192xf32>
    %199 = vector.extract_strided_slice %192 {offsets = [0, 192], sizes = [2, 64], strides = [1, 1]} : vector<2x256xf32> to vector<2x64xf32>
    %200 = math.tanh %199 : vector<2x64xf32>
    %201 = vector.extract_strided_slice %198 {offsets = [0, 0], sizes = [2, 64], strides = [1, 1]} : vector<2x192xf32> to vector<2x64xf32>
    %202 = vector.extract_strided_slice %198 {offsets = [0, 64], sizes = [2, 64], strides = [1, 1]} : vector<2x192xf32> to vector<2x64xf32>
    %203 = vector.extract_strided_slice %198 {offsets = [0, 128], sizes = [2, 64], strides = [1, 1]} : vector<2x192xf32> to vector<2x64xf32>
    %204 = arith.mulf %202, %183 : vector<2x64xf32>
    %205 = arith.mulf %201, %200 : vector<2x64xf32>
    %206 = arith.addf %204, %205 : vector<2x64xf32>
    %207 = math.tanh %206 : vector<2x64xf32>
    %208 = arith.mulf %203, %207 : vector<2x64xf32>
    %209 = vector.extract_strided_slice %208 {offsets = [0, 0], sizes = [2, 32], strides = [1, 1]} : vector<2x64xf32> to vector<2x32xf32>
    %c14_59 = arith.constant 14 : index
    %c0_60 = arith.constant 0 : index
    %210 = vector.load %arg4[%c14_59, %c0_60] : memref<16x64xf32, #tpu.memory_space<vmem>>, vector<2x32xf32>
    tpu.vector_store %arg4[%c14_59, %c0_60], %209 {strides = array<i32>} : memref<16x64xf32, #tpu.memory_space<vmem>>, vector<2x32xf32>,
    %211 = vector.extract_strided_slice %208 {offsets = [0, 32], sizes = [2, 32], strides = [1, 1]} : vector<2x64xf32> to vector<2x32xf32>
    %c0_61 = arith.constant 0 : index
    %c32_62 = arith.constant 32 : index
    %212 = vector.load %arg4[%c0_61, %c32_62] : memref<16x64xf32, #tpu.memory_space<vmem>>, vector<2x32xf32>
    tpu.vector_store %arg4[%c0_61, %c32_62], %211 {strides = array<i32>} : memref<16x64xf32, #tpu.memory_space<vmem>>, vector<2x32xf32>,
    %c0_63 = arith.constant 0 : index
    %c0_64 = arith.constant 0 : index
    %213 = vector.load %arg4[%c0_63, %c0_64] : memref<16x64xf32, #tpu.memory_space<vmem>>, vector<16x64xf32>
    %cst_65 = arith.constant dense<0.000000e+00> : vector<16x64xf32>
    %214 = tpu.matmul %13, %213, %cst_65 {dimension_numbers = #tpu.dot_dimension_numbers<[1], [0], [0], [1], [0, 0, 1, 1], [], []>} : vector<16x16xf32>, vector<16x64xf32>, vector<16x64xf32> -> vector<16x64xf32>
    %cst_66 = arith.constant dense<0.000000e+00> : vector<16x256xf32>
    %215 = tpu.matmul %213, %3, %cst_66 {dimension_numbers = #tpu.dot_dimension_numbers<[1], [0], [0], [1], [0, 0, 1, 1], [], []>} : vector<16x64xf32>, vector<64x256xf32>, vector<16x256xf32> -> vector<16x256xf32>
    %cst_67 = arith.constant dense<0.000000e+00> : vector<16x256xf32>
    %216 = tpu.matmul %214, %4, %cst_67 {dimension_numbers = #tpu.dot_dimension_numbers<[1], [0], [0], [1], [0, 0, 1, 1], [], []>} : vector<16x64xf32>, vector<64x256xf32>, vector<16x256xf32> -> vector<16x256xf32>
    %217 = arith.addf %215, %216 : vector<16x256xf32>
    %218 = vector.broadcast %8 : vector<1x256xf32> to vector<16x256xf32>
    %219 = arith.addf %217, %218 : vector<16x256xf32>
    %cst_68 = arith.constant 0.000000e+00 : f32
    %220 = vector.broadcast %cst_68 : f32 to vector<2x64xf32>
    %cst_69 = arith.constant 0.000000e+00 : f32
    %221 = vector.broadcast %cst_69 : f32 to vector<2x64xf32>
    %222 = vector.extract_strided_slice %219 {offsets = [0, 0], sizes = [2, 256], strides = [1, 1]} : vector<16x256xf32> to vector<2x256xf32>
    %cst_70 = arith.constant dense<0.000000e+00> : vector<2x256xf32>
    %223 = tpu.matmul %220, %5, %cst_70 {dimension_numbers = #tpu.dot_dimension_numbers<[1], [0], [0], [1], [0, 0, 1, 1], [], []>} : vector<2x64xf32>, vector<64x256xf32>, vector<2x256xf32> -> vector<2x256xf32>
    %224 = arith.addf %222, %223 : vector<2x256xf32>
    %225 = vector.extract_strided_slice %224 {offsets = [0, 0], sizes = [2, 192], strides = [1, 1]} : vector<2x256xf32> to vector<2x192xf32>
    %226 = arith.negf %225 : vector<2x192xf32>
    %227 = math.exp %226 : vector<2x192xf32>
    %cst_71 = arith.constant 1.000000e+00 : f32
    %228 = vector.broadcast %cst_71 : f32 to vector<2x192xf32>
    %229 = arith.addf %228, %227 : vector<2x192xf32>
    %230 = arith.divf %228, %229 : vector<2x192xf32>
    %231 = vector.extract_strided_slice %224 {offsets = [0, 192], sizes = [2, 64], strides = [1, 1]} : vector<2x256xf32> to vector<2x64xf32>
    %232 = math.tanh %231 : vector<2x64xf32>
    %233 = vector.extract_strided_slice %230 {offsets = [0, 0], sizes = [2, 64], strides = [1, 1]} : vector<2x192xf32> to vector<2x64xf32>
    %234 = vector.extract_strided_slice %230 {offsets = [0, 64], sizes = [2, 64], strides = [1, 1]} : vector<2x192xf32> to vector<2x64xf32>
    %235 = vector.extract_strided_slice %230 {offsets = [0, 128], sizes = [2, 64], strides = [1, 1]} : vector<2x192xf32> to vector<2x64xf32>
    %236 = arith.mulf %234, %221 : vector<2x64xf32>
    %237 = arith.mulf %233, %232 : vector<2x64xf32>
    %238 = arith.addf %236, %237 : vector<2x64xf32>
    %239 = math.tanh %238 : vector<2x64xf32>
    %240 = arith.mulf %235, %239 : vector<2x64xf32>
    %241 = vector.extract_strided_slice %240 {offsets = [0, 0], sizes = [2, 32], strides = [1, 1]} : vector<2x64xf32> to vector<2x32xf32>
    %c0_72 = arith.constant 0 : index
    %c0_73 = arith.constant 0 : index
    %242 = vector.load %arg5[%c0_72, %c0_73] : memref<16x64xf32, #tpu.memory_space<vmem>>, vector<2x32xf32>
    tpu.vector_store %arg5[%c0_72, %c0_73], %241 {strides = array<i32>} : memref<16x64xf32, #tpu.memory_space<vmem>>, vector<2x32xf32>,
    %243 = vector.extract_strided_slice %240 {offsets = [0, 32], sizes = [2, 32], strides = [1, 1]} : vector<2x64xf32> to vector<2x32xf32>
    %c14_74 = arith.constant 14 : index
    %c32_75 = arith.constant 32 : index
    %244 = vector.load %arg5[%c14_74, %c32_75] : memref<16x64xf32, #tpu.memory_space<vmem>>, vector<2x32xf32>
    tpu.vector_store %arg5[%c14_74, %c32_75], %243 {strides = array<i32>} : memref<16x64xf32, #tpu.memory_space<vmem>>, vector<2x32xf32>,
    %245 = vector.extract_strided_slice %219 {offsets = [2, 0], sizes = [2, 256], strides = [1, 1]} : vector<16x256xf32> to vector<2x256xf32>
    %cst_76 = arith.constant dense<0.000000e+00> : vector<2x256xf32>
    %246 = tpu.matmul %240, %5, %cst_76 {dimension_numbers = #tpu.dot_dimension_numbers<[1], [0], [0], [1], [0, 0, 1, 1], [], []>} : vector<2x64xf32>, vector<64x256xf32>, vector<2x256xf32> -> vector<2x256xf32>
    %247 = arith.addf %245, %246 : vector<2x256xf32>
    %248 = vector.extract_strided_slice %247 {offsets = [0, 0], sizes = [2, 192], strides = [1, 1]} : vector<2x256xf32> to vector<2x192xf32>
    %249 = arith.negf %248 : vector<2x192xf32>
    %250 = math.exp %249 : vector<2x192xf32>
    %cst_77 = arith.constant 1.000000e+00 : f32
    %251 = vector.broadcast %cst_77 : f32 to vector<2x192xf32>
    %252 = arith.addf %251, %250 : vector<2x192xf32>
    %253 = arith.divf %251, %252 : vector<2x192xf32>
    %254 = vector.extract_strided_slice %247 {offsets = [0, 192], sizes = [2, 64], strides = [1, 1]} : vector<2x256xf32> to vector<2x64xf32>
    %255 = math.tanh %254 : vector<2x64xf32>
    %256 = vector.extract_strided_slice %253 {offsets = [0, 0], sizes = [2, 64], strides = [1, 1]} : vector<2x192xf32> to vector<2x64xf32>
    %257 = vector.extract_strided_slice %253 {offsets = [0, 64], sizes = [2, 64], strides = [1, 1]} : vector<2x192xf32> to vector<2x64xf32>
    %258 = vector.extract_strided_slice %253 {offsets = [0, 128], sizes = [2, 64], strides = [1, 1]} : vector<2x192xf32> to vector<2x64xf32>
    %259 = arith.mulf %257, %238 : vector<2x64xf32>
    %260 = arith.mulf %256, %255 : vector<2x64xf32>
    %261 = arith.addf %259, %260 : vector<2x64xf32>
    %262 = math.tanh %261 : vector<2x64xf32>
    %263 = arith.mulf %258, %262 : vector<2x64xf32>
    %264 = vector.extract_strided_slice %263 {offsets = [0, 0], sizes = [2, 32], strides = [1, 1]} : vector<2x64xf32> to vector<2x32xf32>
    %c2_78 = arith.constant 2 : index
    %c0_79 = arith.constant 0 : index
    %265 = vector.load %arg5[%c2_78, %c0_79] : memref<16x64xf32, #tpu.memory_space<vmem>>, vector<2x32xf32>
    tpu.vector_store %arg5[%c2_78, %c0_79], %264 {strides = array<i32>} : memref<16x64xf32, #tpu.memory_space<vmem>>, vector<2x32xf32>,
    %266 = vector.extract_strided_slice %263 {offsets = [0, 32], sizes = [2, 32], strides = [1, 1]} : vector<2x64xf32> to vector<2x32xf32>
    %c12_80 = arith.constant 12 : index
    %c32_81 = arith.constant 32 : index
    %267 = vector.load %arg5[%c12_80, %c32_81] : memref<16x64xf32, #tpu.memory_space<vmem>>, vector<2x32xf32>
    tpu.vector_store %arg5[%c12_80, %c32_81], %266 {strides = array<i32>} : memref<16x64xf32, #tpu.memory_space<vmem>>, vector<2x32xf32>,
    %268 = vector.extract_strided_slice %219 {offsets = [4, 0], sizes = [2, 256], strides = [1, 1]} : vector<16x256xf32> to vector<2x256xf32>
    %cst_82 = arith.constant dense<0.000000e+00> : vector<2x256xf32>
    %269 = tpu.matmul %263, %5, %cst_82 {dimension_numbers = #tpu.dot_dimension_numbers<[1], [0], [0], [1], [0, 0, 1, 1], [], []>} : vector<2x64xf32>, vector<64x256xf32>, vector<2x256xf32> -> vector<2x256xf32>
    %270 = arith.addf %268, %269 : vector<2x256xf32>
    %271 = vector.extract_strided_slice %270 {offsets = [0, 0], sizes = [2, 192], strides = [1, 1]} : vector<2x256xf32> to vector<2x192xf32>
    %272 = arith.negf %271 : vector<2x192xf32>
    %273 = math.exp %272 : vector<2x192xf32>
    %cst_83 = arith.constant 1.000000e+00 : f32
    %274 = vector.broadcast %cst_83 : f32 to vector<2x192xf32>
    %275 = arith.addf %274, %273 : vector<2x192xf32>
    %276 = arith.divf %274, %275 : vector<2x192xf32>
    %277 = vector.extract_strided_slice %270 {offsets = [0, 192], sizes = [2, 64], strides = [1, 1]} : vector<2x256xf32> to vector<2x64xf32>
    %278 = math.tanh %277 : vector<2x64xf32>
    %279 = vector.extract_strided_slice %276 {offsets = [0, 0], sizes = [2, 64], strides = [1, 1]} : vector<2x192xf32> to vector<2x64xf32>
    %280 = vector.extract_strided_slice %276 {offsets = [0, 64], sizes = [2, 64], strides = [1, 1]} : vector<2x192xf32> to vector<2x64xf32>
    %281 = vector.extract_strided_slice %276 {offsets = [0, 128], sizes = [2, 64], strides = [1, 1]} : vector<2x192xf32> to vector<2x64xf32>
    %282 = arith.mulf %280, %261 : vector<2x64xf32>
    %283 = arith.mulf %279, %278 : vector<2x64xf32>
    %284 = arith.addf %282, %283 : vector<2x64xf32>
    %285 = math.tanh %284 : vector<2x64xf32>
    %286 = arith.mulf %281, %285 : vector<2x64xf32>
    %287 = vector.extract_strided_slice %286 {offsets = [0, 0], sizes = [2, 32], strides = [1, 1]} : vector<2x64xf32> to vector<2x32xf32>
    %c4_84 = arith.constant 4 : index
    %c0_85 = arith.constant 0 : index
    %288 = vector.load %arg5[%c4_84, %c0_85] : memref<16x64xf32, #tpu.memory_space<vmem>>, vector<2x32xf32>
    tpu.vector_store %arg5[%c4_84, %c0_85], %287 {strides = array<i32>} : memref<16x64xf32, #tpu.memory_space<vmem>>, vector<2x32xf32>,
    %289 = vector.extract_strided_slice %286 {offsets = [0, 32], sizes = [2, 32], strides = [1, 1]} : vector<2x64xf32> to vector<2x32xf32>
    %c10_86 = arith.constant 10 : index
    %c32_87 = arith.constant 32 : index
    %290 = vector.load %arg5[%c10_86, %c32_87] : memref<16x64xf32, #tpu.memory_space<vmem>>, vector<2x32xf32>
    tpu.vector_store %arg5[%c10_86, %c32_87], %289 {strides = array<i32>} : memref<16x64xf32, #tpu.memory_space<vmem>>, vector<2x32xf32>,
    %291 = vector.extract_strided_slice %219 {offsets = [6, 0], sizes = [2, 256], strides = [1, 1]} : vector<16x256xf32> to vector<2x256xf32>
    %cst_88 = arith.constant dense<0.000000e+00> : vector<2x256xf32>
    %292 = tpu.matmul %286, %5, %cst_88 {dimension_numbers = #tpu.dot_dimension_numbers<[1], [0], [0], [1], [0, 0, 1, 1], [], []>} : vector<2x64xf32>, vector<64x256xf32>, vector<2x256xf32> -> vector<2x256xf32>
    %293 = arith.addf %291, %292 : vector<2x256xf32>
    %294 = vector.extract_strided_slice %293 {offsets = [0, 0], sizes = [2, 192], strides = [1, 1]} : vector<2x256xf32> to vector<2x192xf32>
    %295 = arith.negf %294 : vector<2x192xf32>
    %296 = math.exp %295 : vector<2x192xf32>
    %cst_89 = arith.constant 1.000000e+00 : f32
    %297 = vector.broadcast %cst_89 : f32 to vector<2x192xf32>
    %298 = arith.addf %297, %296 : vector<2x192xf32>
    %299 = arith.divf %297, %298 : vector<2x192xf32>
    %300 = vector.extract_strided_slice %293 {offsets = [0, 192], sizes = [2, 64], strides = [1, 1]} : vector<2x256xf32> to vector<2x64xf32>
    %301 = math.tanh %300 : vector<2x64xf32>
    %302 = vector.extract_strided_slice %299 {offsets = [0, 0], sizes = [2, 64], strides = [1, 1]} : vector<2x192xf32> to vector<2x64xf32>
    %303 = vector.extract_strided_slice %299 {offsets = [0, 64], sizes = [2, 64], strides = [1, 1]} : vector<2x192xf32> to vector<2x64xf32>
    %304 = vector.extract_strided_slice %299 {offsets = [0, 128], sizes = [2, 64], strides = [1, 1]} : vector<2x192xf32> to vector<2x64xf32>
    %305 = arith.mulf %303, %284 : vector<2x64xf32>
    %306 = arith.mulf %302, %301 : vector<2x64xf32>
    %307 = arith.addf %305, %306 : vector<2x64xf32>
    %308 = math.tanh %307 : vector<2x64xf32>
    %309 = arith.mulf %304, %308 : vector<2x64xf32>
    %310 = vector.extract_strided_slice %309 {offsets = [0, 0], sizes = [2, 32], strides = [1, 1]} : vector<2x64xf32> to vector<2x32xf32>
    %c6_90 = arith.constant 6 : index
    %c0_91 = arith.constant 0 : index
    %311 = vector.load %arg5[%c6_90, %c0_91] : memref<16x64xf32, #tpu.memory_space<vmem>>, vector<2x32xf32>
    tpu.vector_store %arg5[%c6_90, %c0_91], %310 {strides = array<i32>} : memref<16x64xf32, #tpu.memory_space<vmem>>, vector<2x32xf32>,
    %312 = vector.extract_strided_slice %309 {offsets = [0, 32], sizes = [2, 32], strides = [1, 1]} : vector<2x64xf32> to vector<2x32xf32>
    %c8_92 = arith.constant 8 : index
    %c32_93 = arith.constant 32 : index
    %313 = vector.load %arg5[%c8_92, %c32_93] : memref<16x64xf32, #tpu.memory_space<vmem>>, vector<2x32xf32>
    tpu.vector_store %arg5[%c8_92, %c32_93], %312 {strides = array<i32>} : memref<16x64xf32, #tpu.memory_space<vmem>>, vector<2x32xf32>,
    %314 = vector.extract_strided_slice %219 {offsets = [8, 0], sizes = [2, 256], strides = [1, 1]} : vector<16x256xf32> to vector<2x256xf32>
    %cst_94 = arith.constant dense<0.000000e+00> : vector<2x256xf32>
    %315 = tpu.matmul %309, %5, %cst_94 {dimension_numbers = #tpu.dot_dimension_numbers<[1], [0], [0], [1], [0, 0, 1, 1], [], []>} : vector<2x64xf32>, vector<64x256xf32>, vector<2x256xf32> -> vector<2x256xf32>
    %316 = arith.addf %314, %315 : vector<2x256xf32>
    %317 = vector.extract_strided_slice %316 {offsets = [0, 0], sizes = [2, 192], strides = [1, 1]} : vector<2x256xf32> to vector<2x192xf32>
    %318 = arith.negf %317 : vector<2x192xf32>
    %319 = math.exp %318 : vector<2x192xf32>
    %cst_95 = arith.constant 1.000000e+00 : f32
    %320 = vector.broadcast %cst_95 : f32 to vector<2x192xf32>
    %321 = arith.addf %320, %319 : vector<2x192xf32>
    %322 = arith.divf %320, %321 : vector<2x192xf32>
    %323 = vector.extract_strided_slice %316 {offsets = [0, 192], sizes = [2, 64], strides = [1, 1]} : vector<2x256xf32> to vector<2x64xf32>
    %324 = math.tanh %323 : vector<2x64xf32>
    %325 = vector.extract_strided_slice %322 {offsets = [0, 0], sizes = [2, 64], strides = [1, 1]} : vector<2x192xf32> to vector<2x64xf32>
    %326 = vector.extract_strided_slice %322 {offsets = [0, 64], sizes = [2, 64], strides = [1, 1]} : vector<2x192xf32> to vector<2x64xf32>
    %327 = vector.extract_strided_slice %322 {offsets = [0, 128], sizes = [2, 64], strides = [1, 1]} : vector<2x192xf32> to vector<2x64xf32>
    %328 = arith.mulf %326, %307 : vector<2x64xf32>
    %329 = arith.mulf %325, %324 : vector<2x64xf32>
    %330 = arith.addf %328, %329 : vector<2x64xf32>
    %331 = math.tanh %330 : vector<2x64xf32>
    %332 = arith.mulf %327, %331 : vector<2x64xf32>
    %333 = vector.extract_strided_slice %332 {offsets = [0, 0], sizes = [2, 32], strides = [1, 1]} : vector<2x64xf32> to vector<2x32xf32>
    %c8_96 = arith.constant 8 : index
    %c0_97 = arith.constant 0 : index
    %334 = vector.load %arg5[%c8_96, %c0_97] : memref<16x64xf32, #tpu.memory_space<vmem>>, vector<2x32xf32>
    tpu.vector_store %arg5[%c8_96, %c0_97], %333 {strides = array<i32>} : memref<16x64xf32, #tpu.memory_space<vmem>>, vector<2x32xf32>,
    %335 = vector.extract_strided_slice %332 {offsets = [0, 32], sizes = [2, 32], strides = [1, 1]} : vector<2x64xf32> to vector<2x32xf32>
    %c6_98 = arith.constant 6 : index
    %c32_99 = arith.constant 32 : index
    %336 = vector.load %arg5[%c6_98, %c32_99] : memref<16x64xf32, #tpu.memory_space<vmem>>, vector<2x32xf32>
    tpu.vector_store %arg5[%c6_98, %c32_99], %335 {strides = array<i32>} : memref<16x64xf32, #tpu.memory_space<vmem>>, vector<2x32xf32>,
    %337 = vector.extract_strided_slice %219 {offsets = [10, 0], sizes = [2, 256], strides = [1, 1]} : vector<16x256xf32> to vector<2x256xf32>
    %cst_100 = arith.constant dense<0.000000e+00> : vector<2x256xf32>
    %338 = tpu.matmul %332, %5, %cst_100 {dimension_numbers = #tpu.dot_dimension_numbers<[1], [0], [0], [1], [0, 0, 1, 1], [], []>} : vector<2x64xf32>, vector<64x256xf32>, vector<2x256xf32> -> vector<2x256xf32>
    %339 = arith.addf %337, %338 : vector<2x256xf32>
    %340 = vector.extract_strided_slice %339 {offsets = [0, 0], sizes = [2, 192], strides = [1, 1]} : vector<2x256xf32> to vector<2x192xf32>
    %341 = arith.negf %340 : vector<2x192xf32>
    %342 = math.exp %341 : vector<2x192xf32>
    %cst_101 = arith.constant 1.000000e+00 : f32
    %343 = vector.broadcast %cst_101 : f32 to vector<2x192xf32>
    %344 = arith.addf %343, %342 : vector<2x192xf32>
    %345 = arith.divf %343, %344 : vector<2x192xf32>
    %346 = vector.extract_strided_slice %339 {offsets = [0, 192], sizes = [2, 64], strides = [1, 1]} : vector<2x256xf32> to vector<2x64xf32>
    %347 = math.tanh %346 : vector<2x64xf32>
    %348 = vector.extract_strided_slice %345 {offsets = [0, 0], sizes = [2, 64], strides = [1, 1]} : vector<2x192xf32> to vector<2x64xf32>
    %349 = vector.extract_strided_slice %345 {offsets = [0, 64], sizes = [2, 64], strides = [1, 1]} : vector<2x192xf32> to vector<2x64xf32>
    %350 = vector.extract_strided_slice %345 {offsets = [0, 128], sizes = [2, 64], strides = [1, 1]} : vector<2x192xf32> to vector<2x64xf32>
    %351 = arith.mulf %349, %330 : vector<2x64xf32>
    %352 = arith.mulf %348, %347 : vector<2x64xf32>
    %353 = arith.addf %351, %352 : vector<2x64xf32>
    %354 = math.tanh %353 : vector<2x64xf32>
    %355 = arith.mulf %350, %354 : vector<2x64xf32>
    %356 = vector.extract_strided_slice %355 {offsets = [0, 0], sizes = [2, 32], strides = [1, 1]} : vector<2x64xf32> to vector<2x32xf32>
    %c10_102 = arith.constant 10 : index
    %c0_103 = arith.constant 0 : index
    %357 = vector.load %arg5[%c10_102, %c0_103] : memref<16x64xf32, #tpu.memory_space<vmem>>, vector<2x32xf32>
    tpu.vector_store %arg5[%c10_102, %c0_103], %356 {strides = array<i32>} : memref<16x64xf32, #tpu.memory_space<vmem>>, vector<2x32xf32>,
    %358 = vector.extract_strided_slice %355 {offsets = [0, 32], sizes = [2, 32], strides = [1, 1]} : vector<2x64xf32> to vector<2x32xf32>
    %c4_104 = arith.constant 4 : index
    %c32_105 = arith.constant 32 : index
    %359 = vector.load %arg5[%c4_104, %c32_105] : memref<16x64xf32, #tpu.memory_space<vmem>>, vector<2x32xf32>
    tpu.vector_store %arg5[%c4_104, %c32_105], %358 {strides = array<i32>} : memref<16x64xf32, #tpu.memory_space<vmem>>, vector<2x32xf32>,
    %360 = vector.extract_strided_slice %219 {offsets = [12, 0], sizes = [2, 256], strides = [1, 1]} : vector<16x256xf32> to vector<2x256xf32>
    %cst_106 = arith.constant dense<0.000000e+00> : vector<2x256xf32>
    %361 = tpu.matmul %355, %5, %cst_106 {dimension_numbers = #tpu.dot_dimension_numbers<[1], [0], [0], [1], [0, 0, 1, 1], [], []>} : vector<2x64xf32>, vector<64x256xf32>, vector<2x256xf32> -> vector<2x256xf32>
    %362 = arith.addf %360, %361 : vector<2x256xf32>
    %363 = vector.extract_strided_slice %362 {offsets = [0, 0], sizes = [2, 192], strides = [1, 1]} : vector<2x256xf32> to vector<2x192xf32>
    %364 = arith.negf %363 : vector<2x192xf32>
    %365 = math.exp %364 : vector<2x192xf32>
    %cst_107 = arith.constant 1.000000e+00 : f32
    %366 = vector.broadcast %cst_107 : f32 to vector<2x192xf32>
    %367 = arith.addf %366, %365 : vector<2x192xf32>
    %368 = arith.divf %366, %367 : vector<2x192xf32>
    %369 = vector.extract_strided_slice %362 {offsets = [0, 192], sizes = [2, 64], strides = [1, 1]} : vector<2x256xf32> to vector<2x64xf32>
    %370 = math.tanh %369 : vector<2x64xf32>
    %371 = vector.extract_strided_slice %368 {offsets = [0, 0], sizes = [2, 64], strides = [1, 1]} : vector<2x192xf32> to vector<2x64xf32>
    %372 = vector.extract_strided_slice %368 {offsets = [0, 64], sizes = [2, 64], strides = [1, 1]} : vector<2x192xf32> to vector<2x64xf32>
    %373 = vector.extract_strided_slice %368 {offsets = [0, 128], sizes = [2, 64], strides = [1, 1]} : vector<2x192xf32> to vector<2x64xf32>
    %374 = arith.mulf %372, %353 : vector<2x64xf32>
    %375 = arith.mulf %371, %370 : vector<2x64xf32>
    %376 = arith.addf %374, %375 : vector<2x64xf32>
    %377 = math.tanh %376 : vector<2x64xf32>
    %378 = arith.mulf %373, %377 : vector<2x64xf32>
    %379 = vector.extract_strided_slice %378 {offsets = [0, 0], sizes = [2, 32], strides = [1, 1]} : vector<2x64xf32> to vector<2x32xf32>
    %c12_108 = arith.constant 12 : index
    %c0_109 = arith.constant 0 : index
    %380 = vector.load %arg5[%c12_108, %c0_109] : memref<16x64xf32, #tpu.memory_space<vmem>>, vector<2x32xf32>
    tpu.vector_store %arg5[%c12_108, %c0_109], %379 {strides = array<i32>} : memref<16x64xf32, #tpu.memory_space<vmem>>, vector<2x32xf32>,
    %381 = vector.extract_strided_slice %378 {offsets = [0, 32], sizes = [2, 32], strides = [1, 1]} : vector<2x64xf32> to vector<2x32xf32>
    %c2_110 = arith.constant 2 : index
    %c32_111 = arith.constant 32 : index
    %382 = vector.load %arg5[%c2_110, %c32_111] : memref<16x64xf32, #tpu.memory_space<vmem>>, vector<2x32xf32>
    tpu.vector_store %arg5[%c2_110, %c32_111], %381 {strides = array<i32>} : memref<16x64xf32, #tpu.memory_space<vmem>>, vector<2x32xf32>,
    %383 = vector.extract_strided_slice %219 {offsets = [14, 0], sizes = [2, 256], strides = [1, 1]} : vector<16x256xf32> to vector<2x256xf32>
    %cst_112 = arith.constant dense<0.000000e+00> : vector<2x256xf32>
    %384 = tpu.matmul %378, %5, %cst_112 {dimension_numbers = #tpu.dot_dimension_numbers<[1], [0], [0], [1], [0, 0, 1, 1], [], []>} : vector<2x64xf32>, vector<64x256xf32>, vector<2x256xf32> -> vector<2x256xf32>
    %385 = arith.addf %383, %384 : vector<2x256xf32>
    %386 = vector.extract_strided_slice %385 {offsets = [0, 0], sizes = [2, 192], strides = [1, 1]} : vector<2x256xf32> to vector<2x192xf32>
    %387 = arith.negf %386 : vector<2x192xf32>
    %388 = math.exp %387 : vector<2x192xf32>
    %cst_113 = arith.constant 1.000000e+00 : f32
    %389 = vector.broadcast %cst_113 : f32 to vector<2x192xf32>
    %390 = arith.addf %389, %388 : vector<2x192xf32>
    %391 = arith.divf %389, %390 : vector<2x192xf32>
    %392 = vector.extract_strided_slice %385 {offsets = [0, 192], sizes = [2, 64], strides = [1, 1]} : vector<2x256xf32> to vector<2x64xf32>
    %393 = math.tanh %392 : vector<2x64xf32>
    %394 = vector.extract_strided_slice %391 {offsets = [0, 0], sizes = [2, 64], strides = [1, 1]} : vector<2x192xf32> to vector<2x64xf32>
    %395 = vector.extract_strided_slice %391 {offsets = [0, 64], sizes = [2, 64], strides = [1, 1]} : vector<2x192xf32> to vector<2x64xf32>
    %396 = vector.extract_strided_slice %391 {offsets = [0, 128], sizes = [2, 64], strides = [1, 1]} : vector<2x192xf32> to vector<2x64xf32>
    %397 = arith.mulf %395, %376 : vector<2x64xf32>
    %398 = arith.mulf %394, %393 : vector<2x64xf32>
    %399 = arith.addf %397, %398 : vector<2x64xf32>
    %400 = math.tanh %399 : vector<2x64xf32>
    %401 = arith.mulf %396, %400 : vector<2x64xf32>
    %402 = vector.extract_strided_slice %401 {offsets = [0, 0], sizes = [2, 32], strides = [1, 1]} : vector<2x64xf32> to vector<2x32xf32>
    %c14_114 = arith.constant 14 : index
    %c0_115 = arith.constant 0 : index
    %403 = vector.load %arg5[%c14_114, %c0_115] : memref<16x64xf32, #tpu.memory_space<vmem>>, vector<2x32xf32>
    tpu.vector_store %arg5[%c14_114, %c0_115], %402 {strides = array<i32>} : memref<16x64xf32, #tpu.memory_space<vmem>>, vector<2x32xf32>,
    %404 = vector.extract_strided_slice %401 {offsets = [0, 32], sizes = [2, 32], strides = [1, 1]} : vector<2x64xf32> to vector<2x32xf32>
    %c0_116 = arith.constant 0 : index
    %c32_117 = arith.constant 32 : index
    %405 = vector.load %arg5[%c0_116, %c32_117] : memref<16x64xf32, #tpu.memory_space<vmem>>, vector<2x32xf32>
    tpu.vector_store %arg5[%c0_116, %c32_117], %404 {strides = array<i32>} : memref<16x64xf32, #tpu.memory_space<vmem>>, vector<2x32xf32>,
    %c0_118 = arith.constant 0 : index
    %c0_119 = arith.constant 0 : index
    %406 = vector.load %arg5[%c0_118, %c0_119] : memref<16x64xf32, #tpu.memory_space<vmem>>, vector<16x64xf32>
    %cst_120 = arith.constant dense<0.000000e+00> : vector<16x192xf32>
    %407 = tpu.matmul %406, %6, %cst_120 {dimension_numbers = #tpu.dot_dimension_numbers<[1], [0], [0], [1], [0, 0, 1, 1], [], []>} : vector<16x64xf32>, vector<64x192xf32>, vector<16x192xf32> -> vector<16x192xf32>
    %408 = vector.broadcast %9 : vector<1x192xf32> to vector<16x192xf32>
    %409 = arith.addf %407, %408 : vector<16x192xf32>
    %410 = vector.extract_strided_slice %409 {offsets = [0, 0], sizes = [16, 64], strides = [1, 1]} : vector<16x192xf32> to vector<16x64xf32>
    %411 = vector.extract_strided_slice %409 {offsets = [0, 64], sizes = [16, 64], strides = [1, 1]} : vector<16x192xf32> to vector<16x64xf32>
    %412 = vector.extract_strided_slice %409 {offsets = [0, 128], sizes = [16, 64], strides = [1, 1]} : vector<16x192xf32> to vector<16x64xf32>
    %cst_121 = arith.constant dense<0.000000e+00> : vector<16x16xf32>
    %413 = tpu.matmul %410, %411, %cst_121 {dimension_numbers = #tpu.dot_dimension_numbers<[1], [1], [0], [0], [0, 0, 1, 0], [], []>} : vector<16x64xf32>, vector<16x64xf32>, vector<16x16xf32> -> vector<16x16xf32>
    %414 = arith.addf %413, %14 : vector<16x16xf32>
    %cst_122 = arith.constant dense<0xFF800000> : vector<16xf32>
    %415 = vector.multi_reduction <maximumf>, %414, %cst_122 [1] : vector<16x16xf32> to vector<16xf32>
    %cst_123 = arith.constant 0xFF800000 : f32
    %416 = vector.broadcast %cst_123 : f32 to vector<16xf32>
    %417 = arith.maximumf %416, %415 : vector<16xf32>
    %418 = vector.shape_cast %417 : vector<16xf32> to vector<16x1xf32>
    %419 = vector.broadcast %418 : vector<16x1xf32> to vector<16x16xf32>
    %420 = arith.subf %414, %419 : vector<16x16xf32>
    %421 = math.exp %420 : vector<16x16xf32>
    %cst_124 = arith.constant dense<0.000000e+00> : vector<16xf32>
    %422 = vector.multi_reduction <add>, %421, %cst_124 [1] : vector<16x16xf32> to vector<16xf32>
    %423 = vector.shape_cast %422 : vector<16xf32> to vector<16x1xf32>
    %424 = vector.broadcast %423 : vector<16x1xf32> to vector<16x16xf32>
    %425 = arith.divf %421, %424 : vector<16x16xf32>
    %cst_125 = arith.constant dense<0.000000e+00> : vector<16x64xf32>
    %426 = tpu.matmul %425, %412, %cst_125 {dimension_numbers = #tpu.dot_dimension_numbers<[1], [0], [0], [1], [0, 0, 1, 1], [], []>} : vector<16x16xf32>, vector<16x64xf32>, vector<16x64xf32> -> vector<16x64xf32>
    %cst_126 = arith.constant dense<0.000000e+00> : vector<16x64xf32>
    %427 = tpu.matmul %406, %10, %cst_126 {dimension_numbers = #tpu.dot_dimension_numbers<[1], [0], [0], [1], [0, 0, 1, 1], [], []>} : vector<16x64xf32>, vector<64x64xf32>, vector<16x64xf32> -> vector<16x64xf32>
    %cst_127 = arith.constant dense<0.000000e+00> : vector<16x64xf32>
    %428 = tpu.matmul %426, %11, %cst_127 {dimension_numbers = #tpu.dot_dimension_numbers<[1], [0], [0], [1], [0, 0, 1, 1], [], []>} : vector<16x64xf32>, vector<64x64xf32>, vector<16x64xf32> -> vector<16x64xf32>
    %429 = arith.addf %427, %428 : vector<16x64xf32>
    %430 = vector.broadcast %12 : vector<1x64xf32> to vector<16x64xf32>
    %431 = arith.addf %429, %430 : vector<16x64xf32>
    %c0_128 = arith.constant 0 : index
    %c0_129 = arith.constant 0 : index
    %432 = vector.load %arg3[%c0_128, %c0_129] : memref<16x64xf32, #tpu.memory_space<vmem>>, vector<16x64xf32>
    tpu.vector_store %arg3[%c0_128, %c0_129], %431 {strides = array<i32>} : memref<16x64xf32, #tpu.memory_space<vmem>>, vector<16x64xf32>,
    return
  }
}

</mosaic_0001>

<llo_original>
// kernel: wsd_bilstm_forward.1
$region0: #{wsd_bilstm_forward.1}
  #allocation0 [shape = 'u32[]', space=smem, size = 0x4, offset = 0x4, fixed_abs, tag = 'smem constant byte address 0x4 - core index']
  #allocation1 [shape = 'u32[144,128]{1,0:T(1,128)}', space=vmem, size = 0x12000, scoped, tag = 'internal scratch']
  #allocation2 [shape = 'f32[16,64]{1,0:T(8,128)}', space=vmem, size = 0x2000, scoped, tag = 'scratch operand']
  #allocation3 [shape = 'f32[16,64]{1,0:T(8,128)}', space=vmem, size = 0x2000, scoped, tag = 'scratch operand']
  %s0 = inlined_call_operand.vmem [shape: s32[16,1], index: 0, kind: input, shape index: {}]
  %s1 = inlined_call_operand.hbm [shape: f32[355,256], index: 1, kind: input, shape index: {}]
  %s2 = inlined_call_operand.vmem [shape: f32[161,64], index: 2, kind: input, shape index: {}]
  %s3 = inlined_call_operand.hbm [shape: f32[16,64], index: 3, kind: output, shape index: {}]
  %s4 = sld [smem:[#allocation0]]
  $region26: #{wsd_bilstm_forward.1} parent=0
    _
  %s6 = ssub.s32 1, %s4
  %s7 = scalar_select 0, %s6, %s4
  $region1: #{wsd_bilstm_forward.1} parent=0
    #allocation4 [shape = 'u8[368640]{0}', space=vmem, size = 0x5a000, scoped, tag = 'input window, operand 1, single buffered']
    #allocation5 [shape = 's32[1]{0}', space=sflag, size = 0x4, scoped, tag = 'scoped memory for wsd_bilstm_forward.1']
    #allocation6 [shape = 's32[1]{0}', space=sflag, size = 0x4, scoped, tag = 'scoped memory for wsd_bilstm_forward.1']
    #allocation7 [shape = 'u8[8192]{0}', space=vmem, size = 0x2000, scoped, tag = 'output window, operand 0, single buffered']
    %8 = vsyncpa [#allocation5], 0
    %9 = vsyncpa [#allocation6], 0
    // Predicated region
    $region2: #{wsd_bilstm_forward.1} parent=1 // pred_check
      _
    $region3: #{wsd_bilstm_forward.1} parent=1 // pred_check_branch
      %11 = sbr.rel (0) target = $region5
    $region4: #{wsd_bilstm_forward.1} parent=1 // pred_region
      _
    $region5: #{wsd_bilstm_forward.1} parent=1 // pred_fallthru
      _
    // Predicated region
    $region6: #{wsd_bilstm_forward.1} parent=1 // pred_check
      _
    $region7: #{wsd_bilstm_forward.1} parent=1 // pred_check_branch
      %13 = sbr.rel (0) target = $region9
    $region8: #{wsd_bilstm_forward.1} parent=1 // pred_region
      %s15 = ssub.s32 11520, 11520
      %16 = vsyncadd [#allocation5], %s15
      %s17 = sshll.u32 [#allocation4], 4
      %s18 = int_to_ptr.vmem [resolvable:$true] %s17
      %23 = dma.hbm_to_vmem [thread:$0]  %s1, 11520, %s18, [#allocation5], 256, 256, 16
    $region9: #{wsd_bilstm_forward.1} parent=1 // pred_fallthru
      _
    // Predicated region
    $region10: #{wsd_bilstm_forward.1} parent=1 // pred_check
      _
    $region11: #{wsd_bilstm_forward.1} parent=1 // pred_check_branch
      %25 = sbr.rel (0) target = $region13
    $region12: #{wsd_bilstm_forward.1} parent=1 // pred_region
      _
    $region13: #{wsd_bilstm_forward.1} parent=1 // pred_fallthru
      _
    // Predicated region
    $region14: #{wsd_bilstm_forward.1} parent=1 // pred_check
      _
    $region15: #{wsd_bilstm_forward.1} parent=1 // pred_check_branch
      %27 = sbr.rel (0) target = $region17
    $region16: #{wsd_bilstm_forward.1} parent=1 // pred_region
      %28 = dma.done [#allocation5], 11520
    $region17: #{wsd_bilstm_forward.1} parent=1 // pred_fallthru
      _
    %v29 = vld [vmem:[#allocation4] sm:$0xff]
    %v30 = vld [vmem:[#allocation4 + $0x8] sm:$0xff]
    %v31 = vld [vmem:[#allocation4 + $0x10] sm:$0xff]
    %v32 = vld [vmem:[#allocation4 + $0x18] sm:$0xff]
    %v33 = vld [vmem:[#allocation4 + $0x20] sm:$0xff]
    %v34 = vld [vmem:[#allocation4 + $0x28] sm:$0xff]
    %v35 = vld [vmem:[#allocation4 + $0x30] sm:$0xff]
    %v36 = vld [vmem:[#allocation4 + $0x38] sm:$0xff]
    %v37 = vld [vmem:[#allocation4 + $0x40] sm:$0xff]
    %v38 = vld [vmem:[#allocation4 + $0x48] sm:$0xff]
    %v39 = vld [vmem:[#allocation4 + $0x50] sm:$0xff]
    %v40 = vld [vmem:[#allocation4 + $0x58] sm:$0xff]
    %v41 = vld [vmem:[#allocation4 + $0x60] sm:$0xff]
    %v42 = vld [vmem:[#allocation4 + $0x68] sm:$0xff]
    %v43 = vld [vmem:[#allocation4 + $0x70] sm:$0xff]
    %v44 = vld [vmem:[#allocation4 + $0x78] sm:$0xff]
    %v45 = vld [vmem:[#allocation4 + $0x80] sm:$0xff]
    %v46 = vld [vmem:[#allocation4 + $0x88] sm:$0xff]
    %v47 = vld [vmem:[#allocation4 + $0x90] sm:$0xff]
    %v48 = vld [vmem:[#allocation4 + $0x98] sm:$0xff]
    %v49 = vld [vmem:[#allocation4 + $0xa0] sm:$0xff]
    %v50 = vld [vmem:[#allocation4 + $0xa8] sm:$0xff]
    %v51 = vld [vmem:[#allocation4 + $0xb0] sm:$0xff]
    %v52 = vld [vmem:[#allocation4 + $0xb8] sm:$0xff]
    %v53 = vld [vmem:[#allocation4 + $0xc0] sm:$0xff]
    %v54 = vld [vmem:[#allocation4 + $0xc8] sm:$0xff]
    %v55 = vld [vmem:[#allocation4 + $0xd0] sm:$0xff]
    %v56 = vld [vmem:[#allocation4 + $0xd8] sm:$0xff]
    %v57 = vld [vmem:[#allocation4 + $0xe0] sm:$0xff]
    %v58 = vld [vmem:[#allocation4 + $0xe8] sm:$0xff]
    %v59 = vld [vmem:[#allocation4 + $0xf0] sm:$0xff]
    %v60 = vld [vmem:[#allocation4 + $0xf8] sm:$0xff]
    %v61 = vld [vmem:[#allocation4 + $0x100] sm:$0xff]
    %v62 = vld [vmem:[#allocation4 + $0x108] sm:$0xff]
    %v63 = vld [vmem:[#allocation4 + $0x110] sm:$0xff]
    %v64 = vld [vmem:[#allocation4 + $0x118] sm:$0xff]
    %v65 = vld [vmem:[#allocation4 + $0x120] sm:$0xff]
    %v66 = vld [vmem:[#allocation4 + $0x128] sm:$0xff]
    %v67 = vld [vmem:[#allocation4 + $0x130] sm:$0xff]
    %v68 = vld [vmem:[#allocation4 + $0x138] sm:$0xff]
    %v69 = vld [vmem:[#allocation4 + $0x140] sm:$0xff]
    %v70 = vld [vmem:[#allocation4 + $0x148] sm:$0xff]
    %v71 = vld [vmem:[#allocation4 + $0x150] sm:$0xff]
    %v72 = vld [vmem:[#allocation4 + $0x158] sm:$0xff]
    %v73 = vld [vmem:[#allocation4 + $0x160] sm:$0xff]
    %v74 = vld [vmem:[#allocation4 + $0x168] sm:$0xff]
    %v75 = vld [vmem:[#allocation4 + $0x170] sm:$0xff]
    %v76 = vld [vmem:[#allocation4 + $0x178] sm:$0xff]
    %v77 = vld [vmem:[#allocation4 + $0x180] sm:$0xff]
    %v78 = vld [vmem:[#allocation4 + $0x188] sm:$0xff]
    %v79 = vld [vmem:[#allocation4 + $0x190] sm:$0xff]
    %v80 = vld [vmem:[#allocation4 + $0x198] sm:$0xff]
    %v81 = vld [vmem:[#allocation4 + $0x1a0] sm:$0xff]
    %v82 = vld [vmem:[#allocation4 + $0x1a8] sm:$0xff]
    %v83 = vld [vmem:[#allocation4 + $0x1b0] sm:$0xff]
    %v84 = vld [vmem:[#allocation4 + $0x1b8] sm:$0xff]
    %v85 = vld [vmem:[#allocation4 + $0x1c0] sm:$0xff]
    %v86 = vld [vmem:[#allocation4 + $0x1c8] sm:$0xff]
    %v87 = vld [vmem:[#allocation4 + $0x1d0] sm:$0xff]
    %v88 = vld [vmem:[#allocation4 + $0x1d8] sm:$0xff]
    %v89 = vld [vmem:[#allocation4 + $0x1e0] sm:$0xff]
    %v90 = vld [vmem:[#allocation4 + $0x1e8] sm:$0xff]
    %v91 = vld [vmem:[#allocation4 + $0x1f0] sm:$0xff]
    %v92 = vld [vmem:[#allocation4 + $0x1f8] sm:$0xff]
    %v93 = vld [vmem:[#allocation4 + $0x200] sm:$0xff]
    %v94 = vld [vmem:[#allocation4 + $0x208] sm:$0xff]
    %v95 = vld [vmem:[#allocation4 + $0x210] sm:$0xff]
    %v96 = vld [vmem:[#allocation4 + $0x218] sm:$0xff]
    %v97 = vld [vmem:[#allocation4 + $0x220] sm:$0xff]
    %v98 = vld [vmem:[#allocation4 + $0x228] sm:$0xff]
    %v99 = vld [vmem:[#allocation4 + $0x230] sm:$0xff]
    %v100 = vld [vmem:[#allocation4 + $0x238] sm:$0xff]
    %v101 = vld [vmem:[#allocation4 + $0x240] sm:$0xff]
    %v102 = vld [vmem:[#allocation4 + $0x248] sm:$0xff]
    %v103 = vld [vmem:[#allocation4 + $0x250] sm:$0xff]
    %v104 = vld [vmem:[#allocation4 + $0x258] sm:$0xff]
    %v105 = vld [vmem:[#allocation4 + $0x260] sm:$0xff]
    %v106 = vld [vmem:[#allocation4 + $0x268] sm:$0xff]
    %v107 = vld [vmem:[#allocation4 + $0x270] sm:$0xff]
    %v108 = vld [vmem:[#allocation4 + $0x278] sm:$0xff]
    %v109 = vld [vmem:[#allocation4 + $0x280] sm:$0xff]
    %v110 = vld [vmem:[#allocation4 + $0x288] sm:$0xff]
    %v111 = vld [vmem:[#allocation4 + $0x290] sm:$0xff]
    %v112 = vld [vmem:[#allocation4 + $0x298] sm:$0xff]
    %v113 = vld [vmem:[#allocation4 + $0x2a0] sm:$0xff]
    %v114 = vld [vmem:[#allocation4 + $0x2a8] sm:$0xff]
    %v115 = vld [vmem:[#allocation4 + $0x2b0] sm:$0xff]
    %v116 = vld [vmem:[#allocation4 + $0x2b8] sm:$0xff]
    %s117 = scalar_lea.vmem [#allocation4], 704
    %v118 = vld [vmem:[%s117] ss:$8 sm:$0x3]
    %s119 = scalar_lea.vmem [#allocation4], 705
    %v120 = vld [vmem:[%s119] ss:$8 sm:$0x3]
    %s121 = scalar_lea.vmem [#allocation4], 706
    %v122 = vld [vmem:[%s121] ss:$8 sm:$0x3]
    %v123 = vld [vmem:[%s2] sm:$0xff]
    %v124 = vld [vmem:[%s2 + $0x8] sm:$0xff]
    %v125 = vld [vmem:[%s2 + $0x10] sm:$0xff]
    %v126 = vld [vmem:[%s2 + $0x18] sm:$0xff]
    %v127 = vld [vmem:[%s2 + $0x20] sm:$0xff]
    %v128 = vld [vmem:[%s2 + $0x28] sm:$0xff]
    %v129 = vld [vmem:[%s2 + $0x30] sm:$0xff]
    %v130 = vld [vmem:[%s2 + $0x38] sm:$0xff]
    %v131 = vld [vmem:[%s2 + $0x40] sm:$0xff]
    %v132 = vld [vmem:[%s2 + $0x48] sm:$0xff]
    %v133 = vld [vmem:[%s2 + $0x50] sm:$0xff]
    %v134 = vld [vmem:[%s2 + $0x58] sm:$0xff]
    %v135 = vld [vmem:[%s2 + $0x60] sm:$0xff]
    %v136 = vld [vmem:[%s2 + $0x68] sm:$0xff]
    %v137 = vld [vmem:[%s2 + $0x70] sm:$0xff]
    %v138 = vld [vmem:[%s2 + $0x78] sm:$0xff]
    %v139 = vld [vmem:[%s2 + $0x80] sm:$0x1]
    %v140 = vld [vmem:[%s2 + $0x81] sm:$0xff]
    %v141 = vld [vmem:[%s2 + $0x89] sm:$0xff]
    %v142 = vld [vmem:[%s2 + $0x91] sm:$0xff]
    %v143 = vld [vmem:[%s2 + $0x99] sm:$0xff]
    %v144 = vld [vmem:[%s0] sm:$0xff]
    %v145 = vld [vmem:[%s0 + $0x8] sm:$0xff]
    %v146 = vlaneseq
    %v147 = vand.u32 %v146, 127
    %148 = vset.pattern.permute.xlu0 0
    %149 = vperm.xlu0 %148, %v144
    %v150 = vpop.permute.xlu0 %149
    %151 = vset.pattern.permute.xlu0 0
    %152 = vperm.xlu0 %151, %v145
    %v153 = vpop.permute.xlu0 %152
    %vm154 = vcmp.eq.s32.totalorder %v150, %v147
    %vm155 = vcmp.eq.s32.totalorder %v153, %v147
    %v156 = vsel %vm154, 1, 0
    %v157 = vsel %vm155, 1, 0
    %v158 = vcvt.s32.f32 %v156
    %v159 = vcvt.s32.f32 %v157
    %vm160 = vcmask 130048
    %v162 = vsel %vm160, %v140, 0
    %v165 = vsel %vm160, %v141, 0
    %167 = vmatprep.subr.mxu0 0.0
    %168 = vmatpush1.msra.mxu0 0.0
    %169 = vmatprep.subr.mxu0 0.0
    %170 = vmatpush1.msra.mxu0 0.0
    %171 = vmatprep.subr.mxu0 0.0
    %172 = vmatpush1.msra.mxu0 0.0
    %173 = vmatprep.subr.mxu0 0.0
    %174 = vmatpush1.msra.mxu0 0.0
    %175 = vmatprep.subr.mxu0 0.0
    %176 = vmatpush1.msra.mxu0 0.0
    %177 = vmatprep.subr.mxu0 0.0
    %178 = vmatpush1.msra.mxu0 0.0
    %179 = vmatprep.subr.mxu0 0.0
    %180 = vmatpush1.msra.mxu0 0.0
    %181 = vmatprep.subr.mxu0 0.0
    %182 = vmatpush1.msra.mxu0 0.0
    %183 = vmatprep.subr.mxu0 0.0
    %184 = vmatpush1.msra.mxu0 0.0
    %185 = vmatprep.subr.mxu0 0.0
    %186 = vmatpush1.msra.mxu0 0.0
    %187 = vmatprep.subr.mxu0 0.0
    %188 = vmatpush1.msra.mxu0 0.0
    %189 = vmatprep.subr.mxu0 0.0
    %190 = vmatpush1.msra.mxu0 0.0
    %191 = vmatprep.subr.mxu0 0.0
    %192 = vmatpush1.msra.mxu0 0.0
    %193 = vmatprep.subr.mxu0 0.0
    %194 = vmatpush1.msra.mxu0 0.0
    %195 = vmatprep.subr.mxu0 0.0
    %196 = vmatpush1.msra.mxu0 %v159
    %197 = vmatprep.subr.mxu0 0.0
    %198 = vmatpush1.msra.mxu0 %v158
    %199 = vmatprep.subr.mxu0 0.0
    %200 = vmatpush2.msra.mxu0 0.0
    %201 = vmatprep.subr.mxu0 0.0
    %202 = vmatpush2.msra.mxu0 0.0
    %203 = vmatprep.subr.mxu0 0.0
    %204 = vmatpush2.msra.mxu0 0.0
    %205 = vmatprep.subr.mxu0 0.0
    %206 = vmatpush2.msra.mxu0 0.0
    %207 = vmatprep.subr.mxu0 0.0
    %208 = vmatpush2.msra.mxu0 0.0
    %209 = vmatprep.subr.mxu0 0.0
    %210 = vmatpush2.msra.mxu0 0.0
    %211 = vmatprep.subr.mxu0 0.0
    %212 = vmatpush2.msra.mxu0 0.0
    %213 = vmatprep.subr.mxu0 0.0
    %214 = vmatpush2.msra.mxu0 0.0
    %215 = vmatprep.subr.mxu0 0.0
    %216 = vmatpush2.msra.mxu0 0.0
    %217 = vmatprep.subr.mxu0 0.0
    %218 = vmatpush2.msra.mxu0 0.0
    %219 = vmatprep.subr.mxu0 0.0
    %220 = vmatpush2.msra.mxu0 0.0
    %221 = vmatprep.subr.mxu0 0.0
    %222 = vmatpush2.msra.mxu0 0.0
    %223 = vmatprep.subr.mxu0 0.0
    %224 = vmatpush2.msra.mxu0 0.0
    %225 = vmatprep.subr.mxu0 0.0
    %226 = vmatpush2.msra.mxu0 0.0
    %227 = vmatprep.subr.mxu0 0.0
    %228 = vmatpush2.msra.mxu0 0.0
    %229 = vmatprep.subr.mxu0 0.0
    %230 = vmatpush2.msra.mxu0 0.0
    %231 = vmatprep.mubr.f32.mxu0 0.0
    %232 = vmatmul.mubr.f32.gmra.mxu0 %v162
    %v233 = vpop.f32.mrf.mxu0
    %v234 = vadd.f32 0.0, %v233
    %v235 = vpop.f32.mrf.mxu0
    %236 = vmatprep.mubr.f32.mxu0 0.0
    %237 = vmatmul.mubr.f32.gmra.mxu0 %v165
    %v238 = vpop.f32.mrf.mxu0
    %v239 = vadd.f32 0.0, %v238
    %v240 = vpop.f32.mrf.mxu0
    %241 = vdwg.mxu0
    %v243 = vsel %vm160, %v234, 0
    %v246 = vsel %vm160, %v239, 0
    %248 = vmatprep.subr.mxu0 0.0
    %249 = vmatpush1.msra.mxu0 0.0
    %250 = vmatprep.subr.mxu0 0.0
    %251 = vmatpush1.msra.mxu0 0.0
    %252 = vmatprep.subr.mxu0 0.0
    %253 = vmatpush1.msra.mxu0 0.0
    %254 = vmatprep.subr.mxu0 0.0
    %255 = vmatpush1.msra.mxu0 0.0
    %256 = vmatprep.subr.mxu0 0.0
    %257 = vmatpush1.msra.mxu0 0.0
    %258 = vmatprep.subr.mxu0 0.0
    %259 = vmatpush1.msra.mxu0 0.0
    %260 = vmatprep.subr.mxu0 0.0
    %261 = vmatpush1.msra.mxu0 0.0
    %262 = vmatprep.subr.mxu0 0.0
    %263 = vmatpush1.msra.mxu0 0.0
    %264 = vmatprep.subr.mxu0 0.0
    %265 = vmatpush1.msra.mxu0 0.0
    %266 = vmatprep.subr.mxu0 0.0
    %267 = vmatpush1.msra.mxu0 0.0
    %268 = vmatprep.subr.mxu0 0.0
    %269 = vmatpush1.msra.mxu0 0.0
    %270 = vmatprep.subr.mxu0 0.0
    %271 = vmatpush1.msra.mxu0 0.0
    %272 = vmatprep.subr.mxu0 0.0
    %273 = vmatpush1.msra.mxu0 0.0
    %274 = vmatprep.subr.mxu0 0.0
    %275 = vmatpush1.msra.mxu0 0.0
    %276 = vmatprep.subr.mxu0 %v36
    %277 = vmatpush1.msra.mxu0 %v35
    %278 = vmatprep.subr.mxu0 %v34
    %279 = vmatpush1.msra.mxu0 %v33
    %280 = vmatprep.subr.mxu0 0.0
    %281 = vmatpush2.msra.mxu0 0.0
    %282 = vmatprep.subr.mxu0 0.0
    %283 = vmatpush2.msra.mxu0 0.0
    %284 = vmatprep.subr.mxu0 0.0
    %285 = vmatpush2.msra.mxu0 0.0
    %286 = vmatprep.subr.mxu0 0.0
    %287 = vmatpush2.msra.mxu0 0.0
    %288 = vmatprep.subr.mxu0 0.0
    %289 = vmatpush2.msra.mxu0 0.0
    %290 = vmatprep.subr.mxu0 0.0
    %291 = vmatpush2.msra.mxu0 0.0
    %292 = vmatprep.subr.mxu0 0.0
    %293 = vmatpush2.msra.mxu0 0.0
    %294 = vmatprep.subr.mxu0 0.0
    %295 = vmatpush2.msra.mxu0 0.0
    %296 = vmatprep.subr.mxu0 0.0
    %297 = vmatpush2.msra.mxu0 0.0
    %298 = vmatprep.subr.mxu0 0.0
    %299 = vmatpush2.msra.mxu0 0.0
    %300 = vmatprep.subr.mxu0 0.0
    %301 = vmatpush2.msra.mxu0 0.0
    %302 = vmatprep.subr.mxu0 0.0
    %303 = vmatpush2.msra.mxu0 0.0
    %304 = vmatprep.subr.mxu0 0.0
    %305 = vmatpush2.msra.mxu0 0.0
    %306 = vmatprep.subr.mxu0 0.0
    %307 = vmatpush2.msra.mxu0 0.0
    %308 = vmatprep.subr.mxu0 0.0
    %309 = vmatpush2.msra.mxu0 0.0
    %310 = vmatprep.subr.mxu0 0.0
    %311 = vmatpush2.msra.mxu0 0.0
    %312 = vmatprep.mubr.f32.mxu0 0.0
    %313 = vmatmul.mubr.f32.gmra.mxu0 %v243
    %v314 = vpop.f32.mrf.mxu0
    %v315 = vadd.f32 0.0, %v314
    %v316 = vpop.f32.mrf.mxu0
    %v317 = vadd.f32 0.0, %v316
    %318 = vmatprep.mubr.f32.mxu0 0.0
    %319 = vmatmul.mubr.f32.gmra.mxu0 %v246
    %v320 = vpop.f32.mrf.mxu0
    %v321 = vadd.f32 0.0, %v320
    %v322 = vpop.f32.mrf.mxu0
    %v323 = vadd.f32 0.0, %v322
    %324 = vdwg.mxu0
    %v326 = vsel %vm160, %v158, 0
    %v329 = vsel %vm160, %v159, 0
    %331 = vmatprep.subr.mxu0 0.0
    %332 = vmatpush1.msra.mxu0 0.0
    %333 = vmatprep.subr.mxu0 0.0
    %334 = vmatpush1.msra.mxu0 0.0
    %335 = vmatprep.subr.mxu0 0.0
    %336 = vmatpush1.msra.mxu0 0.0
    %337 = vmatprep.subr.mxu0 0.0
    %338 = vmatpush1.msra.mxu0 0.0
    %339 = vmatprep.subr.mxu0 0.0
    %340 = vmatpush1.msra.mxu0 0.0
    %341 = vmatprep.subr.mxu0 0.0
    %342 = vmatpush1.msra.mxu0 0.0
    %343 = vmatprep.subr.mxu0 0.0
    %344 = vmatpush1.msra.mxu0 0.0
    %345 = vmatprep.subr.mxu0 0.0
    %346 = vmatpush1.msra.mxu0 0.0
    %347 = vmatprep.subr.mxu0 0.0
    %348 = vmatpush1.msra.mxu0 0.0
    %349 = vmatprep.subr.mxu0 0.0
    %350 = vmatpush1.msra.mxu0 0.0
    %351 = vmatprep.subr.mxu0 0.0
    %352 = vmatpush1.msra.mxu0 0.0
    %353 = vmatprep.subr.mxu0 0.0
    %354 = vmatpush1.msra.mxu0 0.0
    %355 = vmatprep.subr.mxu0 0.0
    %356 = vmatpush1.msra.mxu0 0.0
    %357 = vmatprep.subr.mxu0 0.0
    %358 = vmatpush1.msra.mxu0 0.0
    %359 = vmatprep.subr.mxu0 %v32
    %360 = vmatpush1.msra.mxu0 %v31
    %361 = vmatprep.subr.mxu0 %v30
    %362 = vmatpush1.msra.mxu0 %v29
    %363 = vmatprep.subr.mxu0 0.0
    %364 = vmatpush2.msra.mxu0 0.0
    %365 = vmatprep.subr.mxu0 0.0
    %366 = vmatpush2.msra.mxu0 0.0
    %367 = vmatprep.subr.mxu0 0.0
    %368 = vmatpush2.msra.mxu0 0.0
    %369 = vmatprep.subr.mxu0 0.0
    %370 = vmatpush2.msra.mxu0 0.0
    %371 = vmatprep.subr.mxu0 0.0
    %372 = vmatpush2.msra.mxu0 0.0
    %373 = vmatprep.subr.mxu0 0.0
    %374 = vmatpush2.msra.mxu0 0.0
    %375 = vmatprep.subr.mxu0 0.0
    %376 = vmatpush2.msra.mxu0 0.0
    %377 = vmatprep.subr.mxu0 0.0
    %378 = vmatpush2.msra.mxu0 0.0
    %379 = vmatprep.subr.mxu0 0.0
    %380 = vmatpush2.msra.mxu0 0.0
    %381 = vmatprep.subr.mxu0 0.0
    %382 = vmatpush2.msra.mxu0 0.0
    %383 = vmatprep.subr.mxu0 0.0
    %384 = vmatpush2.msra.mxu0 0.0
    %385 = vmatprep.subr.mxu0 0.0
    %386 = vmatpush2.msra.mxu0 0.0
    %387 = vmatprep.subr.mxu0 0.0
    %388 = vmatpush2.msra.mxu0 0.0
    %389 = vmatprep.subr.mxu0 0.0
    %390 = vmatpush2.msra.mxu0 0.0
    %391 = vmatprep.subr.mxu0 0.0
    %392 = vmatpush2.msra.mxu0 0.0
    %393 = vmatprep.subr.mxu0 0.0
    %394 = vmatpush2.msra.mxu0 0.0
    %395 = vmatprep.mubr.f32.mxu0 0.0
    %396 = vmatmul.mubr.f32.gmra.mxu0 %v326
    %v397 = vpop.f32.mrf.mxu0
    %v398 = vadd.f32 %v315, %v397
    %v399 = vpop.f32.mrf.mxu0
    %v400 = vadd.f32 %v317, %v399
    %401 = vmatprep.mubr.f32.mxu0 0.0
    %402 = vmatmul.mubr.f32.gmra.mxu0 %v329
    %v403 = vpop.f32.mrf.mxu0
    %v404 = vadd.f32 %v321, %v403
    %v405 = vpop.f32.mrf.mxu0
    %v406 = vadd.f32 %v323, %v405
    %407 = vdwg.mxu0
    %v409 = vlaneseq
    %v410 = vshrl.u32 %v409, 7
    %v411 = vsub.s32 0, %v410
    %v412 = vrot.slane %v118, %v411
    %v413 = vlaneseq
    %v414 = vshrl.u32 %v413, 7
    %v415 = vsub.s32 1, %v414
    %v416 = vrot.slane %v118, %v415
    %v419 = vadd.f32 %v398, %v412
    %v420 = vadd.f32 %v400, %v416
    %v421 = vadd.f32 %v404, %v412
    %v422 = vadd.f32 %v406, %v416
    %vm423 = vcmask 523264
    %v425 = vsel %vm423, 0.0, 0
    %427 = vmatprep.subr.mxu0 0.0
    %428 = vmatpush1.msra.mxu0 0.0
    %429 = vmatprep.subr.mxu0 0.0
    %430 = vmatpush1.msra.mxu0 0.0
    %431 = vmatprep.subr.mxu0 0.0
    %432 = vmatpush1.msra.mxu0 0.0
    %433 = vmatprep.subr.mxu0 0.0
    %434 = vmatpush1.msra.mxu0 0.0
    %435 = vmatprep.subr.mxu0 0.0
    %436 = vmatpush1.msra.mxu0 0.0
    %437 = vmatprep.subr.mxu0 0.0
    %438 = vmatpush1.msra.mxu0 0.0
    %439 = vmatprep.subr.mxu0 0.0
    %440 = vmatpush1.msra.mxu0 0.0
    %441 = vmatprep.subr.mxu0 0.0
    %442 = vmatpush1.msra.mxu0 0.0
    %443 = vmatprep.subr.mxu0 %v52
    %444 = vmatpush1.msra.mxu0 %v51
    %445 = vmatprep.subr.mxu0 %v50
    %446 = vmatpush1.msra.mxu0 %v49
    %447 = vmatprep.subr.mxu0 %v48
    %448 = vmatpush1.msra.mxu0 %v47
    %449 = vmatprep.subr.mxu0 %v46
    %450 = vmatpush1.msra.mxu0 %v45
    %451 = vmatprep.subr.mxu0 %v44
    %452 = vmatpush1.msra.mxu0 %v43
    %453 = vmatprep.subr.mxu0 %v42
    %454 = vmatpush1.msra.mxu0 %v41
    %455 = vmatprep.subr.mxu0 %v40
    %456 = vmatpush1.msra.mxu0 %v39
    %457 = vmatprep.subr.mxu0 %v38
    %458 = vmatpush1.msra.mxu0 %v37
    %459 = vmatprep.subr.mxu0 0.0
    %460 = vmatpush2.msra.mxu0 0.0
    %461 = vmatprep.subr.mxu0 0.0
    %462 = vmatpush2.msra.mxu0 0.0
    %463 = vmatprep.subr.mxu0 0.0
    %464 = vmatpush2.msra.mxu0 0.0
    %465 = vmatprep.subr.mxu0 0.0
    %466 = vmatpush2.msra.mxu0 0.0
    %467 = vmatprep.subr.mxu0 0.0
    %468 = vmatpush2.msra.mxu0 0.0
    %469 = vmatprep.subr.mxu0 0.0
    %470 = vmatpush2.msra.mxu0 0.0
    %471 = vmatprep.subr.mxu0 0.0
    %472 = vmatpush2.msra.mxu0 0.0
    %473 = vmatprep.subr.mxu0 0.0
    %474 = vmatpush2.msra.mxu0 0.0
    %475 = vmatprep.subr.mxu0 0.0
    %476 = vmatpush2.msra.mxu0 0.0
    %477 = vmatprep.subr.mxu0 0.0
    %478 = vmatpush2.msra.mxu0 0.0
    %479 = vmatprep.subr.mxu0 0.0
    %480 = vmatpush2.msra.mxu0 0.0
    %481 = vmatprep.subr.mxu0 0.0
    %482 = vmatpush2.msra.mxu0 0.0
    %483 = vmatprep.subr.mxu0 0.0
    %484 = vmatpush2.msra.mxu0 0.0
    %485 = vmatprep.subr.mxu0 0.0
    %486 = vmatpush2.msra.mxu0 0.0
    %487 = vmatprep.subr.mxu0 0.0
    %488 = vmatpush2.msra.mxu0 0.0
    %489 = vmatprep.subr.mxu0 0.0
    %490 = vmatpush2.msra.mxu0 0.0
    %491 = vmatprep.mubr.f32.mxu0 0.0
    %492 = vmatmul.mubr.f32.gmra.mxu0 %v425
    %v493 = vpop.f32.mrf.mxu0
    %v494 = vadd.f32 0.0, %v493
    %v495 = vpop.f32.mrf.mxu0
    %v496 = vadd.f32 0.0, %v495
    %497 = vdwg.mxu0
    %v498 = vadd.f32 %v419, %v494
    %v499 = vadd.f32 %v420, %v496
    %v500 = vxor.u32 %v498, 2147483648
    %v501 = vxor.u32 %v499, 2147483648
    %v502 = vmul.f32 %v500, 1.442695
    %v503 = vpow.pop %v502
    %v504 = vmul.f32 %v501, 1.442695
    %v505 = vpow.pop %v504
    %v506 = vadd.f32 %v503, 1.0
    %v507 = vadd.f32 %v505, 1.0
    %v508 = vrcp.pop %v506
    %v509 = vmul.f32 1.0, %v508
    %v510 = vrcp.pop %v507
    %v511 = vmul.f32 1.0, %v510
    %v512 = vtanh.pop %v499
    %v513 = vmul.f32 %v509, 0.0
    %515 = vrot.lane.b32.xlu0 %v512, 64
    %v516 = vpop.permute.xlu0 %515
    %v518 = vmul.f32 %v509, %v516
    %520 = vrot.lane.b32.xlu0 %v518, 64
    %v521 = vpop.permute.xlu0 %520
    %v523 = vadd.f32 %v513, %v521
    %v524 = vtanh.pop %v523
    %526 = vrot.lane.b32.xlu0 %v524, 64
    %v527 = vpop.permute.xlu0 %526
    %v529 = vmul.f32 %v511, %v527
    %vm530 = vcmask 254976
    %531 = vst.msk [vmem:[#allocation2] sm:$0x3] %vm530, %v529
    %vm532 = vcmask 517376
    %533 = vst.msk [vmem:[#allocation2 + $0xe] sm:$0x3] %vm532, %v529
    %v535 = vsel %vm423, %v529, 0
    %537 = vmatprep.subr.mxu0 0.0
    %538 = vmatpush1.msra.mxu0 0.0
    %539 = vmatprep.subr.mxu0 0.0
    %540 = vmatpush1.msra.mxu0 0.0
    %541 = vmatprep.subr.mxu0 0.0
    %542 = vmatpush1.msra.mxu0 0.0
    %543 = vmatprep.subr.mxu0 0.0
    %544 = vmatpush1.msra.mxu0 0.0
    %545 = vmatprep.subr.mxu0 0.0
    %546 = vmatpush1.msra.mxu0 0.0
    %547 = vmatprep.subr.mxu0 0.0
    %548 = vmatpush1.msra.mxu0 0.0
    %549 = vmatprep.subr.mxu0 0.0
    %550 = vmatpush1.msra.mxu0 0.0
    %551 = vmatprep.subr.mxu0 0.0
    %552 = vmatpush1.msra.mxu0 0.0
    %553 = vmatprep.subr.mxu0 %v52
    %554 = vmatpush1.msra.mxu0 %v51
    %555 = vmatprep.subr.mxu0 %v50
    %556 = vmatpush1.msra.mxu0 %v49
    %557 = vmatprep.subr.mxu0 %v48
    %558 = vmatpush1.msra.mxu0 %v47
    %559 = vmatprep.subr.mxu0 %v46
    %560 = vmatpush1.msra.mxu0 %v45
    %561 = vmatprep.subr.mxu0 %v44
    %562 = vmatpush1.msra.mxu0 %v43
    %563 = vmatprep.subr.mxu0 %v42
    %564 = vmatpush1.msra.mxu0 %v41
    %565 = vmatprep.subr.mxu0 %v40
    %566 = vmatpush1.msra.mxu0 %v39
    %567 = vmatprep.subr.mxu0 %v38
    %568 = vmatpush1.msra.mxu0 %v37
    %569 = vmatprep.subr.mxu0 0.0
    %570 = vmatpush2.msra.mxu0 0.0
    %571 = vmatprep.subr.mxu0 0.0
    %572 = vmatpush2.msra.mxu0 0.0
    %573 = vmatprep.subr.mxu0 0.0
    %574 = vmatpush2.msra.mxu0 0.0
    %575 = vmatprep.subr.mxu0 0.0
    %576 = vmatpush2.msra.mxu0 0.0
    %577 = vmatprep.subr.mxu0 0.0
    %578 = vmatpush2.msra.mxu0 0.0
    %579 = vmatprep.subr.mxu0 0.0
    %580 = vmatpush2.msra.mxu0 0.0
    %581 = vmatprep.subr.mxu0 0.0
    %582 = vmatpush2.msra.mxu0 0.0
    %583 = vmatprep.subr.mxu0 0.0
    %584 = vmatpush2.msra.mxu0 0.0
    %585 = vmatprep.subr.mxu0 0.0
    %586 = vmatpush2.msra.mxu0 0.0
    %587 = vmatprep.subr.mxu0 0.0
    %588 = vmatpush2.msra.mxu0 0.0
    %589 = vmatprep.subr.mxu0 0.0
    %590 = vmatpush2.msra.mxu0 0.0
    %591 = vmatprep.subr.mxu0 0.0
    %592 = vmatpush2.msra.mxu0 0.0
    %593 = vmatprep.subr.mxu0 0.0
    %594 = vmatpush2.msra.mxu0 0.0
    %595 = vmatprep.subr.mxu0 0.0
    %596 = vmatpush2.msra.mxu0 0.0
    %597 = vmatprep.subr.mxu0 0.0
    %598 = vmatpush2.msra.mxu0 0.0
    %599 = vmatprep.subr.mxu0 0.0
    %600 = vmatpush2.msra.mxu0 0.0
    %601 = vmatprep.mubr.f32.mxu0 0.0
    %602 = vmatmul.mubr.f32.gmra.mxu0 %v535
    %v603 = vpop.f32.mrf.mxu0
    %v604 = vadd.f32 0.0, %v603
    %v605 = vpop.f32.mrf.mxu0
    %v606 = vadd.f32 0.0, %v605
    %607 = vdwg.mxu0
    %v610 = vrot.slane %v604, 6
    %v611 = vrot.slane %v606, 6
    %v614 = vadd.f32 %v419, %v610
    %v615 = vadd.f32 %v420, %v611
    %v616 = vxor.u32 %v614, 2147483648
    %v617 = vxor.u32 %v615, 2147483648
    %v618 = vmul.f32 %v616, 1.442695
    %v619 = vpow.pop %v618
    %v620 = vmul.f32 %v617, 1.442695
    %v621 = vpow.pop %v620
    %v622 = vadd.f32 %v619, 1.0
    %v623 = vadd.f32 %v621, 1.0
    %v624 = vrcp.pop %v622
    %v625 = vmul.f32 1.0, %v624
    %v626 = vrcp.pop %v623
    %v627 = vmul.f32 1.0, %v626
    %v628 = vtanh.pop %v615
    %v630 = vrot.slane %v523, 6
    %v632 = vmul.f32 %v625, %v630
    %634 = vrot.lane.b32.xlu0 %v628, 64
    %v635 = vpop.permute.xlu0 %634
    %v637 = vmul.f32 %v625, %v635
    %639 = vrot.lane.b32.xlu0 %v637, 64
    %v640 = vpop.permute.xlu0 %639
    %v642 = vadd.f32 %v632, %v640
    %v643 = vtanh.pop %v642
    %645 = vrot.lane.b32.xlu0 %v643, 64
    %v646 = vpop.permute.xlu0 %645
    %v648 = vmul.f32 %v627, %v646
    %vm649 = vcmask 257026
    %650 = vst.msk [vmem:[#allocation2] sm:$0xc] %vm649, %v648
    %vm651 = vcmask 519426
    %652 = vst.msk [vmem:[#allocation2 + $0xa] sm:$0xc] %vm651, %v648
    %v654 = vrot.slane %v648, 2
    %v655 = vsel %vm423, %v654, 0
    %657 = vmatprep.subr.mxu0 0.0
    %658 = vmatpush1.msra.mxu0 0.0
    %659 = vmatprep.subr.mxu0 0.0
    %660 = vmatpush1.msra.mxu0 0.0
    %661 = vmatprep.subr.mxu0 0.0
    %662 = vmatpush1.msra.mxu0 0.0
    %663 = vmatprep.subr.mxu0 0.0
    %664 = vmatpush1.msra.mxu0 0.0
    %665 = vmatprep.subr.mxu0 0.0
    %666 = vmatpush1.msra.mxu0 0.0
    %667 = vmatprep.subr.mxu0 0.0
    %668 = vmatpush1.msra.mxu0 0.0
    %669 = vmatprep.subr.mxu0 0.0
    %670 = vmatpush1.msra.mxu0 0.0
    %671 = vmatprep.subr.mxu0 0.0
    %672 = vmatpush1.msra.mxu0 0.0
    %673 = vmatprep.subr.mxu0 %v52
    %674 = vmatpush1.msra.mxu0 %v51
    %675 = vmatprep.subr.mxu0 %v50
    %676 = vmatpush1.msra.mxu0 %v49
    %677 = vmatprep.subr.mxu0 %v48
    %678 = vmatpush1.msra.mxu0 %v47
    %679 = vmatprep.subr.mxu0 %v46
    %680 = vmatpush1.msra.mxu0 %v45
    %681 = vmatprep.subr.mxu0 %v44
    %682 = vmatpush1.msra.mxu0 %v43
    %683 = vmatprep.subr.mxu0 %v42
    %684 = vmatpush1.msra.mxu0 %v41
    %685 = vmatprep.subr.mxu0 %v40
    %686 = vmatpush1.msra.mxu0 %v39
    %687 = vmatprep.subr.mxu0 %v38
    %688 = vmatpush1.msra.mxu0 %v37
    %689 = vmatprep.subr.mxu0 0.0
    %690 = vmatpush2.msra.mxu0 0.0
    %691 = vmatprep.subr.mxu0 0.0
    %692 = vmatpush2.msra.mxu0 0.0
    %693 = vmatprep.subr.mxu0 0.0
    %694 = vmatpush2.msra.mxu0 0.0
    %695 = vmatprep.subr.mxu0 0.0
    %696 = vmatpush2.msra.mxu0 0.0
    %697 = vmatprep.subr.mxu0 0.0
    %698 = vmatpush2.msra.mxu0 0.0
    %699 = vmatprep.subr.mxu0 0.0
    %700 = vmatpush2.msra.mxu0 0.0
    %701 = vmatprep.subr.mxu0 0.0
    %702 = vmatpush2.msra.mxu0 0.0
    %703 = vmatprep.subr.mxu0 0.0
    %704 = vmatpush2.msra.mxu0 0.0
    %705 = vmatprep.subr.mxu0 0.0
    %706 = vmatpush2.msra.mxu0 0.0
    %707 = vmatprep.subr.mxu0 0.0
    %708 = vmatpush2.msra.mxu0 0.0
    %709 = vmatprep.subr.mxu0 0.0
    %710 = vmatpush2.msra.mxu0 0.0
    %711 = vmatprep.subr.mxu0 0.0
    %712 = vmatpush2.msra.mxu0 0.0
    %713 = vmatprep.subr.mxu0 0.0
    %714 = vmatpush2.msra.mxu0 0.0
    %715 = vmatprep.subr.mxu0 0.0
    %716 = vmatpush2.msra.mxu0 0.0
    %717 = vmatprep.subr.mxu0 0.0
    %718 = vmatpush2.msra.mxu0 0.0
    %719 = vmatprep.subr.mxu0 0.0
    %720 = vmatpush2.msra.mxu0 0.0
    %721 = vmatprep.mubr.f32.mxu0 0.0
    %722 = vmatmul.mubr.f32.gmra.mxu0 %v655
    %v723 = vpop.f32.mrf.mxu0
    %v724 = vadd.f32 0.0, %v723
    %v725 = vpop.f32.mrf.mxu0
    %v726 = vadd.f32 0.0, %v725
    %727 = vdwg.mxu0
    %v730 = vrot.slane %v724, 4
    %v731 = vrot.slane %v726, 4
    %v734 = vadd.f32 %v419, %v730
    %v735 = vadd.f32 %v420, %v731
    %v736 = vxor.u32 %v734, 2147483648
    %v737 = vxor.u32 %v735, 2147483648
    %v738 = vmul.f32 %v736, 1.442695
    %v739 = vpow.pop %v738
    %v740 = vmul.f32 %v737, 1.442695
    %v741 = vpow.pop %v740
    %v742 = vadd.f32 %v739, 1.0
    %v743 = vadd.f32 %v741, 1.0
    %v744 = vrcp.pop %v742
    %v745 = vmul.f32 1.0, %v744
    %v746 = vrcp.pop %v743
    %v747 = vmul.f32 1.0, %v746
    %v748 = vtanh.pop %v735
    %v750 = vrot.slane %v642, 6
    %v752 = vmul.f32 %v745, %v750
    %754 = vrot.lane.b32.xlu0 %v748, 64
    %v755 = vpop.permute.xlu0 %754
    %v757 = vmul.f32 %v745, %v755
    %759 = vrot.lane.b32.xlu0 %v757, 64
    %v760 = vpop.permute.xlu0 %759
    %v762 = vadd.f32 %v752, %v760
    %v763 = vtanh.pop %v762
    %765 = vrot.lane.b32.xlu0 %v763, 64
    %v766 = vpop.permute.xlu0 %765
    %v768 = vmul.f32 %v747, %v766
    %vm769 = vcmask 259076
    %770 = vst.msk [vmem:[#allocation2] sm:$0x30] %vm769, %v768
    %vm771 = vcmask 521476
    %772 = vst.msk [vmem:[#allocation2 + $0x6] sm:$0x30] %vm771, %v768
    %v774 = vrot.slane %v768, 4
    %v775 = vsel %vm423, %v774, 0
    %777 = vmatprep.subr.mxu0 0.0
    %778 = vmatpush1.msra.mxu0 0.0
    %779 = vmatprep.subr.mxu0 0.0
    %780 = vmatpush1.msra.mxu0 0.0
    %781 = vmatprep.subr.mxu0 0.0
    %782 = vmatpush1.msra.mxu0 0.0
    %783 = vmatprep.subr.mxu0 0.0
    %784 = vmatpush1.msra.mxu0 0.0
    %785 = vmatprep.subr.mxu0 0.0
    %786 = vmatpush1.msra.mxu0 0.0
    %787 = vmatprep.subr.mxu0 0.0
    %788 = vmatpush1.msra.mxu0 0.0
    %789 = vmatprep.subr.mxu0 0.0
    %790 = vmatpush1.msra.mxu0 0.0
    %791 = vmatprep.subr.mxu0 0.0
    %792 = vmatpush1.msra.mxu0 0.0
    %793 = vmatprep.subr.mxu0 %v52
    %794 = vmatpush1.msra.mxu0 %v51
    %795 = vmatprep.subr.mxu0 %v50
    %796 = vmatpush1.msra.mxu0 %v49
    %797 = vmatprep.subr.mxu0 %v48
    %798 = vmatpush1.msra.mxu0 %v47
    %799 = vmatprep.subr.mxu0 %v46
    %800 = vmatpush1.msra.mxu0 %v45
    %801 = vmatprep.subr.mxu0 %v44
    %802 = vmatpush1.msra.mxu0 %v43
    %803 = vmatprep.subr.mxu0 %v42
    %804 = vmatpush1.msra.mxu0 %v41
    %805 = vmatprep.subr.mxu0 %v40
    %806 = vmatpush1.msra.mxu0 %v39
    %807 = vmatprep.subr.mxu0 %v38
    %808 = vmatpush1.msra.mxu0 %v37
    %809 = vmatprep.subr.mxu0 0.0
    %810 = vmatpush2.msra.mxu0 0.0
    %811 = vmatprep.subr.mxu0 0.0
    %812 = vmatpush2.msra.mxu0 0.0
    %813 = vmatprep.subr.mxu0 0.0
    %814 = vmatpush2.msra.mxu0 0.0
    %815 = vmatprep.subr.mxu0 0.0
    %816 = vmatpush2.msra.mxu0 0.0
    %817 = vmatprep.subr.mxu0 0.0
    %818 = vmatpush2.msra.mxu0 0.0
    %819 = vmatprep.subr.mxu0 0.0
    %820 = vmatpush2.msra.mxu0 0.0
    %821 = vmatprep.subr.mxu0 0.0
    %822 = vmatpush2.msra.mxu0 0.0
    %823 = vmatprep.subr.mxu0 0.0
    %824 = vmatpush2.msra.mxu0 0.0
    %825 = vmatprep.subr.mxu0 0.0
    %826 = vmatpush2.msra.mxu0 0.0
    %827 = vmatprep.subr.mxu0 0.0
    %828 = vmatpush2.msra.mxu0 0.0
    %829 = vmatprep.subr.mxu0 0.0
    %830 = vmatpush2.msra.mxu0 0.0
    %831 = vmatprep.subr.mxu0 0.0
    %832 = vmatpush2.msra.mxu0 0.0
    %833 = vmatprep.subr.mxu0 0.0
    %834 = vmatpush2.msra.mxu0 0.0
    %835 = vmatprep.subr.mxu0 0.0
    %836 = vmatpush2.msra.mxu0 0.0
    %837 = vmatprep.subr.mxu0 0.0
    %838 = vmatpush2.msra.mxu0 0.0
    %839 = vmatprep.subr.mxu0 0.0
    %840 = vmatpush2.msra.mxu0 0.0
    %841 = vmatprep.mubr.f32.mxu0 0.0
    %842 = vmatmul.mubr.f32.gmra.mxu0 %v775
    %v843 = vpop.f32.mrf.mxu0
    %v844 = vadd.f32 0.0, %v843
    %v845 = vpop.f32.mrf.mxu0
    %v846 = vadd.f32 0.0, %v845
    %847 = vdwg.mxu0
    %v850 = vrot.slane %v844, 2
    %v851 = vrot.slane %v846, 2
    %v854 = vadd.f32 %v419, %v850
    %v855 = vadd.f32 %v420, %v851
    %v856 = vxor.u32 %v854, 2147483648
    %v857 = vxor.u32 %v855, 2147483648
    %v858 = vmul.f32 %v856, 1.442695
    %v859 = vpow.pop %v858
    %v860 = vmul.f32 %v857, 1.442695
    %v861 = vpow.pop %v860
    %v862 = vadd.f32 %v859, 1.0
    %v863 = vadd.f32 %v861, 1.0
    %v864 = vrcp.pop %v862
    %v865 = vmul.f32 1.0, %v864
    %v866 = vrcp.pop %v863
    %v867 = vmul.f32 1.0, %v866
    %v868 = vtanh.pop %v855
    %v870 = vrot.slane %v762, 6
    %v872 = vmul.f32 %v865, %v870
    %874 = vrot.lane.b32.xlu0 %v868, 64
    %v875 = vpop.permute.xlu0 %874
    %v877 = vmul.f32 %v865, %v875
    %879 = vrot.lane.b32.xlu0 %v877, 64
    %v880 = vpop.permute.xlu0 %879
    %v882 = vadd.f32 %v872, %v880
    %v883 = vtanh.pop %v882
    %885 = vrot.lane.b32.xlu0 %v883, 64
    %v886 = vpop.permute.xlu0 %885
    %v888 = vmul.f32 %v867, %v886
    %vm889 = vcmask 261126
    %890 = vst.msk [vmem:[#allocation2] sm:$0xc0] %vm889, %v888
    %vm891 = vcmask 523526
    %892 = vst.msk [vmem:[#allocation2 + $0x2] sm:$0xc0] %vm891, %v888
    %v894 = vrot.slane %v888, 6
    %v895 = vsel %vm423, %v894, 0
    %897 = vmatprep.subr.mxu0 0.0
    %898 = vmatpush1.msra.mxu0 0.0
    %899 = vmatprep.subr.mxu0 0.0
    %900 = vmatpush1.msra.mxu0 0.0
    %901 = vmatprep.subr.mxu0 0.0
    %902 = vmatpush1.msra.mxu0 0.0
    %903 = vmatprep.subr.mxu0 0.0
    %904 = vmatpush1.msra.mxu0 0.0
    %905 = vmatprep.subr.mxu0 0.0
    %906 = vmatpush1.msra.mxu0 0.0
    %907 = vmatprep.subr.mxu0 0.0
    %908 = vmatpush1.msra.mxu0 0.0
    %909 = vmatprep.subr.mxu0 0.0
    %910 = vmatpush1.msra.mxu0 0.0
    %911 = vmatprep.subr.mxu0 0.0
    %912 = vmatpush1.msra.mxu0 0.0
    %913 = vmatprep.subr.mxu0 %v52
    %914 = vmatpush1.msra.mxu0 %v51
    %915 = vmatprep.subr.mxu0 %v50
    %916 = vmatpush1.msra.mxu0 %v49
    %917 = vmatprep.subr.mxu0 %v48
    %918 = vmatpush1.msra.mxu0 %v47
    %919 = vmatprep.subr.mxu0 %v46
    %920 = vmatpush1.msra.mxu0 %v45
    %921 = vmatprep.subr.mxu0 %v44
    %922 = vmatpush1.msra.mxu0 %v43
    %923 = vmatprep.subr.mxu0 %v42
    %924 = vmatpush1.msra.mxu0 %v41
    %925 = vmatprep.subr.mxu0 %v40
    %926 = vmatpush1.msra.mxu0 %v39
    %927 = vmatprep.subr.mxu0 %v38
    %928 = vmatpush1.msra.mxu0 %v37
    %929 = vmatprep.subr.mxu0 0.0
    %930 = vmatpush2.msra.mxu0 0.0
    %931 = vmatprep.subr.mxu0 0.0
    %932 = vmatpush2.msra.mxu0 0.0
    %933 = vmatprep.subr.mxu0 0.0
    %934 = vmatpush2.msra.mxu0 0.0
    %935 = vmatprep.subr.mxu0 0.0
    %936 = vmatpush2.msra.mxu0 0.0
    %937 = vmatprep.subr.mxu0 0.0
    %938 = vmatpush2.msra.mxu0 0.0
    %939 = vmatprep.subr.mxu0 0.0
    %940 = vmatpush2.msra.mxu0 0.0
    %941 = vmatprep.subr.mxu0 0.0
    %942 = vmatpush2.msra.mxu0 0.0
    %943 = vmatprep.subr.mxu0 0.0
    %944 = vmatpush2.msra.mxu0 0.0
    %945 = vmatprep.subr.mxu0 0.0
    %946 = vmatpush2.msra.mxu0 0.0
    %947 = vmatprep.subr.mxu0 0.0
    %948 = vmatpush2.msra.mxu0 0.0
    %949 = vmatprep.subr.mxu0 0.0
    %950 = vmatpush2.msra.mxu0 0.0
    %951 = vmatprep.subr.mxu0 0.0
    %952 = vmatpush2.msra.mxu0 0.0
    %953 = vmatprep.subr.mxu0 0.0
    %954 = vmatpush2.msra.mxu0 0.0
    %955 = vmatprep.subr.mxu0 0.0
    %956 = vmatpush2.msra.mxu0 0.0
    %957 = vmatprep.subr.mxu0 0.0
    %958 = vmatpush2.msra.mxu0 0.0
    %959 = vmatprep.subr.mxu0 0.0
    %960 = vmatpush2.msra.mxu0 0.0
    %961 = vmatprep.mubr.f32.mxu0 0.0
    %962 = vmatmul.mubr.f32.gmra.mxu0 %v895
    %v963 = vpop.f32.mrf.mxu0
    %v964 = vadd.f32 0.0, %v963
    %v965 = vpop.f32.mrf.mxu0
    %v966 = vadd.f32 0.0, %v965
    %967 = vdwg.mxu0
    %v968 = vadd.f32 %v421, %v964
    %v969 = vadd.f32 %v422, %v966
    %v970 = vxor.u32 %v968, 2147483648
    %v971 = vxor.u32 %v969, 2147483648
    %v972 = vmul.f32 %v970, 1.442695
    %v973 = vpow.pop %v972
    %v974 = vmul.f32 %v971, 1.442695
    %v975 = vpow.pop %v974
    %v976 = vadd.f32 %v973, 1.0
    %v977 = vadd.f32 %v975, 1.0
    %v978 = vrcp.pop %v976
    %v979 = vmul.f32 1.0, %v978
    %v980 = vrcp.pop %v977
    %v981 = vmul.f32 1.0, %v980
    %v982 = vtanh.pop %v969
    %v984 = vrot.slane %v882, 6
    %v986 = vmul.f32 %v979, %v984
    %988 = vrot.lane.b32.xlu0 %v982, 64
    %v989 = vpop.permute.xlu0 %988
    %v991 = vmul.f32 %v979, %v989
    %993 = vrot.lane.b32.xlu0 %v991, 64
    %v994 = vpop.permute.xlu0 %993
    %v996 = vadd.f32 %v986, %v994
    %v997 = vtanh.pop %v996
    %999 = vrot.lane.b32.xlu0 %v997, 64
    %v1000 = vpop.permute.xlu0 %999
    %v1002 = vmul.f32 %v981, %v1000
    %1003 = vst.msk [vmem:[#allocation2 + $0x8] sm:$0x3] %vm530, %v1002
    %1004 = vst.msk [vmem:[#allocation2 + $0x6] sm:$0x3] %vm532, %v1002
    %v1006 = vsel %vm423, %v1002, 0
    %1008 = vmatprep.subr.mxu0 0.0
    %1009 = vmatpush1.msra.mxu0 0.0
    %1010 = vmatprep.subr.mxu0 0.0
    %1011 = vmatpush1.msra.mxu0 0.0
    %1012 = vmatprep.subr.mxu0 0.0
    %1013 = vmatpush1.msra.mxu0 0.0
    %1014 = vmatprep.subr.mxu0 0.0
    %1015 = vmatpush1.msra.mxu0 0.0
    %1016 = vmatprep.subr.mxu0 0.0
    %1017 = vmatpush1.msra.mxu0 0.0
    %1018 = vmatprep.subr.mxu0 0.0
    %1019 = vmatpush1.msra.mxu0 0.0
    %1020 = vmatprep.subr.mxu0 0.0
    %1021 = vmatpush1.msra.mxu0 0.0
    %1022 = vmatprep.subr.mxu0 0.0
    %1023 = vmatpush1.msra.mxu0 0.0
    %1024 = vmatprep.subr.mxu0 %v52
    %1025 = vmatpush1.msra.mxu0 %v51
    %1026 = vmatprep.subr.mxu0 %v50
    %1027 = vmatpush1.msra.mxu0 %v49
    %1028 = vmatprep.subr.mxu0 %v48
    %1029 = vmatpush1.msra.mxu0 %v47
    %1030 = vmatprep.subr.mxu0 %v46
    %1031 = vmatpush1.msra.mxu0 %v45
    %1032 = vmatprep.subr.mxu0 %v44
    %1033 = vmatpush1.msra.mxu0 %v43
    %1034 = vmatprep.subr.mxu0 %v42
    %1035 = vmatpush1.msra.mxu0 %v41
    %1036 = vmatprep.subr.mxu0 %v40
    %1037 = vmatpush1.msra.mxu0 %v39
    %1038 = vmatprep.subr.mxu0 %v38
    %1039 = vmatpush1.msra.mxu0 %v37
    %1040 = vmatprep.subr.mxu0 0.0
    %1041 = vmatpush2.msra.mxu0 0.0
    %1042 = vmatprep.subr.mxu0 0.0
    %1043 = vmatpush2.msra.mxu0 0.0
    %1044 = vmatprep.subr.mxu0 0.0
    %1045 = vmatpush2.msra.mxu0 0.0
    %1046 = vmatprep.subr.mxu0 0.0
    %1047 = vmatpush2.msra.mxu0 0.0
    %1048 = vmatprep.subr.mxu0 0.0
    %1049 = vmatpush2.msra.mxu0 0.0
    %1050 = vmatprep.subr.mxu0 0.0
    %1051 = vmatpush2.msra.mxu0 0.0
    %1052 = vmatprep.subr.mxu0 0.0
    %1053 = vmatpush2.msra.mxu0 0.0
    %1054 = vmatprep.subr.mxu0 0.0
    %1055 = vmatpush2.msra.mxu0 0.0
    %1056 = vmatprep.subr.mxu0 0.0
    %1057 = vmatpush2.msra.mxu0 0.0
    %1058 = vmatprep.subr.mxu0 0.0
    %1059 = vmatpush2.msra.mxu0 0.0
    %1060 = vmatprep.subr.mxu0 0.0
    %1061 = vmatpush2.msra.mxu0 0.0
    %1062 = vmatprep.subr.mxu0 0.0
    %1063 = vmatpush2.msra.mxu0 0.0
    %1064 = vmatprep.subr.mxu0 0.0
    %1065 = vmatpush2.msra.mxu0 0.0
    %1066 = vmatprep.subr.mxu0 0.0
    %1067 = vmatpush2.msra.mxu0 0.0
    %1068 = vmatprep.subr.mxu0 0.0
    %1069 = vmatpush2.msra.mxu0 0.0
    %1070 = vmatprep.subr.mxu0 0.0
    %1071 = vmatpush2.msra.mxu0 0.0
    %1072 = vmatprep.mubr.f32.mxu0 0.0
    %1073 = vmatmul.mubr.f32.gmra.mxu0 %v1006
    %v1074 = vpop.f32.mrf.mxu0
    %v1075 = vadd.f32 0.0, %v1074
    %v1076 = vpop.f32.mrf.mxu0
    %v1077 = vadd.f32 0.0, %v1076
    %1078 = vdwg.mxu0
    %v1081 = vrot.slane %v1075, 6
    %v1082 = vrot.slane %v1077, 6
    %v1085 = vadd.f32 %v421, %v1081
    %v1086 = vadd.f32 %v422, %v1082
    %v1087 = vxor.u32 %v1085, 2147483648
    %v1088 = vxor.u32 %v1086, 2147483648
    %v1089 = vmul.f32 %v1087, 1.442695
    %v1090 = vpow.pop %v1089
    %v1091 = vmul.f32 %v1088, 1.442695
    %v1092 = vpow.pop %v1091
    %v1093 = vadd.f32 %v1090, 1.0
    %v1094 = vadd.f32 %v1092, 1.0
    %v1095 = vrcp.pop %v1093
    %v1096 = vmul.f32 1.0, %v1095
    %v1097 = vrcp.pop %v1094
    %v1098 = vmul.f32 1.0, %v1097
    %v1099 = vtanh.pop %v1086
    %v1101 = vrot.slane %v996, 6
    %v1103 = vmul.f32 %v1096, %v1101
    %1105 = vrot.lane.b32.xlu0 %v1099, 64
    %v1106 = vpop.permute.xlu0 %1105
    %v1108 = vmul.f32 %v1096, %v1106
    %1110 = vrot.lane.b32.xlu0 %v1108, 64
    %v1111 = vpop.permute.xlu0 %1110
    %v1113 = vadd.f32 %v1103, %v1111
    %v1114 = vtanh.pop %v1113
    %1116 = vrot.lane.b32.xlu0 %v1114, 64
    %v1117 = vpop.permute.xlu0 %1116
    %v1119 = vmul.f32 %v1098, %v1117
    %1120 = vst.msk [vmem:[#allocation2 + $0x8] sm:$0xc] %vm649, %v1119
    %1121 = vst.msk [vmem:[#allocation2 + $0x2] sm:$0xc] %vm651, %v1119
    %v1123 = vrot.slane %v1119, 2
    %v1124 = vsel %vm423, %v1123, 0
    %1126 = vmatprep.subr.mxu0 0.0
    %1127 = vmatpush1.msra.mxu0 0.0
    %1128 = vmatprep.subr.mxu0 0.0
    %1129 = vmatpush1.msra.mxu0 0.0
    %1130 = vmatprep.subr.mxu0 0.0
    %1131 = vmatpush1.msra.mxu0 0.0
    %1132 = vmatprep.subr.mxu0 0.0
    %1133 = vmatpush1.msra.mxu0 0.0
    %1134 = vmatprep.subr.mxu0 0.0
    %1135 = vmatpush1.msra.mxu0 0.0
    %1136 = vmatprep.subr.mxu0 0.0
    %1137 = vmatpush1.msra.mxu0 0.0
    %1138 = vmatprep.subr.mxu0 0.0
    %1139 = vmatpush1.msra.mxu0 0.0
    %1140 = vmatprep.subr.mxu0 0.0
    %1141 = vmatpush1.msra.mxu0 0.0
    %1142 = vmatprep.subr.mxu0 %v52
    %1143 = vmatpush1.msra.mxu0 %v51
    %1144 = vmatprep.subr.mxu0 %v50
    %1145 = vmatpush1.msra.mxu0 %v49
    %1146 = vmatprep.subr.mxu0 %v48
    %1147 = vmatpush1.msra.mxu0 %v47
    %1148 = vmatprep.subr.mxu0 %v46
    %1149 = vmatpush1.msra.mxu0 %v45
    %1150 = vmatprep.subr.mxu0 %v44
    %1151 = vmatpush1.msra.mxu0 %v43
    %1152 = vmatprep.subr.mxu0 %v42
    %1153 = vmatpush1.msra.mxu0 %v41
    %1154 = vmatprep.subr.mxu0 %v40
    %1155 = vmatpush1.msra.mxu0 %v39
    %1156 = vmatprep.subr.mxu0 %v38
    %1157 = vmatpush1.msra.mxu0 %v37
    %1158 = vmatprep.subr.mxu0 0.0
    %1159 = vmatpush2.msra.mxu0 0.0
    %1160 = vmatprep.subr.mxu0 0.0
    %1161 = vmatpush2.msra.mxu0 0.0
    %1162 = vmatprep.subr.mxu0 0.0
    %1163 = vmatpush2.msra.mxu0 0.0
    %1164 = vmatprep.subr.mxu0 0.0
    %1165 = vmatpush2.msra.mxu0 0.0
    %1166 = vmatprep.subr.mxu0 0.0
    %1167 = vmatpush2.msra.mxu0 0.0
    %1168 = vmatprep.subr.mxu0 0.0
    %1169 = vmatpush2.msra.mxu0 0.0
    %1170 = vmatprep.subr.mxu0 0.0
    %1171 = vmatpush2.msra.mxu0 0.0
    %1172 = vmatprep.subr.mxu0 0.0
    %1173 = vmatpush2.msra.mxu0 0.0
    %1174 = vmatprep.subr.mxu0 0.0
    %1175 = vmatpush2.msra.mxu0 0.0
    %1176 = vmatprep.subr.mxu0 0.0
    %1177 = vmatpush2.msra.mxu0 0.0
    %1178 = vmatprep.subr.mxu0 0.0
    %1179 = vmatpush2.msra.mxu0 0.0
    %1180 = vmatprep.subr.mxu0 0.0
    %1181 = vmatpush2.msra.mxu0 0.0
    %1182 = vmatprep.subr.mxu0 0.0
    %1183 = vmatpush2.msra.mxu0 0.0
    %1184 = vmatprep.subr.mxu0 0.0
    %1185 = vmatpush2.msra.mxu0 0.0
    %1186 = vmatprep.subr.mxu0 0.0
    %1187 = vmatpush2.msra.mxu0 0.0
    %1188 = vmatprep.subr.mxu0 0.0
    %1189 = vmatpush2.msra.mxu0 0.0
    %1190 = vmatprep.mubr.f32.mxu0 0.0
    %1191 = vmatmul.mubr.f32.gmra.mxu0 %v1124
    %v1192 = vpop.f32.mrf.mxu0
    %v1193 = vadd.f32 0.0, %v1192
    %v1194 = vpop.f32.mrf.mxu0
    %v1195 = vadd.f32 0.0, %v1194
    %1196 = vdwg.mxu0
    %v1199 = vrot.slane %v1193, 4
    %v1200 = vrot.slane %v1195, 4
    %v1203 = vadd.f32 %v421, %v1199
    %v1204 = vadd.f32 %v422, %v1200
    %v1205 = vxor.u32 %v1203, 2147483648
    %v1206 = vxor.u32 %v1204, 2147483648
    %v1207 = vmul.f32 %v1205, 1.442695
    %v1208 = vpow.pop %v1207
    %v1209 = vmul.f32 %v1206, 1.442695
    %v1210 = vpow.pop %v1209
    %v1211 = vadd.f32 %v1208, 1.0
    %v1212 = vadd.f32 %v1210, 1.0
    %v1213 = vrcp.pop %v1211
    %v1214 = vmul.f32 1.0, %v1213
    %v1215 = vrcp.pop %v1212
    %v1216 = vmul.f32 1.0, %v1215
    %v1217 = vtanh.pop %v1204
    %v1219 = vrot.slane %v1113, 6
    %v1221 = vmul.f32 %v1214, %v1219
    %1223 = vrot.lane.b32.xlu0 %v1217, 64
    %v1224 = vpop.permute.xlu0 %1223
    %v1226 = vmul.f32 %v1214, %v1224
    %1228 = vrot.lane.b32.xlu0 %v1226, 64
    %v1229 = vpop.permute.xlu0 %1228
    %v1231 = vadd.f32 %v1221, %v1229
    %v1232 = vtanh.pop %v1231
    %1234 = vrot.lane.b32.xlu0 %v1232, 64
    %v1235 = vpop.permute.xlu0 %1234
    %v1237 = vmul.f32 %v1216, %v1235
    %1238 = vst.msk [vmem:[#allocation2 + $0x8] sm:$0x30] %vm769, %v1237
    %1239 = vst.msk [vmem:[#allocation2 - $0x2] sm:$0x30] %vm771, %v1237
    %v1241 = vrot.slane %v1237, 4
    %v1242 = vsel %vm423, %v1241, 0
    %1244 = vmatprep.subr.mxu0 0.0
    %1245 = vmatpush1.msra.mxu0 0.0
    %1246 = vmatprep.subr.mxu0 0.0
    %1247 = vmatpush1.msra.mxu0 0.0
    %1248 = vmatprep.subr.mxu0 0.0
    %1249 = vmatpush1.msra.mxu0 0.0
    %1250 = vmatprep.subr.mxu0 0.0
    %1251 = vmatpush1.msra.mxu0 0.0
    %1252 = vmatprep.subr.mxu0 0.0
    %1253 = vmatpush1.msra.mxu0 0.0
    %1254 = vmatprep.subr.mxu0 0.0
    %1255 = vmatpush1.msra.mxu0 0.0
    %1256 = vmatprep.subr.mxu0 0.0
    %1257 = vmatpush1.msra.mxu0 0.0
    %1258 = vmatprep.subr.mxu0 0.0
    %1259 = vmatpush1.msra.mxu0 0.0
    %1260 = vmatprep.subr.mxu0 %v52
    %1261 = vmatpush1.msra.mxu0 %v51
    %1262 = vmatprep.subr.mxu0 %v50
    %1263 = vmatpush1.msra.mxu0 %v49
    %1264 = vmatprep.subr.mxu0 %v48
    %1265 = vmatpush1.msra.mxu0 %v47
    %1266 = vmatprep.subr.mxu0 %v46
    %1267 = vmatpush1.msra.mxu0 %v45
    %1268 = vmatprep.subr.mxu0 %v44
    %1269 = vmatpush1.msra.mxu0 %v43
    %1270 = vmatprep.subr.mxu0 %v42
    %1271 = vmatpush1.msra.mxu0 %v41
    %1272 = vmatprep.subr.mxu0 %v40
    %1273 = vmatpush1.msra.mxu0 %v39
    %1274 = vmatprep.subr.mxu0 %v38
    %1275 = vmatpush1.msra.mxu0 %v37
    %1276 = vmatprep.subr.mxu0 0.0
    %1277 = vmatpush2.msra.mxu0 0.0
    %1278 = vmatprep.subr.mxu0 0.0
    %1279 = vmatpush2.msra.mxu0 0.0
    %1280 = vmatprep.subr.mxu0 0.0
    %1281 = vmatpush2.msra.mxu0 0.0
    %1282 = vmatprep.subr.mxu0 0.0
    %1283 = vmatpush2.msra.mxu0 0.0
    %1284 = vmatprep.subr.mxu0 0.0
    %1285 = vmatpush2.msra.mxu0 0.0
    %1286 = vmatprep.subr.mxu0 0.0
    %1287 = vmatpush2.msra.mxu0 0.0
    %1288 = vmatprep.subr.mxu0 0.0
    %1289 = vmatpush2.msra.mxu0 0.0
    %1290 = vmatprep.subr.mxu0 0.0
    %1291 = vmatpush2.msra.mxu0 0.0
    %1292 = vmatprep.subr.mxu0 0.0
    %1293 = vmatpush2.msra.mxu0 0.0
    %1294 = vmatprep.subr.mxu0 0.0
    %1295 = vmatpush2.msra.mxu0 0.0
    %1296 = vmatprep.subr.mxu0 0.0
    %1297 = vmatpush2.msra.mxu0 0.0
    %1298 = vmatprep.subr.mxu0 0.0
    %1299 = vmatpush2.msra.mxu0 0.0
    %1300 = vmatprep.subr.mxu0 0.0
    %1301 = vmatpush2.msra.mxu0 0.0
    %1302 = vmatprep.subr.mxu0 0.0
    %1303 = vmatpush2.msra.mxu0 0.0
    %1304 = vmatprep.subr.mxu0 0.0
    %1305 = vmatpush2.msra.mxu0 0.0
    %1306 = vmatprep.subr.mxu0 0.0
    %1307 = vmatpush2.msra.mxu0 0.0
    %1308 = vmatprep.mubr.f32.mxu0 0.0
    %1309 = vmatmul.mubr.f32.gmra.mxu0 %v1242
    %v1310 = vpop.f32.mrf.mxu0
    %v1311 = vadd.f32 0.0, %v1310
    %v1312 = vpop.f32.mrf.mxu0
    %v1313 = vadd.f32 0.0, %v1312
    %1314 = vdwg.mxu0
    %v1317 = vrot.slane %v1311, 2
    %v1318 = vrot.slane %v1313, 2
    %v1321 = vadd.f32 %v421, %v1317
    %v1322 = vadd.f32 %v422, %v1318
    %v1323 = vxor.u32 %v1321, 2147483648
    %v1324 = vxor.u32 %v1322, 2147483648
    %v1325 = vmul.f32 %v1323, 1.442695
    %v1326 = vpow.pop %v1325
    %v1327 = vmul.f32 %v1324, 1.442695
    %v1328 = vpow.pop %v1327
    %v1329 = vadd.f32 %v1326, 1.0
    %v1330 = vadd.f32 %v1328, 1.0
    %v1331 = vrcp.pop %v1329
    %v1332 = vmul.f32 1.0, %v1331
    %v1333 = vrcp.pop %v1330
    %v1334 = vmul.f32 1.0, %v1333
    %v1335 = vtanh.pop %v1322
    %v1337 = vrot.slane %v1231, 6
    %v1339 = vmul.f32 %v1332, %v1337
    %1341 = vrot.lane.b32.xlu0 %v1335, 64
    %v1342 = vpop.permute.xlu0 %1341
    %v1344 = vmul.f32 %v1332, %v1342
    %1346 = vrot.lane.b32.xlu0 %v1344, 64
    %v1347 = vpop.permute.xlu0 %1346
    %v1349 = vadd.f32 %v1339, %v1347
    %v1350 = vtanh.pop %v1349
    %1352 = vrot.lane.b32.xlu0 %v1350, 64
    %v1353 = vpop.permute.xlu0 %1352
    %v1355 = vmul.f32 %v1334, %v1353
    %1356 = vst.msk [vmem:[#allocation2 + $0x8] sm:$0xc0] %vm889, %v1355
    %1357 = vst.msk [vmem:[#allocation2 - $0x6] sm:$0xc0] %vm891, %v1355
    %v1358 = vld [vmem:[#allocation2] sm:$0xff]
    %v1359 = vld [vmem:[#allocation2 + $0x8] sm:$0xff]
    %1360 = vmatprep.subr.mxu0 0.0
    %1361 = vmatpush1.msra.mxu0 0.0
    %1362 = vmatprep.subr.mxu0 0.0
    %1363 = vmatpush1.msra.mxu0 0.0
    %1364 = vmatprep.subr.mxu0 0.0
    %1365 = vmatpush1.msra.mxu0 0.0
    %1366 = vmatprep.subr.mxu0 0.0
    %1367 = vmatpush1.msra.mxu0 0.0
    %1368 = vmatprep.subr.mxu0 0.0
    %1369 = vmatpush1.msra.mxu0 0.0
    %1370 = vmatprep.subr.mxu0 0.0
    %1371 = vmatpush1.msra.mxu0 0.0
    %1372 = vmatprep.subr.mxu0 0.0
    %1373 = vmatpush1.msra.mxu0 0.0
    %1374 = vmatprep.subr.mxu0 0.0
    %1375 = vmatpush1.msra.mxu0 0.0
    %1376 = vmatprep.subr.mxu0 0.0
    %1377 = vmatpush1.msra.mxu0 0.0
    %1378 = vmatprep.subr.mxu0 0.0
    %1379 = vmatpush1.msra.mxu0 0.0
    %1380 = vmatprep.subr.mxu0 0.0
    %1381 = vmatpush1.msra.mxu0 0.0
    %1382 = vmatprep.subr.mxu0 0.0
    %1383 = vmatpush1.msra.mxu0 0.0
    %1384 = vmatprep.subr.mxu0 0.0
    %1385 = vmatpush1.msra.mxu0 0.0
    %1386 = vmatprep.subr.mxu0 0.0
    %1387 = vmatpush1.msra.mxu0 0.0
    %1388 = vmatprep.subr.mxu0 0.0
    %1389 = vmatpush1.msra.mxu0 %v1359
    %1390 = vmatprep.subr.mxu0 0.0
    %1391 = vmatpush1.msra.mxu0 %v1358
    %1392 = vmatprep.subr.mxu0 0.0
    %1393 = vmatpush2.msra.mxu0 0.0
    %1394 = vmatprep.subr.mxu0 0.0
    %1395 = vmatpush2.msra.mxu0 0.0
    %1396 = vmatprep.subr.mxu0 0.0
    %1397 = vmatpush2.msra.mxu0 0.0
    %1398 = vmatprep.subr.mxu0 0.0
    %1399 = vmatpush2.msra.mxu0 0.0
    %1400 = vmatprep.subr.mxu0 0.0
    %1401 = vmatpush2.msra.mxu0 0.0
    %1402 = vmatprep.subr.mxu0 0.0
    %1403 = vmatpush2.msra.mxu0 0.0
    %1404 = vmatprep.subr.mxu0 0.0
    %1405 = vmatpush2.msra.mxu0 0.0
    %1406 = vmatprep.subr.mxu0 0.0
    %1407 = vmatpush2.msra.mxu0 0.0
    %1408 = vmatprep.subr.mxu0 0.0
    %1409 = vmatpush2.msra.mxu0 0.0
    %1410 = vmatprep.subr.mxu0 0.0
    %1411 = vmatpush2.msra.mxu0 0.0
    %1412 = vmatprep.subr.mxu0 0.0
    %1413 = vmatpush2.msra.mxu0 0.0
    %1414 = vmatprep.subr.mxu0 0.0
    %1415 = vmatpush2.msra.mxu0 0.0
    %1416 = vmatprep.subr.mxu0 0.0
    %1417 = vmatpush2.msra.mxu0 0.0
    %1418 = vmatprep.subr.mxu0 0.0
    %1419 = vmatpush2.msra.mxu0 0.0
    %1420 = vmatprep.subr.mxu0 0.0
    %1421 = vmatpush2.msra.mxu0 0.0
    %1422 = vmatprep.subr.mxu0 0.0
    %1423 = vmatpush2.msra.mxu0 0.0
    %1424 = vmatprep.mubr.f32.mxu0 0.0
    %1425 = vmatmul.mubr.f32.gmra.mxu0 %v162
    %v1426 = vpop.f32.mrf.mxu0
    %v1427 = vadd.f32 0.0, %v1426
    %v1428 = vpop.f32.mrf.mxu0
    %1429 = vmatprep.mubr.f32.mxu0 0.0
    %1430 = vmatmul.mubr.f32.gmra.mxu0 %v165
    %v1431 = vpop.f32.mrf.mxu0
    %v1432 = vadd.f32 0.0, %v1431
    %v1433 = vpop.f32.mrf.mxu0
    %1434 = vdwg.mxu0
    %v1436 = vsel %vm423, %v1427, 0
    %v1439 = vsel %vm423, %v1432, 0
    %1441 = vmatprep.subr.mxu0 0.0
    %1442 = vmatpush1.msra.mxu0 0.0
    %1443 = vmatprep.subr.mxu0 0.0
    %1444 = vmatpush1.msra.mxu0 0.0
    %1445 = vmatprep.subr.mxu0 0.0
    %1446 = vmatpush1.msra.mxu0 0.0
    %1447 = vmatprep.subr.mxu0 0.0
    %1448 = vmatpush1.msra.mxu0 0.0
    %1449 = vmatprep.subr.mxu0 0.0
    %1450 = vmatpush1.msra.mxu0 0.0
    %1451 = vmatprep.subr.mxu0 0.0
    %1452 = vmatpush1.msra.mxu0 0.0
    %1453 = vmatprep.subr.mxu0 0.0
    %1454 = vmatpush1.msra.mxu0 0.0
    %1455 = vmatprep.subr.mxu0 0.0
    %1456 = vmatpush1.msra.mxu0 0.0
    %1457 = vmatprep.subr.mxu0 %v84
    %1458 = vmatpush1.msra.mxu0 %v83
    %1459 = vmatprep.subr.mxu0 %v82
    %1460 = vmatpush1.msra.mxu0 %v81
    %1461 = vmatprep.subr.mxu0 %v80
    %1462 = vmatpush1.msra.mxu0 %v79
    %1463 = vmatprep.subr.mxu0 %v78
    %1464 = vmatpush1.msra.mxu0 %v77
    %1465 = vmatprep.subr.mxu0 %v76
    %1466 = vmatpush1.msra.mxu0 %v75
    %1467 = vmatprep.subr.mxu0 %v74
    %1468 = vmatpush1.msra.mxu0 %v73
    %1469 = vmatprep.subr.mxu0 %v72
    %1470 = vmatpush1.msra.mxu0 %v71
    %1471 = vmatprep.subr.mxu0 %v70
    %1472 = vmatpush1.msra.mxu0 %v69
    %1473 = vmatprep.subr.mxu0 0.0
    %1474 = vmatpush2.msra.mxu0 0.0
    %1475 = vmatprep.subr.mxu0 0.0
    %1476 = vmatpush2.msra.mxu0 0.0
    %1477 = vmatprep.subr.mxu0 0.0
    %1478 = vmatpush2.msra.mxu0 0.0
    %1479 = vmatprep.subr.mxu0 0.0
    %1480 = vmatpush2.msra.mxu0 0.0
    %1481 = vmatprep.subr.mxu0 0.0
    %1482 = vmatpush2.msra.mxu0 0.0
    %1483 = vmatprep.subr.mxu0 0.0
    %1484 = vmatpush2.msra.mxu0 0.0
    %1485 = vmatprep.subr.mxu0 0.0
    %1486 = vmatpush2.msra.mxu0 0.0
    %1487 = vmatprep.subr.mxu0 0.0
    %1488 = vmatpush2.msra.mxu0 0.0
    %1489 = vmatprep.subr.mxu0 0.0
    %1490 = vmatpush2.msra.mxu0 0.0
    %1491 = vmatprep.subr.mxu0 0.0
    %1492 = vmatpush2.msra.mxu0 0.0
    %1493 = vmatprep.subr.mxu0 0.0
    %1494 = vmatpush2.msra.mxu0 0.0
    %1495 = vmatprep.subr.mxu0 0.0
    %1496 = vmatpush2.msra.mxu0 0.0
    %1497 = vmatprep.subr.mxu0 0.0
    %1498 = vmatpush2.msra.mxu0 0.0
    %1499 = vmatprep.subr.mxu0 0.0
    %1500 = vmatpush2.msra.mxu0 0.0
    %1501 = vmatprep.subr.mxu0 0.0
    %1502 = vmatpush2.msra.mxu0 0.0
    %1503 = vmatprep.subr.mxu0 0.0
    %1504 = vmatpush2.msra.mxu0 0.0
    %1505 = vmatprep.mubr.f32.mxu0 0.0
    %1506 = vmatmul.mubr.f32.gmra.mxu0 %v1436
    %v1507 = vpop.f32.mrf.mxu0
    %v1508 = vadd.f32 0.0, %v1507
    %v1509 = vpop.f32.mrf.mxu0
    %v1510 = vadd.f32 0.0, %v1509
    %1511 = vmatprep.mubr.f32.mxu0 0.0
    %1512 = vmatmul.mubr.f32.gmra.mxu0 %v1439
    %v1513 = vpop.f32.mrf.mxu0
    %v1514 = vadd.f32 0.0, %v1513
    %v1515 = vpop.f32.mrf.mxu0
    %v1516 = vadd.f32 0.0, %v1515
    %1517 = vdwg.mxu0
    %v1519 = vsel %vm423, %v1358, 0
    %v1522 = vsel %vm423, %v1359, 0
    %1524 = vmatprep.subr.mxu0 0.0
    %1525 = vmatpush1.msra.mxu0 0.0
    %1526 = vmatprep.subr.mxu0 0.0
    %1527 = vmatpush1.msra.mxu0 0.0
    %1528 = vmatprep.subr.mxu0 0.0
    %1529 = vmatpush1.msra.mxu0 0.0
    %1530 = vmatprep.subr.mxu0 0.0
    %1531 = vmatpush1.msra.mxu0 0.0
    %1532 = vmatprep.subr.mxu0 0.0
    %1533 = vmatpush1.msra.mxu0 0.0
    %1534 = vmatprep.subr.mxu0 0.0
    %1535 = vmatpush1.msra.mxu0 0.0
    %1536 = vmatprep.subr.mxu0 0.0
    %1537 = vmatpush1.msra.mxu0 0.0
    %1538 = vmatprep.subr.mxu0 0.0
    %1539 = vmatpush1.msra.mxu0 0.0
    %1540 = vmatprep.subr.mxu0 %v68
    %1541 = vmatpush1.msra.mxu0 %v67
    %1542 = vmatprep.subr.mxu0 %v66
    %1543 = vmatpush1.msra.mxu0 %v65
    %1544 = vmatprep.subr.mxu0 %v64
    %1545 = vmatpush1.msra.mxu0 %v63
    %1546 = vmatprep.subr.mxu0 %v62
    %1547 = vmatpush1.msra.mxu0 %v61
    %1548 = vmatprep.subr.mxu0 %v60
    %1549 = vmatpush1.msra.mxu0 %v59
    %1550 = vmatprep.subr.mxu0 %v58
    %1551 = vmatpush1.msra.mxu0 %v57
    %1552 = vmatprep.subr.mxu0 %v56
    %1553 = vmatpush1.msra.mxu0 %v55
    %1554 = vmatprep.subr.mxu0 %v54
    %1555 = vmatpush1.msra.mxu0 %v53
    %1556 = vmatprep.subr.mxu0 0.0
    %1557 = vmatpush2.msra.mxu0 0.0
    %1558 = vmatprep.subr.mxu0 0.0
    %1559 = vmatpush2.msra.mxu0 0.0
    %1560 = vmatprep.subr.mxu0 0.0
    %1561 = vmatpush2.msra.mxu0 0.0
    %1562 = vmatprep.subr.mxu0 0.0
    %1563 = vmatpush2.msra.mxu0 0.0
    %1564 = vmatprep.subr.mxu0 0.0
    %1565 = vmatpush2.msra.mxu0 0.0
    %1566 = vmatprep.subr.mxu0 0.0
    %1567 = vmatpush2.msra.mxu0 0.0
    %1568 = vmatprep.subr.mxu0 0.0
    %1569 = vmatpush2.msra.mxu0 0.0
    %1570 = vmatprep.subr.mxu0 0.0
    %1571 = vmatpush2.msra.mxu0 0.0
    %1572 = vmatprep.subr.mxu0 0.0
    %1573 = vmatpush2.msra.mxu0 0.0
    %1574 = vmatprep.subr.mxu0 0.0
    %1575 = vmatpush2.msra.mxu0 0.0
    %1576 = vmatprep.subr.mxu0 0.0
    %1577 = vmatpush2.msra.mxu0 0.0
    %1578 = vmatprep.subr.mxu0 0.0
    %1579 = vmatpush2.msra.mxu0 0.0
    %1580 = vmatprep.subr.mxu0 0.0
    %1581 = vmatpush2.msra.mxu0 0.0
    %1582 = vmatprep.subr.mxu0 0.0
    %1583 = vmatpush2.msra.mxu0 0.0
    %1584 = vmatprep.subr.mxu0 0.0
    %1585 = vmatpush2.msra.mxu0 0.0
    %1586 = vmatprep.subr.mxu0 0.0
    %1587 = vmatpush2.msra.mxu0 0.0
    %1588 = vmatprep.mubr.f32.mxu0 0.0
    %1589 = vmatmul.mubr.f32.gmra.mxu0 %v1519
    %v1590 = vpop.f32.mrf.mxu0
    %v1591 = vadd.f32 %v1508, %v1590
    %v1592 = vpop.f32.mrf.mxu0
    %v1593 = vadd.f32 %v1510, %v1592
    %1594 = vmatprep.mubr.f32.mxu0 0.0
    %1595 = vmatmul.mubr.f32.gmra.mxu0 %v1522
    %v1596 = vpop.f32.mrf.mxu0
    %v1597 = vadd.f32 %v1514, %v1596
    %v1598 = vpop.f32.mrf.mxu0
    %v1599 = vadd.f32 %v1516, %v1598
    %1600 = vdwg.mxu0
    %v1602 = vlaneseq
    %v1603 = vshrl.u32 %v1602, 7
    %v1604 = vsub.s32 0, %v1603
    %v1605 = vrot.slane %v120, %v1604
    %v1606 = vlaneseq
    %v1607 = vshrl.u32 %v1606, 7
    %v1608 = vsub.s32 1, %v1607
    %v1609 = vrot.slane %v120, %v1608
    %v1612 = vadd.f32 %v1591, %v1605
    %v1613 = vadd.f32 %v1593, %v1609
    %v1614 = vadd.f32 %v1597, %v1605
    %v1615 = vadd.f32 %v1599, %v1609
    %1616 = vmatprep.subr.mxu0 0.0
    %1617 = vmatpush1.msra.mxu0 0.0
    %1618 = vmatprep.subr.mxu0 0.0
    %1619 = vmatpush1.msra.mxu0 0.0
    %1620 = vmatprep.subr.mxu0 0.0
    %1621 = vmatpush1.msra.mxu0 0.0
    %1622 = vmatprep.subr.mxu0 0.0
    %1623 = vmatpush1.msra.mxu0 0.0
    %1624 = vmatprep.subr.mxu0 0.0
    %1625 = vmatpush1.msra.mxu0 0.0
    %1626 = vmatprep.subr.mxu0 0.0
    %1627 = vmatpush1.msra.mxu0 0.0
    %1628 = vmatprep.subr.mxu0 0.0
    %1629 = vmatpush1.msra.mxu0 0.0
    %1630 = vmatprep.subr.mxu0 0.0
    %1631 = vmatpush1.msra.mxu0 0.0
    %1632 = vmatprep.subr.mxu0 %v100
    %1633 = vmatpush1.msra.mxu0 %v99
    %1634 = vmatprep.subr.mxu0 %v98
    %1635 = vmatpush1.msra.mxu0 %v97
    %1636 = vmatprep.subr.mxu0 %v96
    %1637 = vmatpush1.msra.mxu0 %v95
    %1638 = vmatprep.subr.mxu0 %v94
    %1639 = vmatpush1.msra.mxu0 %v93
    %1640 = vmatprep.subr.mxu0 %v92
    %1641 = vmatpush1.msra.mxu0 %v91
    %1642 = vmatprep.subr.mxu0 %v90
    %1643 = vmatpush1.msra.mxu0 %v89
    %1644 = vmatprep.subr.mxu0 %v88
    %1645 = vmatpush1.msra.mxu0 %v87
    %1646 = vmatprep.subr.mxu0 %v86
    %1647 = vmatpush1.msra.mxu0 %v85
    %1648 = vmatprep.subr.mxu0 0.0
    %1649 = vmatpush2.msra.mxu0 0.0
    %1650 = vmatprep.subr.mxu0 0.0
    %1651 = vmatpush2.msra.mxu0 0.0
    %1652 = vmatprep.subr.mxu0 0.0
    %1653 = vmatpush2.msra.mxu0 0.0
    %1654 = vmatprep.subr.mxu0 0.0
    %1655 = vmatpush2.msra.mxu0 0.0
    %1656 = vmatprep.subr.mxu0 0.0
    %1657 = vmatpush2.msra.mxu0 0.0
    %1658 = vmatprep.subr.mxu0 0.0
    %1659 = vmatpush2.msra.mxu0 0.0
    %1660 = vmatprep.subr.mxu0 0.0
    %1661 = vmatpush2.msra.mxu0 0.0
    %1662 = vmatprep.subr.mxu0 0.0
    %1663 = vmatpush2.msra.mxu0 0.0
    %1664 = vmatprep.subr.mxu0 0.0
    %1665 = vmatpush2.msra.mxu0 0.0
    %1666 = vmatprep.subr.mxu0 0.0
    %1667 = vmatpush2.msra.mxu0 0.0
    %1668 = vmatprep.subr.mxu0 0.0
    %1669 = vmatpush2.msra.mxu0 0.0
    %1670 = vmatprep.subr.mxu0 0.0
    %1671 = vmatpush2.msra.mxu0 0.0
    %1672 = vmatprep.subr.mxu0 0.0
    %1673 = vmatpush2.msra.mxu0 0.0
    %1674 = vmatprep.subr.mxu0 0.0
    %1675 = vmatpush2.msra.mxu0 0.0
    %1676 = vmatprep.subr.mxu0 0.0
    %1677 = vmatpush2.msra.mxu0 0.0
    %1678 = vmatprep.subr.mxu0 0.0
    %1679 = vmatpush2.msra.mxu0 0.0
    %1680 = vmatprep.mubr.f32.mxu0 0.0
    %1681 = vmatmul.mubr.f32.gmra.mxu0 %v425
    %v1682 = vpop.f32.mrf.mxu0
    %v1683 = vadd.f32 0.0, %v1682
    %v1684 = vpop.f32.mrf.mxu0
    %v1685 = vadd.f32 0.0, %v1684
    %1686 = vdwg.mxu0
    %v1687 = vadd.f32 %v1612, %v1683
    %v1688 = vadd.f32 %v1613, %v1685
    %v1689 = vxor.u32 %v1687, 2147483648
    %v1690 = vxor.u32 %v1688, 2147483648
    %v1691 = vmul.f32 %v1689, 1.442695
    %v1692 = vpow.pop %v1691
    %v1693 = vmul.f32 %v1690, 1.442695
    %v1694 = vpow.pop %v1693
    %v1695 = vadd.f32 %v1692, 1.0
    %v1696 = vadd.f32 %v1694, 1.0
    %v1697 = vrcp.pop %v1695
    %v1698 = vmul.f32 1.0, %v1697
    %v1699 = vrcp.pop %v1696
    %v1700 = vmul.f32 1.0, %v1699
    %v1701 = vtanh.pop %v1688
    %v1702 = vmul.f32 %v1698, 0.0
    %1704 = vrot.lane.b32.xlu0 %v1701, 64
    %v1705 = vpop.permute.xlu0 %1704
    %v1707 = vmul.f32 %v1698, %v1705
    %1709 = vrot.lane.b32.xlu0 %v1707, 64
    %v1710 = vpop.permute.xlu0 %1709
    %v1712 = vadd.f32 %v1702, %v1710
    %v1713 = vtanh.pop %v1712
    %1715 = vrot.lane.b32.xlu0 %v1713, 64
    %v1716 = vpop.permute.xlu0 %1715
    %v1718 = vmul.f32 %v1700, %v1716
    %1719 = vst.msk [vmem:[#allocation3] sm:$0x3] %vm530, %v1718
    %1720 = vst.msk [vmem:[#allocation3 + $0xe] sm:$0x3] %vm532, %v1718
    %v1722 = vsel %vm423, %v1718, 0
    %1724 = vmatprep.subr.mxu0 0.0
    %1725 = vmatpush1.msra.mxu0 0.0
    %1726 = vmatprep.subr.mxu0 0.0
    %1727 = vmatpush1.msra.mxu0 0.0
    %1728 = vmatprep.subr.mxu0 0.0
    %1729 = vmatpush1.msra.mxu0 0.0
    %1730 = vmatprep.subr.mxu0 0.0
    %1731 = vmatpush1.msra.mxu0 0.0
    %1732 = vmatprep.subr.mxu0 0.0
    %1733 = vmatpush1.msra.mxu0 0.0
    %1734 = vmatprep.subr.mxu0 0.0
    %1735 = vmatpush1.msra.mxu0 0.0
    %1736 = vmatprep.subr.mxu0 0.0
    %1737 = vmatpush1.msra.mxu0 0.0
    %1738 = vmatprep.subr.mxu0 0.0
    %1739 = vmatpush1.msra.mxu0 0.0
    %1740 = vmatprep.subr.mxu0 %v100
    %1741 = vmatpush1.msra.mxu0 %v99
    %1742 = vmatprep.subr.mxu0 %v98
    %1743 = vmatpush1.msra.mxu0 %v97
    %1744 = vmatprep.subr.mxu0 %v96
    %1745 = vmatpush1.msra.mxu0 %v95
    %1746 = vmatprep.subr.mxu0 %v94
    %1747 = vmatpush1.msra.mxu0 %v93
    %1748 = vmatprep.subr.mxu0 %v92
    %1749 = vmatpush1.msra.mxu0 %v91
    %1750 = vmatprep.subr.mxu0 %v90
    %1751 = vmatpush1.msra.mxu0 %v89
    %1752 = vmatprep.subr.mxu0 %v88
    %1753 = vmatpush1.msra.mxu0 %v87
    %1754 = vmatprep.subr.mxu0 %v86
    %1755 = vmatpush1.msra.mxu0 %v85
    %1756 = vmatprep.subr.mxu0 0.0
    %1757 = vmatpush2.msra.mxu0 0.0
    %1758 = vmatprep.subr.mxu0 0.0
    %1759 = vmatpush2.msra.mxu0 0.0
    %1760 = vmatprep.subr.mxu0 0.0
    %1761 = vmatpush2.msra.mxu0 0.0
    %1762 = vmatprep.subr.mxu0 0.0
    %1763 = vmatpush2.msra.mxu0 0.0
    %1764 = vmatprep.subr.mxu0 0.0
    %1765 = vmatpush2.msra.mxu0 0.0
    %1766 = vmatprep.subr.mxu0 0.0
    %1767 = vmatpush2.msra.mxu0 0.0
    %1768 = vmatprep.subr.mxu0 0.0
    %1769 = vmatpush2.msra.mxu0 0.0
    %1770 = vmatprep.subr.mxu0 0.0
    %1771 = vmatpush2.msra.mxu0 0.0
    %1772 = vmatprep.subr.mxu0 0.0
    %1773 = vmatpush2.msra.mxu0 0.0
    %1774 = vmatprep.subr.mxu0 0.0
    %1775 = vmatpush2.msra.mxu0 0.0
    %1776 = vmatprep.subr.mxu0 0.0
    %1777 = vmatpush2.msra.mxu0 0.0
    %1778 = vmatprep.subr.mxu0 0.0
    %1779 = vmatpush2.msra.mxu0 0.0
    %1780 = vmatprep.subr.mxu0 0.0
    %1781 = vmatpush2.msra.mxu0 0.0
    %1782 = vmatprep.subr.mxu0 0.0
    %1783 = vmatpush2.msra.mxu0 0.0
    %1784 = vmatprep.subr.mxu0 0.0
    %1785 = vmatpush2.msra.mxu0 0.0
    %1786 = vmatprep.subr.mxu0 0.0
    %1787 = vmatpush2.msra.mxu0 0.0
    %1788 = vmatprep.mubr.f32.mxu0 0.0
    %1789 = vmatmul.mubr.f32.gmra.mxu0 %v1722
    %v1790 = vpop.f32.mrf.mxu0
    %v1791 = vadd.f32 0.0, %v1790
    %v1792 = vpop.f32.mrf.mxu0
    %v1793 = vadd.f32 0.0, %v1792
    %1794 = vdwg.mxu0
    %v1797 = vrot.slane %v1791, 6
    %v1798 = vrot.slane %v1793, 6
    %v1801 = vadd.f32 %v1612, %v1797
    %v1802 = vadd.f32 %v1613, %v1798
    %v1803 = vxor.u32 %v1801, 2147483648
    %v1804 = vxor.u32 %v1802, 2147483648
    %v1805 = vmul.f32 %v1803, 1.442695
    %v1806 = vpow.pop %v1805
    %v1807 = vmul.f32 %v1804, 1.442695
    %v1808 = vpow.pop %v1807
    %v1809 = vadd.f32 %v1806, 1.0
    %v1810 = vadd.f32 %v1808, 1.0
    %v1811 = vrcp.pop %v1809
    %v1812 = vmul.f32 1.0, %v1811
    %v1813 = vrcp.pop %v1810
    %v1814 = vmul.f32 1.0, %v1813
    %v1815 = vtanh.pop %v1802
    %v1817 = vrot.slane %v1712, 6
    %v1819 = vmul.f32 %v1812, %v1817
    %1821 = vrot.lane.b32.xlu0 %v1815, 64
    %v1822 = vpop.permute.xlu0 %1821
    %v1824 = vmul.f32 %v1812, %v1822
    %1826 = vrot.lane.b32.xlu0 %v1824, 64
    %v1827 = vpop.permute.xlu0 %1826
    %v1829 = vadd.f32 %v1819, %v1827
    %v1830 = vtanh.pop %v1829
    %1832 = vrot.lane.b32.xlu0 %v1830, 64
    %v1833 = vpop.permute.xlu0 %1832
    %v1835 = vmul.f32 %v1814, %v1833
    %1836 = vst.msk [vmem:[#allocation3] sm:$0xc] %vm649, %v1835
    %1837 = vst.msk [vmem:[#allocation3 + $0xa] sm:$0xc] %vm651, %v1835
    %v1839 = vrot.slane %v1835, 2
    %v1840 = vsel %vm423, %v1839, 0
    %1842 = vmatprep.subr.mxu0 0.0
    %1843 = vmatpush1.msra.mxu0 0.0
    %1844 = vmatprep.subr.mxu0 0.0
    %1845 = vmatpush1.msra.mxu0 0.0
    %1846 = vmatprep.subr.mxu0 0.0
    %1847 = vmatpush1.msra.mxu0 0.0
    %1848 = vmatprep.subr.mxu0 0.0
    %1849 = vmatpush1.msra.mxu0 0.0
    %1850 = vmatprep.subr.mxu0 0.0
    %1851 = vmatpush1.msra.mxu0 0.0
    %1852 = vmatprep.subr.mxu0 0.0
    %1853 = vmatpush1.msra.mxu0 0.0
    %1854 = vmatprep.subr.mxu0 0.0
    %1855 = vmatpush1.msra.mxu0 0.0
    %1856 = vmatprep.subr.mxu0 0.0
    %1857 = vmatpush1.msra.mxu0 0.0
    %1858 = vmatprep.subr.mxu0 %v100
    %1859 = vmatpush1.msra.mxu0 %v99
    %1860 = vmatprep.subr.mxu0 %v98
    %1861 = vmatpush1.msra.mxu0 %v97
    %1862 = vmatprep.subr.mxu0 %v96
    %1863 = vmatpush1.msra.mxu0 %v95
    %1864 = vmatprep.subr.mxu0 %v94
    %1865 = vmatpush1.msra.mxu0 %v93
    %1866 = vmatprep.subr.mxu0 %v92
    %1867 = vmatpush1.msra.mxu0 %v91
    %1868 = vmatprep.subr.mxu0 %v90
    %1869 = vmatpush1.msra.mxu0 %v89
    %1870 = vmatprep.subr.mxu0 %v88
    %1871 = vmatpush1.msra.mxu0 %v87
    %1872 = vmatprep.subr.mxu0 %v86
    %1873 = vmatpush1.msra.mxu0 %v85
    %1874 = vmatprep.subr.mxu0 0.0
    %1875 = vmatpush2.msra.mxu0 0.0
    %1876 = vmatprep.subr.mxu0 0.0
    %1877 = vmatpush2.msra.mxu0 0.0
    %1878 = vmatprep.subr.mxu0 0.0
    %1879 = vmatpush2.msra.mxu0 0.0
    %1880 = vmatprep.subr.mxu0 0.0
    %1881 = vmatpush2.msra.mxu0 0.0
    %1882 = vmatprep.subr.mxu0 0.0
    %1883 = vmatpush2.msra.mxu0 0.0
    %1884 = vmatprep.subr.mxu0 0.0
    %1885 = vmatpush2.msra.mxu0 0.0
    %1886 = vmatprep.subr.mxu0 0.0
    %1887 = vmatpush2.msra.mxu0 0.0
    %1888 = vmatprep.subr.mxu0 0.0
    %1889 = vmatpush2.msra.mxu0 0.0
    %1890 = vmatprep.subr.mxu0 0.0
    %1891 = vmatpush2.msra.mxu0 0.0
    %1892 = vmatprep.subr.mxu0 0.0
    %1893 = vmatpush2.msra.mxu0 0.0
    %1894 = vmatprep.subr.mxu0 0.0
    %1895 = vmatpush2.msra.mxu0 0.0
    %1896 = vmatprep.subr.mxu0 0.0
    %1897 = vmatpush2.msra.mxu0 0.0
    %1898 = vmatprep.subr.mxu0 0.0
    %1899 = vmatpush2.msra.mxu0 0.0
    %1900 = vmatprep.subr.mxu0 0.0
    %1901 = vmatpush2.msra.mxu0 0.0
    %1902 = vmatprep.subr.mxu0 0.0
    %1903 = vmatpush2.msra.mxu0 0.0
    %1904 = vmatprep.subr.mxu0 0.0
    %1905 = vmatpush2.msra.mxu0 0.0
    %1906 = vmatprep.mubr.f32.mxu0 0.0
    %1907 = vmatmul.mubr.f32.gmra.mxu0 %v1840
    %v1908 = vpop.f32.mrf.mxu0
    %v1909 = vadd.f32 0.0, %v1908
    %v1910 = vpop.f32.mrf.mxu0
    %v1911 = vadd.f32 0.0, %v1910
    %1912 = vdwg.mxu0
    %v1915 = vrot.slane %v1909, 4
    %v1916 = vrot.slane %v1911, 4
    %v1919 = vadd.f32 %v1612, %v1915
    %v1920 = vadd.f32 %v1613, %v1916
    %v1921 = vxor.u32 %v1919, 2147483648
    %v1922 = vxor.u32 %v1920, 2147483648
    %v1923 = vmul.f32 %v1921, 1.442695
    %v1924 = vpow.pop %v1923
    %v1925 = vmul.f32 %v1922, 1.442695
    %v1926 = vpow.pop %v1925
    %v1927 = vadd.f32 %v1924, 1.0
    %v1928 = vadd.f32 %v1926, 1.0
    %v1929 = vrcp.pop %v1927
    %v1930 = vmul.f32 1.0, %v1929
    %v1931 = vrcp.pop %v1928
    %v1932 = vmul.f32 1.0, %v1931
    %v1933 = vtanh.pop %v1920
    %v1935 = vrot.slane %v1829, 6
    %v1937 = vmul.f32 %v1930, %v1935
    %1939 = vrot.lane.b32.xlu0 %v1933, 64
    %v1940 = vpop.permute.xlu0 %1939
    %v1942 = vmul.f32 %v1930, %v1940
    %1944 = vrot.lane.b32.xlu0 %v1942, 64
    %v1945 = vpop.permute.xlu0 %1944
    %v1947 = vadd.f32 %v1937, %v1945
    %v1948 = vtanh.pop %v1947
    %1950 = vrot.lane.b32.xlu0 %v1948, 64
    %v1951 = vpop.permute.xlu0 %1950
    %v1953 = vmul.f32 %v1932, %v1951
    %1954 = vst.msk [vmem:[#allocation3] sm:$0x30] %vm769, %v1953
    %1955 = vst.msk [vmem:[#allocation3 + $0x6] sm:$0x30] %vm771, %v1953
    %v1957 = vrot.slane %v1953, 4
    %v1958 = vsel %vm423, %v1957, 0
    %1960 = vmatprep.subr.mxu0 0.0
    %1961 = vmatpush1.msra.mxu0 0.0
    %1962 = vmatprep.subr.mxu0 0.0
    %1963 = vmatpush1.msra.mxu0 0.0
    %1964 = vmatprep.subr.mxu0 0.0
    %1965 = vmatpush1.msra.mxu0 0.0
    %1966 = vmatprep.subr.mxu0 0.0
    %1967 = vmatpush1.msra.mxu0 0.0
    %1968 = vmatprep.subr.mxu0 0.0
    %1969 = vmatpush1.msra.mxu0 0.0
    %1970 = vmatprep.subr.mxu0 0.0
    %1971 = vmatpush1.msra.mxu0 0.0
    %1972 = vmatprep.subr.mxu0 0.0
    %1973 = vmatpush1.msra.mxu0 0.0
    %1974 = vmatprep.subr.mxu0 0.0
    %1975 = vmatpush1.msra.mxu0 0.0
    %1976 = vmatprep.subr.mxu0 %v100
    %1977 = vmatpush1.msra.mxu0 %v99
    %1978 = vmatprep.subr.mxu0 %v98
    %1979 = vmatpush1.msra.mxu0 %v97
    %1980 = vmatprep.subr.mxu0 %v96
    %1981 = vmatpush1.msra.mxu0 %v95
    %1982 = vmatprep.subr.mxu0 %v94
    %1983 = vmatpush1.msra.mxu0 %v93
    %1984 = vmatprep.subr.mxu0 %v92
    %1985 = vmatpush1.msra.mxu0 %v91
    %1986 = vmatprep.subr.mxu0 %v90
    %1987 = vmatpush1.msra.mxu0 %v89
    %1988 = vmatprep.subr.mxu0 %v88
    %1989 = vmatpush1.msra.mxu0 %v87
    %1990 = vmatprep.subr.mxu0 %v86
    %1991 = vmatpush1.msra.mxu0 %v85
    %1992 = vmatprep.subr.mxu0 0.0
    %1993 = vmatpush2.msra.mxu0 0.0
    %1994 = vmatprep.subr.mxu0 0.0
    %1995 = vmatpush2.msra.mxu0 0.0
    %1996 = vmatprep.subr.mxu0 0.0
    %1997 = vmatpush2.msra.mxu0 0.0
    %1998 = vmatprep.subr.mxu0 0.0
    %1999 = vmatpush2.msra.mxu0 0.0
    %2000 = vmatprep.subr.mxu0 0.0
    %2001 = vmatpush2.msra.mxu0 0.0
    %2002 = vmatprep.subr.mxu0 0.0
    %2003 = vmatpush2.msra.mxu0 0.0
    %2004 = vmatprep.subr.mxu0 0.0
    %2005 = vmatpush2.msra.mxu0 0.0
    %2006 = vmatprep.subr.mxu0 0.0
    %2007 = vmatpush2.msra.mxu0 0.0
    %2008 = vmatprep.subr.mxu0 0.0
    %2009 = vmatpush2.msra.mxu0 0.0
    %2010 = vmatprep.subr.mxu0 0.0
    %2011 = vmatpush2.msra.mxu0 0.0
    %2012 = vmatprep.subr.mxu0 0.0
    %2013 = vmatpush2.msra.mxu0 0.0
    %2014 = vmatprep.subr.mxu0 0.0
    %2015 = vmatpush2.msra.mxu0 0.0
    %2016 = vmatprep.subr.mxu0 0.0
    %2017 = vmatpush2.msra.mxu0 0.0
    %2018 = vmatprep.subr.mxu0 0.0
    %2019 = vmatpush2.msra.mxu0 0.0
    %2020 = vmatprep.subr.mxu0 0.0
    %2021 = vmatpush2.msra.mxu0 0.0
    %2022 = vmatprep.subr.mxu0 0.0
    %2023 = vmatpush2.msra.mxu0 0.0
    %2024 = vmatprep.mubr.f32.mxu0 0.0
    %2025 = vmatmul.mubr.f32.gmra.mxu0 %v1958
    %v2026 = vpop.f32.mrf.mxu0
    %v2027 = vadd.f32 0.0, %v2026
    %v2028 = vpop.f32.mrf.mxu0
    %v2029 = vadd.f32 0.0, %v2028
    %2030 = vdwg.mxu0
    %v2033 = vrot.slane %v2027, 2
    %v2034 = vrot.slane %v2029, 2
    %v2037 = vadd.f32 %v1612, %v2033
    %v2038 = vadd.f32 %v1613, %v2034
    %v2039 = vxor.u32 %v2037, 2147483648
    %v2040 = vxor.u32 %v2038, 2147483648
    %v2041 = vmul.f32 %v2039, 1.442695
    %v2042 = vpow.pop %v2041
    %v2043 = vmul.f32 %v2040, 1.442695
    %v2044 = vpow.pop %v2043
    %v2045 = vadd.f32 %v2042, 1.0
    %v2046 = vadd.f32 %v2044, 1.0
    %v2047 = vrcp.pop %v2045
    %v2048 = vmul.f32 1.0, %v2047
    %v2049 = vrcp.pop %v2046
    %v2050 = vmul.f32 1.0, %v2049
    %v2051 = vtanh.pop %v2038
    %v2053 = vrot.slane %v1947, 6
    %v2055 = vmul.f32 %v2048, %v2053
    %2057 = vrot.lane.b32.xlu0 %v2051, 64
    %v2058 = vpop.permute.xlu0 %2057
    %v2060 = vmul.f32 %v2048, %v2058
    %2062 = vrot.lane.b32.xlu0 %v2060, 64
    %v2063 = vpop.permute.xlu0 %2062
    %v2065 = vadd.f32 %v2055, %v2063
    %v2066 = vtanh.pop %v2065
    %2068 = vrot.lane.b32.xlu0 %v2066, 64
    %v2069 = vpop.permute.xlu0 %2068
    %v2071 = vmul.f32 %v2050, %v2069
    %2072 = vst.msk [vmem:[#allocation3] sm:$0xc0] %vm889, %v2071
    %2073 = vst.msk [vmem:[#allocation3 + $0x2] sm:$0xc0] %vm891, %v2071
    %v2075 = vrot.slane %v2071, 6
    %v2076 = vsel %vm423, %v2075, 0
    %2078 = vmatprep.subr.mxu0 0.0
    %2079 = vmatpush1.msra.mxu0 0.0
    %2080 = vmatprep.subr.mxu0 0.0
    %2081 = vmatpush1.msra.mxu0 0.0
    %2082 = vmatprep.subr.mxu0 0.0
    %2083 = vmatpush1.msra.mxu0 0.0
    %2084 = vmatprep.subr.mxu0 0.0
    %2085 = vmatpush1.msra.mxu0 0.0
    %2086 = vmatprep.subr.mxu0 0.0
    %2087 = vmatpush1.msra.mxu0 0.0
    %2088 = vmatprep.subr.mxu0 0.0
    %2089 = vmatpush1.msra.mxu0 0.0
    %2090 = vmatprep.subr.mxu0 0.0
    %2091 = vmatpush1.msra.mxu0 0.0
    %2092 = vmatprep.subr.mxu0 0.0
    %2093 = vmatpush1.msra.mxu0 0.0
    %2094 = vmatprep.subr.mxu0 %v100
    %2095 = vmatpush1.msra.mxu0 %v99
    %2096 = vmatprep.subr.mxu0 %v98
    %2097 = vmatpush1.msra.mxu0 %v97
    %2098 = vmatprep.subr.mxu0 %v96
    %2099 = vmatpush1.msra.mxu0 %v95
    %2100 = vmatprep.subr.mxu0 %v94
    %2101 = vmatpush1.msra.mxu0 %v93
    %2102 = vmatprep.subr.mxu0 %v92
    %2103 = vmatpush1.msra.mxu0 %v91
    %2104 = vmatprep.subr.mxu0 %v90
    %2105 = vmatpush1.msra.mxu0 %v89
    %2106 = vmatprep.subr.mxu0 %v88
    %2107 = vmatpush1.msra.mxu0 %v87
    %2108 = vmatprep.subr.mxu0 %v86
    %2109 = vmatpush1.msra.mxu0 %v85
    %2110 = vmatprep.subr.mxu0 0.0
    %2111 = vmatpush2.msra.mxu0 0.0
    %2112 = vmatprep.subr.mxu0 0.0
    %2113 = vmatpush2.msra.mxu0 0.0
    %2114 = vmatprep.subr.mxu0 0.0
    %2115 = vmatpush2.msra.mxu0 0.0
    %2116 = vmatprep.subr.mxu0 0.0
    %2117 = vmatpush2.msra.mxu0 0.0
    %2118 = vmatprep.subr.mxu0 0.0
    %2119 = vmatpush2.msra.mxu0 0.0
    %2120 = vmatprep.subr.mxu0 0.0
    %2121 = vmatpush2.msra.mxu0 0.0
    %2122 = vmatprep.subr.mxu0 0.0
    %2123 = vmatpush2.msra.mxu0 0.0
    %2124 = vmatprep.subr.mxu0 0.0
    %2125 = vmatpush2.msra.mxu0 0.0
    %2126 = vmatprep.subr.mxu0 0.0
    %2127 = vmatpush2.msra.mxu0 0.0
    %2128 = vmatprep.subr.mxu0 0.0
    %2129 = vmatpush2.msra.mxu0 0.0
    %2130 = vmatprep.subr.mxu0 0.0
    %2131 = vmatpush2.msra.mxu0 0.0
    %2132 = vmatprep.subr.mxu0 0.0
    %2133 = vmatpush2.msra.mxu0 0.0
    %2134 = vmatprep.subr.mxu0 0.0
    %2135 = vmatpush2.msra.mxu0 0.0
    %2136 = vmatprep.subr.mxu0 0.0
    %2137 = vmatpush2.msra.mxu0 0.0
    %2138 = vmatprep.subr.mxu0 0.0
    %2139 = vmatpush2.msra.mxu0 0.0
    %2140 = vmatprep.subr.mxu0 0.0
    %2141 = vmatpush2.msra.mxu0 0.0
    %2142 = vmatprep.mubr.f32.mxu0 0.0
    %2143 = vmatmul.mubr.f32.gmra.mxu0 %v2076
    %v2144 = vpop.f32.mrf.mxu0
    %v2145 = vadd.f32 0.0, %v2144
    %v2146 = vpop.f32.mrf.mxu0
    %v2147 = vadd.f32 0.0, %v2146
    %2148 = vdwg.mxu0
    %v2149 = vadd.f32 %v1614, %v2145
    %v2150 = vadd.f32 %v1615, %v2147
    %v2151 = vxor.u32 %v2149, 2147483648
    %v2152 = vxor.u32 %v2150, 2147483648
    %v2153 = vmul.f32 %v2151, 1.442695
    %v2154 = vpow.pop %v2153
    %v2155 = vmul.f32 %v2152, 1.442695
    %v2156 = vpow.pop %v2155
    %v2157 = vadd.f32 %v2154, 1.0
    %v2158 = vadd.f32 %v2156, 1.0
    %v2159 = vrcp.pop %v2157
    %v2160 = vmul.f32 1.0, %v2159
    %v2161 = vrcp.pop %v2158
    %v2162 = vmul.f32 1.0, %v2161
    %v2163 = vtanh.pop %v2150
    %v2165 = vrot.slane %v2065, 6
    %v2167 = vmul.f32 %v2160, %v2165
    %2169 = vrot.lane.b32.xlu0 %v2163, 64
    %v2170 = vpop.permute.xlu0 %2169
    %v2172 = vmul.f32 %v2160, %v2170
    %2174 = vrot.lane.b32.xlu0 %v2172, 64
    %v2175 = vpop.permute.xlu0 %2174
    %v2177 = vadd.f32 %v2167, %v2175
    %v2178 = vtanh.pop %v2177
    %2180 = vrot.lane.b32.xlu0 %v2178, 64
    %v2181 = vpop.permute.xlu0 %2180
    %v2183 = vmul.f32 %v2162, %v2181
    %2184 = vst.msk [vmem:[#allocation3 + $0x8] sm:$0x3] %vm530, %v2183
    %2185 = vst.msk [vmem:[#allocation3 + $0x6] sm:$0x3] %vm532, %v2183
    %v2187 = vsel %vm423, %v2183, 0
    %2189 = vmatprep.subr.mxu0 0.0
    %2190 = vmatpush1.msra.mxu0 0.0
    %2191 = vmatprep.subr.mxu0 0.0
    %2192 = vmatpush1.msra.mxu0 0.0
    %2193 = vmatprep.subr.mxu0 0.0
    %2194 = vmatpush1.msra.mxu0 0.0
    %2195 = vmatprep.subr.mxu0 0.0
    %2196 = vmatpush1.msra.mxu0 0.0
    %2197 = vmatprep.subr.mxu0 0.0
    %2198 = vmatpush1.msra.mxu0 0.0
    %2199 = vmatprep.subr.mxu0 0.0
    %2200 = vmatpush1.msra.mxu0 0.0
    %2201 = vmatprep.subr.mxu0 0.0
    %2202 = vmatpush1.msra.mxu0 0.0
    %2203 = vmatprep.subr.mxu0 0.0
    %2204 = vmatpush1.msra.mxu0 0.0
    %2205 = vmatprep.subr.mxu0 %v100
    %2206 = vmatpush1.msra.mxu0 %v99
    %2207 = vmatprep.subr.mxu0 %v98
    %2208 = vmatpush1.msra.mxu0 %v97
    %2209 = vmatprep.subr.mxu0 %v96
    %2210 = vmatpush1.msra.mxu0 %v95
    %2211 = vmatprep.subr.mxu0 %v94
    %2212 = vmatpush1.msra.mxu0 %v93
    %2213 = vmatprep.subr.mxu0 %v92
    %2214 = vmatpush1.msra.mxu0 %v91
    %2215 = vmatprep.subr.mxu0 %v90
    %2216 = vmatpush1.msra.mxu0 %v89
    %2217 = vmatprep.subr.mxu0 %v88
    %2218 = vmatpush1.msra.mxu0 %v87
    %2219 = vmatprep.subr.mxu0 %v86
    %2220 = vmatpush1.msra.mxu0 %v85
    %2221 = vmatprep.subr.mxu0 0.0
    %2222 = vmatpush2.msra.mxu0 0.0
    %2223 = vmatprep.subr.mxu0 0.0
    %2224 = vmatpush2.msra.mxu0 0.0
    %2225 = vmatprep.subr.mxu0 0.0
    %2226 = vmatpush2.msra.mxu0 0.0
    %2227 = vmatprep.subr.mxu0 0.0
    %2228 = vmatpush2.msra.mxu0 0.0
    %2229 = vmatprep.subr.mxu0 0.0
    %2230 = vmatpush2.msra.mxu0 0.0
    %2231 = vmatprep.subr.mxu0 0.0
    %2232 = vmatpush2.msra.mxu0 0.0
    %2233 = vmatprep.subr.mxu0 0.0
    %2234 = vmatpush2.msra.mxu0 0.0
    %2235 = vmatprep.subr.mxu0 0.0
    %2236 = vmatpush2.msra.mxu0 0.0
    %2237 = vmatprep.subr.mxu0 0.0
    %2238 = vmatpush2.msra.mxu0 0.0
    %2239 = vmatprep.subr.mxu0 0.0
    %2240 = vmatpush2.msra.mxu0 0.0
    %2241 = vmatprep.subr.mxu0 0.0
    %2242 = vmatpush2.msra.mxu0 0.0
    %2243 = vmatprep.subr.mxu0 0.0
    %2244 = vmatpush2.msra.mxu0 0.0
    %2245 = vmatprep.subr.mxu0 0.0
    %2246 = vmatpush2.msra.mxu0 0.0
    %2247 = vmatprep.subr.mxu0 0.0
    %2248 = vmatpush2.msra.mxu0 0.0
    %2249 = vmatprep.subr.mxu0 0.0
    %2250 = vmatpush2.msra.mxu0 0.0
    %2251 = vmatprep.subr.mxu0 0.0
    %2252 = vmatpush2.msra.mxu0 0.0
    %2253 = vmatprep.mubr.f32.mxu0 0.0
    %2254 = vmatmul.mubr.f32.gmra.mxu0 %v2187
    %v2255 = vpop.f32.mrf.mxu0
    %v2256 = vadd.f32 0.0, %v2255
    %v2257 = vpop.f32.mrf.mxu0
    %v2258 = vadd.f32 0.0, %v2257
    %2259 = vdwg.mxu0
    %v2262 = vrot.slane %v2256, 6
    %v2263 = vrot.slane %v2258, 6
    %v2266 = vadd.f32 %v1614, %v2262
    %v2267 = vadd.f32 %v1615, %v2263
    %v2268 = vxor.u32 %v2266, 2147483648
    %v2269 = vxor.u32 %v2267, 2147483648
    %v2270 = vmul.f32 %v2268, 1.442695
    %v2271 = vpow.pop %v2270
    %v2272 = vmul.f32 %v2269, 1.442695
    %v2273 = vpow.pop %v2272
    %v2274 = vadd.f32 %v2271, 1.0
    %v2275 = vadd.f32 %v2273, 1.0
    %v2276 = vrcp.pop %v2274
    %v2277 = vmul.f32 1.0, %v2276
    %v2278 = vrcp.pop %v2275
    %v2279 = vmul.f32 1.0, %v2278
    %v2280 = vtanh.pop %v2267
    %v2282 = vrot.slane %v2177, 6
    %v2284 = vmul.f32 %v2277, %v2282
    %2286 = vrot.lane.b32.xlu0 %v2280, 64
    %v2287 = vpop.permute.xlu0 %2286
    %v2289 = vmul.f32 %v2277, %v2287
    %2291 = vrot.lane.b32.xlu0 %v2289, 64
    %v2292 = vpop.permute.xlu0 %2291
    %v2294 = vadd.f32 %v2284, %v2292
    %v2295 = vtanh.pop %v2294
    %2297 = vrot.lane.b32.xlu0 %v2295, 64
    %v2298 = vpop.permute.xlu0 %2297
    %v2300 = vmul.f32 %v2279, %v2298
    %2301 = vst.msk [vmem:[#allocation3 + $0x8] sm:$0xc] %vm649, %v2300
    %2302 = vst.msk [vmem:[#allocation3 + $0x2] sm:$0xc] %vm651, %v2300
    %v2304 = vrot.slane %v2300, 2
    %v2305 = vsel %vm423, %v2304, 0
    %2307 = vmatprep.subr.mxu0 0.0
    %2308 = vmatpush1.msra.mxu0 0.0
    %2309 = vmatprep.subr.mxu0 0.0
    %2310 = vmatpush1.msra.mxu0 0.0
    %2311 = vmatprep.subr.mxu0 0.0
    %2312 = vmatpush1.msra.mxu0 0.0
    %2313 = vmatprep.subr.mxu0 0.0
    %2314 = vmatpush1.msra.mxu0 0.0
    %2315 = vmatprep.subr.mxu0 0.0
    %2316 = vmatpush1.msra.mxu0 0.0
    %2317 = vmatprep.subr.mxu0 0.0
    %2318 = vmatpush1.msra.mxu0 0.0
    %2319 = vmatprep.subr.mxu0 0.0
    %2320 = vmatpush1.msra.mxu0 0.0
    %2321 = vmatprep.subr.mxu0 0.0
    %2322 = vmatpush1.msra.mxu0 0.0
    %2323 = vmatprep.subr.mxu0 %v100
    %2324 = vmatpush1.msra.mxu0 %v99
    %2325 = vmatprep.subr.mxu0 %v98
    %2326 = vmatpush1.msra.mxu0 %v97
    %2327 = vmatprep.subr.mxu0 %v96
    %2328 = vmatpush1.msra.mxu0 %v95
    %2329 = vmatprep.subr.mxu0 %v94
    %2330 = vmatpush1.msra.mxu0 %v93
    %2331 = vmatprep.subr.mxu0 %v92
    %2332 = vmatpush1.msra.mxu0 %v91
    %2333 = vmatprep.subr.mxu0 %v90
    %2334 = vmatpush1.msra.mxu0 %v89
    %2335 = vmatprep.subr.mxu0 %v88
    %2336 = vmatpush1.msra.mxu0 %v87
    %2337 = vmatprep.subr.mxu0 %v86
    %2338 = vmatpush1.msra.mxu0 %v85
    %2339 = vmatprep.subr.mxu0 0.0
    %2340 = vmatpush2.msra.mxu0 0.0
    %2341 = vmatprep.subr.mxu0 0.0
    %2342 = vmatpush2.msra.mxu0 0.0
    %2343 = vmatprep.subr.mxu0 0.0
    %2344 = vmatpush2.msra.mxu0 0.0
    %2345 = vmatprep.subr.mxu0 0.0
    %2346 = vmatpush2.msra.mxu0 0.0
    %2347 = vmatprep.subr.mxu0 0.0
    %2348 = vmatpush2.msra.mxu0 0.0
    %2349 = vmatprep.subr.mxu0 0.0
    %2350 = vmatpush2.msra.mxu0 0.0
    %2351 = vmatprep.subr.mxu0 0.0
    %2352 = vmatpush2.msra.mxu0 0.0
    %2353 = vmatprep.subr.mxu0 0.0
    %2354 = vmatpush2.msra.mxu0 0.0
    %2355 = vmatprep.subr.mxu0 0.0
    %2356 = vmatpush2.msra.mxu0 0.0
    %2357 = vmatprep.subr.mxu0 0.0
    %2358 = vmatpush2.msra.mxu0 0.0
    %2359 = vmatprep.subr.mxu0 0.0
    %2360 = vmatpush2.msra.mxu0 0.0
    %2361 = vmatprep.subr.mxu0 0.0
    %2362 = vmatpush2.msra.mxu0 0.0
    %2363 = vmatprep.subr.mxu0 0.0
    %2364 = vmatpush2.msra.mxu0 0.0
    %2365 = vmatprep.subr.mxu0 0.0
    %2366 = vmatpush2.msra.mxu0 0.0
    %2367 = vmatprep.subr.mxu0 0.0
    %2368 = vmatpush2.msra.mxu0 0.0
    %2369 = vmatprep.subr.mxu0 0.0
    %2370 = vmatpush2.msra.mxu0 0.0
    %2371 = vmatprep.mubr.f32.mxu0 0.0
    %2372 = vmatmul.mubr.f32.gmra.mxu0 %v2305
    %v2373 = vpop.f32.mrf.mxu0
    %v2374 = vadd.f32 0.0, %v2373
    %v2375 = vpop.f32.mrf.mxu0
    %v2376 = vadd.f32 0.0, %v2375
    %2377 = vdwg.mxu0
    %v2380 = vrot.slane %v2374, 4
    %v2381 = vrot.slane %v2376, 4
    %v2384 = vadd.f32 %v1614, %v2380
    %v2385 = vadd.f32 %v1615, %v2381
    %v2386 = vxor.u32 %v2384, 2147483648
    %v2387 = vxor.u32 %v2385, 2147483648
    %v2388 = vmul.f32 %v2386, 1.442695
    %v2389 = vpow.pop %v2388
    %v2390 = vmul.f32 %v2387, 1.442695
    %v2391 = vpow.pop %v2390
    %v2392 = vadd.f32 %v2389, 1.0
    %v2393 = vadd.f32 %v2391, 1.0
    %v2394 = vrcp.pop %v2392
    %v2395 = vmul.f32 1.0, %v2394
    %v2396 = vrcp.pop %v2393
    %v2397 = vmul.f32 1.0, %v2396
    %v2398 = vtanh.pop %v2385
    %v2400 = vrot.slane %v2294, 6
    %v2402 = vmul.f32 %v2395, %v2400
    %2404 = vrot.lane.b32.xlu0 %v2398, 64
    %v2405 = vpop.permute.xlu0 %2404
    %v2407 = vmul.f32 %v2395, %v2405
    %2409 = vrot.lane.b32.xlu0 %v2407, 64
    %v2410 = vpop.permute.xlu0 %2409
    %v2412 = vadd.f32 %v2402, %v2410
    %v2413 = vtanh.pop %v2412
    %2415 = vrot.lane.b32.xlu0 %v2413, 64
    %v2416 = vpop.permute.xlu0 %2415
    %v2418 = vmul.f32 %v2397, %v2416
    %2419 = vst.msk [vmem:[#allocation3 + $0x8] sm:$0x30] %vm769, %v2418
    %2420 = vst.msk [vmem:[#allocation3 - $0x2] sm:$0x30] %vm771, %v2418
    %v2422 = vrot.slane %v2418, 4
    %v2423 = vsel %vm423, %v2422, 0
    %2425 = vmatprep.subr.mxu0 0.0
    %2426 = vmatpush1.msra.mxu0 0.0
    %2427 = vmatprep.subr.mxu0 0.0
    %2428 = vmatpush1.msra.mxu0 0.0
    %2429 = vmatprep.subr.mxu0 0.0
    %2430 = vmatpush1.msra.mxu0 0.0
    %2431 = vmatprep.subr.mxu0 0.0
    %2432 = vmatpush1.msra.mxu0 0.0
    %2433 = vmatprep.subr.mxu0 0.0
    %2434 = vmatpush1.msra.mxu0 0.0
    %2435 = vmatprep.subr.mxu0 0.0
    %2436 = vmatpush1.msra.mxu0 0.0
    %2437 = vmatprep.subr.mxu0 0.0
    %2438 = vmatpush1.msra.mxu0 0.0
    %2439 = vmatprep.subr.mxu0 0.0
    %2440 = vmatpush1.msra.mxu0 0.0
    %2441 = vmatprep.subr.mxu0 %v100
    %2442 = vmatpush1.msra.mxu0 %v99
    %2443 = vmatprep.subr.mxu0 %v98
    %2444 = vmatpush1.msra.mxu0 %v97
    %2445 = vmatprep.subr.mxu0 %v96
    %2446 = vmatpush1.msra.mxu0 %v95
    %2447 = vmatprep.subr.mxu0 %v94
    %2448 = vmatpush1.msra.mxu0 %v93
    %2449 = vmatprep.subr.mxu0 %v92
    %2450 = vmatpush1.msra.mxu0 %v91
    %2451 = vmatprep.subr.mxu0 %v90
    %2452 = vmatpush1.msra.mxu0 %v89
    %2453 = vmatprep.subr.mxu0 %v88
    %2454 = vmatpush1.msra.mxu0 %v87
    %2455 = vmatprep.subr.mxu0 %v86
    %2456 = vmatpush1.msra.mxu0 %v85
    %2457 = vmatprep.subr.mxu0 0.0
    %2458 = vmatpush2.msra.mxu0 0.0
    %2459 = vmatprep.subr.mxu0 0.0
    %2460 = vmatpush2.msra.mxu0 0.0
    %2461 = vmatprep.subr.mxu0 0.0
    %2462 = vmatpush2.msra.mxu0 0.0
    %2463 = vmatprep.subr.mxu0 0.0
    %2464 = vmatpush2.msra.mxu0 0.0
    %2465 = vmatprep.subr.mxu0 0.0
    %2466 = vmatpush2.msra.mxu0 0.0
    %2467 = vmatprep.subr.mxu0 0.0
    %2468 = vmatpush2.msra.mxu0 0.0
    %2469 = vmatprep.subr.mxu0 0.0
    %2470 = vmatpush2.msra.mxu0 0.0
    %2471 = vmatprep.subr.mxu0 0.0
    %2472 = vmatpush2.msra.mxu0 0.0
    %2473 = vmatprep.subr.mxu0 0.0
    %2474 = vmatpush2.msra.mxu0 0.0
    %2475 = vmatprep.subr.mxu0 0.0
    %2476 = vmatpush2.msra.mxu0 0.0
    %2477 = vmatprep.subr.mxu0 0.0
    %2478 = vmatpush2.msra.mxu0 0.0
    %2479 = vmatprep.subr.mxu0 0.0
    %2480 = vmatpush2.msra.mxu0 0.0
    %2481 = vmatprep.subr.mxu0 0.0
    %2482 = vmatpush2.msra.mxu0 0.0
    %2483 = vmatprep.subr.mxu0 0.0
    %2484 = vmatpush2.msra.mxu0 0.0
    %2485 = vmatprep.subr.mxu0 0.0
    %2486 = vmatpush2.msra.mxu0 0.0
    %2487 = vmatprep.subr.mxu0 0.0
    %2488 = vmatpush2.msra.mxu0 0.0
    %2489 = vmatprep.mubr.f32.mxu0 0.0
    %2490 = vmatmul.mubr.f32.gmra.mxu0 %v2423
    %v2491 = vpop.f32.mrf.mxu0
    %v2492 = vadd.f32 0.0, %v2491
    %v2493 = vpop.f32.mrf.mxu0
    %v2494 = vadd.f32 0.0, %v2493
    %2495 = vdwg.mxu0
    %v2498 = vrot.slane %v2492, 2
    %v2499 = vrot.slane %v2494, 2
    %v2502 = vadd.f32 %v1614, %v2498
    %v2503 = vadd.f32 %v1615, %v2499
    %v2504 = vxor.u32 %v2502, 2147483648
    %v2505 = vxor.u32 %v2503, 2147483648
    %v2506 = vmul.f32 %v2504, 1.442695
    %v2507 = vpow.pop %v2506
    %v2508 = vmul.f32 %v2505, 1.442695
    %v2509 = vpow.pop %v2508
    %v2510 = vadd.f32 %v2507, 1.0
    %v2511 = vadd.f32 %v2509, 1.0
    %v2512 = vrcp.pop %v2510
    %v2513 = vmul.f32 1.0, %v2512
    %v2514 = vrcp.pop %v2511
    %v2515 = vmul.f32 1.0, %v2514
    %v2516 = vtanh.pop %v2503
    %v2518 = vrot.slane %v2412, 6
    %v2520 = vmul.f32 %v2513, %v2518
    %2522 = vrot.lane.b32.xlu0 %v2516, 64
    %v2523 = vpop.permute.xlu0 %2522
    %v2525 = vmul.f32 %v2513, %v2523
    %2527 = vrot.lane.b32.xlu0 %v2525, 64
    %v2528 = vpop.permute.xlu0 %2527
    %v2530 = vadd.f32 %v2520, %v2528
    %v2531 = vtanh.pop %v2530
    %2533 = vrot.lane.b32.xlu0 %v2531, 64
    %v2534 = vpop.permute.xlu0 %2533
    %v2536 = vmul.f32 %v2515, %v2534
    %2537 = vst.msk [vmem:[#allocation3 + $0x8] sm:$0xc0] %vm889, %v2536
    %2538 = vst.msk [vmem:[#allocation3 - $0x6] sm:$0xc0] %vm891, %v2536
    %v2539 = vld [vmem:[#allocation3] sm:$0xff]
    %v2540 = vld [vmem:[#allocation3 + $0x8] sm:$0xff]
    %v2542 = vlaneseq
    %v2543 = vshrl.u32 %v2542, 7
    %v2544 = vsub.s32 0, %v2543
    %v2545 = vrot.slane %v122, %v2544
    %v2546 = vlaneseq
    %v2547 = vshrl.u32 %v2546, 7
    %v2548 = vsub.s32 1, %v2547
    %v2549 = vrot.slane %v122, %v2548
    %v2553 = vsel %vm423, %v2539, 0
    %v2556 = vsel %vm423, %v2540, 0
    %2558 = vmatprep.subr.mxu0 0.0
    %2559 = vmatpush1.msra.mxu0 0.0
    %2560 = vmatprep.subr.mxu0 0.0
    %2561 = vmatpush1.msra.mxu0 0.0
    %2562 = vmatprep.subr.mxu0 0.0
    %2563 = vmatpush1.msra.mxu0 0.0
    %2564 = vmatprep.subr.mxu0 0.0
    %2565 = vmatpush1.msra.mxu0 0.0
    %2566 = vmatprep.subr.mxu0 0.0
    %2567 = vmatpush1.msra.mxu0 0.0
    %2568 = vmatprep.subr.mxu0 0.0
    %2569 = vmatpush1.msra.mxu0 0.0
    %2570 = vmatprep.subr.mxu0 0.0
    %2571 = vmatpush1.msra.mxu0 0.0
    %2572 = vmatprep.subr.mxu0 0.0
    %2573 = vmatpush1.msra.mxu0 0.0
    %2574 = vmatprep.subr.mxu0 %v116
    %2575 = vmatpush1.msra.mxu0 %v115
    %2576 = vmatprep.subr.mxu0 %v114
    %2577 = vmatpush1.msra.mxu0 %v113
    %2578 = vmatprep.subr.mxu0 %v112
    %2579 = vmatpush1.msra.mxu0 %v111
    %2580 = vmatprep.subr.mxu0 %v110
    %2581 = vmatpush1.msra.mxu0 %v109
    %2582 = vmatprep.subr.mxu0 %v108
    %2583 = vmatpush1.msra.mxu0 %v107
    %2584 = vmatprep.subr.mxu0 %v106
    %2585 = vmatpush1.msra.mxu0 %v105
    %2586 = vmatprep.subr.mxu0 %v104
    %2587 = vmatpush1.msra.mxu0 %v103
    %2588 = vmatprep.subr.mxu0 %v102
    %2589 = vmatpush1.msra.mxu0 %v101
    %2590 = vmatprep.subr.mxu0 0.0
    %2591 = vmatpush2.msra.mxu0 0.0
    %2592 = vmatprep.subr.mxu0 0.0
    %2593 = vmatpush2.msra.mxu0 0.0
    %2594 = vmatprep.subr.mxu0 0.0
    %2595 = vmatpush2.msra.mxu0 0.0
    %2596 = vmatprep.subr.mxu0 0.0
    %2597 = vmatpush2.msra.mxu0 0.0
    %2598 = vmatprep.subr.mxu0 0.0
    %2599 = vmatpush2.msra.mxu0 0.0
    %2600 = vmatprep.subr.mxu0 0.0
    %2601 = vmatpush2.msra.mxu0 0.0
    %2602 = vmatprep.subr.mxu0 0.0
    %2603 = vmatpush2.msra.mxu0 0.0
    %2604 = vmatprep.subr.mxu0 0.0
    %2605 = vmatpush2.msra.mxu0 0.0
    %2606 = vmatprep.subr.mxu0 0.0
    %2607 = vmatpush2.msra.mxu0 0.0
    %2608 = vmatprep.subr.mxu0 0.0
    %2609 = vmatpush2.msra.mxu0 0.0
    %2610 = vmatprep.subr.mxu0 0.0
    %2611 = vmatpush2.msra.mxu0 0.0
    %2612 = vmatprep.subr.mxu0 0.0
    %2613 = vmatpush2.msra.mxu0 0.0
    %2614 = vmatprep.subr.mxu0 0.0
    %2615 = vmatpush2.msra.mxu0 0.0
    %2616 = vmatprep.subr.mxu0 0.0
    %2617 = vmatpush2.msra.mxu0 0.0
    %2618 = vmatprep.subr.mxu0 0.0
    %2619 = vmatpush2.msra.mxu0 0.0
    %2620 = vmatprep.subr.mxu0 0.0
    %2621 = vmatpush2.msra.mxu0 0.0
    %2622 = vmatprep.mubr.f32.mxu0 0.0
    %2623 = vmatmul.mubr.f32.gmra.mxu0 %v2553
    %v2624 = vpop.f32.mrf.mxu0
    %v2625 = vadd.f32 %v2545, %v2624
    %v2626 = vpop.f32.mrf.mxu0
    %v2627 = vadd.f32 %v2549, %v2626
    %2628 = vmatprep.mubr.f32.mxu0 0.0
    %2629 = vmatmul.mubr.f32.gmra.mxu0 %v2556
    %v2630 = vpop.f32.mrf.mxu0
    %v2631 = vadd.f32 %v2545, %v2630
    %v2632 = vpop.f32.mrf.mxu0
    %v2633 = vadd.f32 %v2549, %v2632
    %2634 = vdwg.mxu0
    %2637 = vrot.lane.b32.xlu0 %v2625, 64
    %v2638 = vpop.permute.xlu0 %2637
    %2639 = vrot.lane.b32.xlu0 %v2631, 64
    %v2640 = vpop.permute.xlu0 %2639
    %v2641 = vsel %vm423, %v2625, 0
    %v2643 = vsel %vm423, %v2631, 0
    %v2645 = vsel %vm423, %v2638, 0
    %v2647 = vsel %vm423, %v2640, 0
    %2649 = vmatprep.subr.mxu0 0.0
    %2650 = vmatpush1.xpose.msra.mxu0 0.0
    %2651 = vmatprep.subr.mxu0 0.0
    %2652 = vmatpush1.xpose.msra.mxu0 0.0
    %2653 = vmatprep.subr.mxu0 0.0
    %2654 = vmatpush1.xpose.msra.mxu0 0.0
    %2655 = vmatprep.subr.mxu0 0.0
    %2656 = vmatpush1.xpose.msra.mxu0 0.0
    %2657 = vmatprep.subr.mxu0 0.0
    %2658 = vmatpush1.xpose.msra.mxu0 0.0
    %2659 = vmatprep.subr.mxu0 0.0
    %2660 = vmatpush1.xpose.msra.mxu0 0.0
    %2661 = vmatprep.subr.mxu0 0.0
    %2662 = vmatpush1.xpose.msra.mxu0 0.0
    %2663 = vmatprep.subr.mxu0 0.0
    %2664 = vmatpush1.xpose.msra.mxu0 0.0
    %2665 = vmatprep.subr.mxu0 0.0
    %2666 = vmatpush1.xpose.msra.mxu0 0.0
    %2667 = vmatprep.subr.mxu0 0.0
    %2668 = vmatpush1.xpose.msra.mxu0 0.0
    %2669 = vmatprep.subr.mxu0 0.0
    %2670 = vmatpush1.xpose.msra.mxu0 0.0
    %2671 = vmatprep.subr.mxu0 0.0
    %2672 = vmatpush1.xpose.msra.mxu0 0.0
    %2673 = vmatprep.subr.mxu0 0.0
    %2674 = vmatpush1.xpose.msra.mxu0 0.0
    %2675 = vmatprep.subr.mxu0 0.0
    %2676 = vmatpush1.xpose.msra.mxu0 0.0
    %2677 = vmatprep.subr.mxu0 0.0
    %2678 = vmatpush1.xpose.msra.mxu0 %v2647
    %2679 = vmatprep.subr.mxu0 0.0
    %2680 = vmatpush1.xpose.msra.mxu0 %v2645
    %2681 = vmatprep.subr.mxu0 0.0
    %2682 = vmatpush2.xpose.msra.mxu0 0.0
    %2683 = vmatprep.subr.mxu0 0.0
    %2684 = vmatpush2.xpose.msra.mxu0 0.0
    %2685 = vmatprep.subr.mxu0 0.0
    %2686 = vmatpush2.xpose.msra.mxu0 0.0
    %2687 = vmatprep.subr.mxu0 0.0
    %2688 = vmatpush2.xpose.msra.mxu0 0.0
    %2689 = vmatprep.subr.mxu0 0.0
    %2690 = vmatpush2.xpose.msra.mxu0 0.0
    %2691 = vmatprep.subr.mxu0 0.0
    %2692 = vmatpush2.xpose.msra.mxu0 0.0
    %2693 = vmatprep.subr.mxu0 0.0
    %2694 = vmatpush2.xpose.msra.mxu0 0.0
    %2695 = vmatprep.subr.mxu0 0.0
    %2696 = vmatpush2.xpose.msra.mxu0 0.0
    %2697 = vmatprep.subr.mxu0 0.0
    %2698 = vmatpush2.xpose.msra.mxu0 0.0
    %2699 = vmatprep.subr.mxu0 0.0
    %2700 = vmatpush2.xpose.msra.mxu0 0.0
    %2701 = vmatprep.subr.mxu0 0.0
    %2702 = vmatpush2.xpose.msra.mxu0 0.0
    %2703 = vmatprep.subr.mxu0 0.0
    %2704 = vmatpush2.xpose.msra.mxu0 0.0
    %2705 = vmatprep.subr.mxu0 0.0
    %2706 = vmatpush2.xpose.msra.mxu0 0.0
    %2707 = vmatprep.subr.mxu0 0.0
    %2708 = vmatpush2.xpose.msra.mxu0 0.0
    %2709 = vmatprep.subr.mxu0 0.0
    %2710 = vmatpush2.xpose.msra.mxu0 0.0
    %2711 = vmatprep.subr.mxu0 0.0
    %2712 = vmatpush2.xpose.msra.mxu0 0.0
    %2713 = vmatprep.mubr.f32.mxu0 0.0
    %2714 = vmatmul.mubr.f32.gmra.mxu0 %v2641
    %v2715 = vpop.f32.mrf.mxu0
    %v2716 = vadd.f32 %v142, %v2715
    %v2717 = vpop.f32.mrf.mxu0
    %2718 = vmatprep.mubr.f32.mxu0 0.0
    %2719 = vmatmul.mubr.f32.gmra.mxu0 %v2643
    %v2720 = vpop.f32.mrf.mxu0
    %v2721 = vadd.f32 %v143, %v2720
    %v2722 = vpop.f32.mrf.mxu0
    %2723 = vdwg.mxu0
    %v2724 = vsel %vm160, %v2716, -inf
    %2725 = vmax.xlane.f32.xlu0 %v2724
    %v2726 = vpop.xlane.xlu0 %2725
    %v2727 = vsel %vm160, %v2721, -inf
    %2728 = vmax.xlane.f32.xlu0 %v2727
    %v2729 = vpop.xlane.xlu0 %2728
    %v2730 = vsub.f32 %v2716, %v2726
    %v2731 = vsub.f32 %v2721, %v2729
    %v2732 = vmul.f32 %v2730, 1.442695
    %v2733 = vpow.pop %v2732
    %v2734 = vmul.f32 %v2731, 1.442695
    %v2735 = vpow.pop %v2734
    %v2736 = vsel %vm160, %v2733, 0.0
    %2737 = vadd.xlane.f32.xlu0 %v2736
    %v2738 = vpop.xlane.xlu0 %2737
    %v2739 = vsel %vm160, %v2735, 0.0
    %2740 = vadd.xlane.f32.xlu0 %v2739
    %v2741 = vpop.xlane.xlu0 %2740
    %v2742 = vrcp.pop %v2738
    %v2743 = vmul.f32 %v2733, %v2742
    %v2744 = vrcp.pop %v2741
    %v2745 = vmul.f32 %v2735, %v2744
    %v2747 = vsel %vm160, %v2743, 0
    %v2750 = vsel %vm160, %v2745, 0
    %2752 = vmatprep.subr.mxu0 0.0
    %2753 = vmatpush1.msra.mxu0 0.0
    %2754 = vmatprep.subr.mxu0 0.0
    %2755 = vmatpush1.msra.mxu0 0.0
    %2756 = vmatprep.subr.mxu0 0.0
    %2757 = vmatpush1.msra.mxu0 0.0
    %2758 = vmatprep.subr.mxu0 0.0
    %2759 = vmatpush1.msra.mxu0 0.0
    %2760 = vmatprep.subr.mxu0 0.0
    %2761 = vmatpush1.msra.mxu0 0.0
    %2762 = vmatprep.subr.mxu0 0.0
    %2763 = vmatpush1.msra.mxu0 0.0
    %2764 = vmatprep.subr.mxu0 0.0
    %2765 = vmatpush1.msra.mxu0 0.0
    %2766 = vmatprep.subr.mxu0 0.0
    %2767 = vmatpush1.msra.mxu0 0.0
    %2768 = vmatprep.subr.mxu0 0.0
    %2769 = vmatpush1.msra.mxu0 0.0
    %2770 = vmatprep.subr.mxu0 0.0
    %2771 = vmatpush1.msra.mxu0 0.0
    %2772 = vmatprep.subr.mxu0 0.0
    %2773 = vmatpush1.msra.mxu0 0.0
    %2774 = vmatprep.subr.mxu0 0.0
    %2775 = vmatpush1.msra.mxu0 0.0
    %2776 = vmatprep.subr.mxu0 0.0
    %2777 = vmatpush1.msra.mxu0 0.0
    %2778 = vmatprep.subr.mxu0 0.0
    %2779 = vmatpush1.msra.mxu0 0.0
    %2780 = vmatprep.subr.mxu0 0.0
    %2781 = vmatpush1.msra.mxu0 %v2633
    %2782 = vmatprep.subr.mxu0 0.0
    %2783 = vmatpush1.msra.mxu0 %v2627
    %2784 = vmatprep.subr.mxu0 0.0
    %2785 = vmatpush2.msra.mxu0 0.0
    %2786 = vmatprep.subr.mxu0 0.0
    %2787 = vmatpush2.msra.mxu0 0.0
    %2788 = vmatprep.subr.mxu0 0.0
    %2789 = vmatpush2.msra.mxu0 0.0
    %2790 = vmatprep.subr.mxu0 0.0
    %2791 = vmatpush2.msra.mxu0 0.0
    %2792 = vmatprep.subr.mxu0 0.0
    %2793 = vmatpush2.msra.mxu0 0.0
    %2794 = vmatprep.subr.mxu0 0.0
    %2795 = vmatpush2.msra.mxu0 0.0
    %2796 = vmatprep.subr.mxu0 0.0
    %2797 = vmatpush2.msra.mxu0 0.0
    %2798 = vmatprep.subr.mxu0 0.0
    %2799 = vmatpush2.msra.mxu0 0.0
    %2800 = vmatprep.subr.mxu0 0.0
    %2801 = vmatpush2.msra.mxu0 0.0
    %2802 = vmatprep.subr.mxu0 0.0
    %2803 = vmatpush2.msra.mxu0 0.0
    %2804 = vmatprep.subr.mxu0 0.0
    %2805 = vmatpush2.msra.mxu0 0.0
    %2806 = vmatprep.subr.mxu0 0.0
    %2807 = vmatpush2.msra.mxu0 0.0
    %2808 = vmatprep.subr.mxu0 0.0
    %2809 = vmatpush2.msra.mxu0 0.0
    %2810 = vmatprep.subr.mxu0 0.0
    %2811 = vmatpush2.msra.mxu0 0.0
    %2812 = vmatprep.subr.mxu0 0.0
    %2813 = vmatpush2.msra.mxu0 0.0
    %2814 = vmatprep.subr.mxu0 0.0
    %2815 = vmatpush2.msra.mxu0 0.0
    %2816 = vmatprep.mubr.f32.mxu0 0.0
    %2817 = vmatmul.mubr.f32.gmra.mxu0 %v2747
    %v2818 = vpop.f32.mrf.mxu0
    %v2819 = vadd.f32 0.0, %v2818
    %v2820 = vpop.f32.mrf.mxu0
    %2821 = vmatprep.mubr.f32.mxu0 0.0
    %2822 = vmatmul.mubr.f32.gmra.mxu0 %v2750
    %v2823 = vpop.f32.mrf.mxu0
    %v2824 = vadd.f32 0.0, %v2823
    %v2825 = vpop.f32.mrf.mxu0
    %2826 = vdwg.mxu0
    %v2828 = vsel %vm423, %v2819, 0
    %v2831 = vsel %vm423, %v2824, 0
    %2833 = vmatprep.subr.mxu0 0.0
    %2834 = vmatpush1.msra.mxu0 0.0
    %2835 = vmatprep.subr.mxu0 0.0
    %2836 = vmatpush1.msra.mxu0 0.0
    %2837 = vmatprep.subr.mxu0 0.0
    %2838 = vmatpush1.msra.mxu0 0.0
    %2839 = vmatprep.subr.mxu0 0.0
    %2840 = vmatpush1.msra.mxu0 0.0
    %2841 = vmatprep.subr.mxu0 0.0
    %2842 = vmatpush1.msra.mxu0 0.0
    %2843 = vmatprep.subr.mxu0 0.0
    %2844 = vmatpush1.msra.mxu0 0.0
    %2845 = vmatprep.subr.mxu0 0.0
    %2846 = vmatpush1.msra.mxu0 0.0
    %2847 = vmatprep.subr.mxu0 0.0
    %2848 = vmatpush1.msra.mxu0 0.0
    %2849 = vmatprep.subr.mxu0 0.0
    %2850 = vmatpush1.msra.mxu0 %v138
    %2851 = vmatprep.subr.mxu0 0.0
    %2852 = vmatpush1.msra.mxu0 %v137
    %2853 = vmatprep.subr.mxu0 0.0
    %2854 = vmatpush1.msra.mxu0 %v136
    %2855 = vmatprep.subr.mxu0 0.0
    %2856 = vmatpush1.msra.mxu0 %v135
    %2857 = vmatprep.subr.mxu0 0.0
    %2858 = vmatpush1.msra.mxu0 %v134
    %2859 = vmatprep.subr.mxu0 0.0
    %2860 = vmatpush1.msra.mxu0 %v133
    %2861 = vmatprep.subr.mxu0 0.0
    %2862 = vmatpush1.msra.mxu0 %v132
    %2863 = vmatprep.subr.mxu0 0.0
    %2864 = vmatpush1.msra.mxu0 %v131
    %2865 = vmatprep.subr.mxu0 0.0
    %2866 = vmatpush2.msra.mxu0 0.0
    %2867 = vmatprep.subr.mxu0 0.0
    %2868 = vmatpush2.msra.mxu0 0.0
    %2869 = vmatprep.subr.mxu0 0.0
    %2870 = vmatpush2.msra.mxu0 0.0
    %2871 = vmatprep.subr.mxu0 0.0
    %2872 = vmatpush2.msra.mxu0 0.0
    %2873 = vmatprep.subr.mxu0 0.0
    %2874 = vmatpush2.msra.mxu0 0.0
    %2875 = vmatprep.subr.mxu0 0.0
    %2876 = vmatpush2.msra.mxu0 0.0
    %2877 = vmatprep.subr.mxu0 0.0
    %2878 = vmatpush2.msra.mxu0 0.0
    %2879 = vmatprep.subr.mxu0 0.0
    %2880 = vmatpush2.msra.mxu0 0.0
    %2881 = vmatprep.subr.mxu0 0.0
    %2882 = vmatpush2.msra.mxu0 0.0
    %2883 = vmatprep.subr.mxu0 0.0
    %2884 = vmatpush2.msra.mxu0 0.0
    %2885 = vmatprep.subr.mxu0 0.0
    %2886 = vmatpush2.msra.mxu0 0.0
    %2887 = vmatprep.subr.mxu0 0.0
    %2888 = vmatpush2.msra.mxu0 0.0
    %2889 = vmatprep.subr.mxu0 0.0
    %2890 = vmatpush2.msra.mxu0 0.0
    %2891 = vmatprep.subr.mxu0 0.0
    %2892 = vmatpush2.msra.mxu0 0.0
    %2893 = vmatprep.subr.mxu0 0.0
    %2894 = vmatpush2.msra.mxu0 0.0
    %2895 = vmatprep.subr.mxu0 0.0
    %2896 = vmatpush2.msra.mxu0 0.0
    %2897 = vmatprep.mubr.f32.mxu0 0.0
    %2898 = vmatmul.mubr.f32.gmra.mxu0 %v2828
    %v2899 = vpop.f32.mrf.mxu0
    %v2900 = vadd.f32 0.0, %v2899
    %v2901 = vpop.f32.mrf.mxu0
    %2902 = vmatprep.mubr.f32.mxu0 0.0
    %2903 = vmatmul.mubr.f32.gmra.mxu0 %v2831
    %v2904 = vpop.f32.mrf.mxu0
    %v2905 = vadd.f32 0.0, %v2904
    %v2906 = vpop.f32.mrf.mxu0
    %2907 = vdwg.mxu0
    %2908 = vmatprep.subr.mxu0 0.0
    %2909 = vmatpush1.msra.mxu0 0.0
    %2910 = vmatprep.subr.mxu0 0.0
    %2911 = vmatpush1.msra.mxu0 0.0
    %2912 = vmatprep.subr.mxu0 0.0
    %2913 = vmatpush1.msra.mxu0 0.0
    %2914 = vmatprep.subr.mxu0 0.0
    %2915 = vmatpush1.msra.mxu0 0.0
    %2916 = vmatprep.subr.mxu0 0.0
    %2917 = vmatpush1.msra.mxu0 0.0
    %2918 = vmatprep.subr.mxu0 0.0
    %2919 = vmatpush1.msra.mxu0 0.0
    %2920 = vmatprep.subr.mxu0 0.0
    %2921 = vmatpush1.msra.mxu0 0.0
    %2922 = vmatprep.subr.mxu0 0.0
    %2923 = vmatpush1.msra.mxu0 0.0
    %2924 = vmatprep.subr.mxu0 0.0
    %2925 = vmatpush1.msra.mxu0 %v130
    %2926 = vmatprep.subr.mxu0 0.0
    %2927 = vmatpush1.msra.mxu0 %v129
    %2928 = vmatprep.subr.mxu0 0.0
    %2929 = vmatpush1.msra.mxu0 %v128
    %2930 = vmatprep.subr.mxu0 0.0
    %2931 = vmatpush1.msra.mxu0 %v127
    %2932 = vmatprep.subr.mxu0 0.0
    %2933 = vmatpush1.msra.mxu0 %v126
    %2934 = vmatprep.subr.mxu0 0.0
    %2935 = vmatpush1.msra.mxu0 %v125
    %2936 = vmatprep.subr.mxu0 0.0
    %2937 = vmatpush1.msra.mxu0 %v124
    %2938 = vmatprep.subr.mxu0 0.0
    %2939 = vmatpush1.msra.mxu0 %v123
    %2940 = vmatprep.subr.mxu0 0.0
    %2941 = vmatpush2.msra.mxu0 0.0
    %2942 = vmatprep.subr.mxu0 0.0
    %2943 = vmatpush2.msra.mxu0 0.0
    %2944 = vmatprep.subr.mxu0 0.0
    %2945 = vmatpush2.msra.mxu0 0.0
    %2946 = vmatprep.subr.mxu0 0.0
    %2947 = vmatpush2.msra.mxu0 0.0
    %2948 = vmatprep.subr.mxu0 0.0
    %2949 = vmatpush2.msra.mxu0 0.0
    %2950 = vmatprep.subr.mxu0 0.0
    %2951 = vmatpush2.msra.mxu0 0.0
    %2952 = vmatprep.subr.mxu0 0.0
    %2953 = vmatpush2.msra.mxu0 0.0
    %2954 = vmatprep.subr.mxu0 0.0
    %2955 = vmatpush2.msra.mxu0 0.0
    %2956 = vmatprep.subr.mxu0 0.0
    %2957 = vmatpush2.msra.mxu0 0.0
    %2958 = vmatprep.subr.mxu0 0.0
    %2959 = vmatpush2.msra.mxu0 0.0
    %2960 = vmatprep.subr.mxu0 0.0
    %2961 = vmatpush2.msra.mxu0 0.0
    %2962 = vmatprep.subr.mxu0 0.0
    %2963 = vmatpush2.msra.mxu0 0.0
    %2964 = vmatprep.subr.mxu0 0.0
    %2965 = vmatpush2.msra.mxu0 0.0
    %2966 = vmatprep.subr.mxu0 0.0
    %2967 = vmatpush2.msra.mxu0 0.0
    %2968 = vmatprep.subr.mxu0 0.0
    %2969 = vmatpush2.msra.mxu0 0.0
    %2970 = vmatprep.subr.mxu0 0.0
    %2971 = vmatpush2.msra.mxu0 0.0
    %2972 = vmatprep.mubr.f32.mxu0 0.0
    %2973 = vmatmul.mubr.f32.gmra.mxu0 %v2553
    %v2974 = vpop.f32.mrf.mxu0
    %v2975 = vadd.f32 %v2900, %v2974
    %v2976 = vpop.f32.mrf.mxu0
    %2977 = vmatprep.mubr.f32.mxu0 0.0
    %2978 = vmatmul.mubr.f32.gmra.mxu0 %v2556
    %v2979 = vpop.f32.mrf.mxu0
    %v2980 = vadd.f32 %v2905, %v2979
    %v2981 = vpop.f32.mrf.mxu0
    %2982 = vdwg.mxu0
    %v2983 = vlaneseq
    %v2984 = vshrl.u32 %v2983, 7
    %v2985 = vsub.s32 0, %v2984
    %v2986 = vrot.slane %v139, %v2985
    %v2987 = vadd.f32 %v2975, %v2986
    %v2988 = vadd.f32 %v2980, %v2986
    %2989 = vst.msk [vmem:[#allocation7] sm:$0xff] %vm423, %v2987
    %2990 = vst.msk [vmem:[#allocation7 + $0x8] sm:$0xff] %vm423, %v2988
    // Predicated region
    $region18: #{wsd_bilstm_forward.1} parent=1 // pred_check
      _
    $region19: #{wsd_bilstm_forward.1} parent=1 // pred_check_branch
      %2992 = sbr.rel (0) target = $region21
    $region20: #{wsd_bilstm_forward.1} parent=1 // pred_region
      %s2994 = ssub.s32 256, 256
      %2995 = vsyncadd [#allocation6], %s2994
      %s2996 = sshll.u32 [#allocation7], 4
      %s2997 = int_to_ptr.vmem [resolvable:$true] %s2996
      %3002 = dma.vmem_to_hbm [thread:$0]  %s2997, 256, %s3, [#allocation6], 128, 128, 8
    $region21: #{wsd_bilstm_forward.1} parent=1 // pred_fallthru
      _
    // Predicated region
    $region22: #{wsd_bilstm_forward.1} parent=1 // pred_check
      _
    $region23: #{wsd_bilstm_forward.1} parent=1 // pred_check_branch
      %3004 = sbr.rel (0) target = $region25
    $region24: #{wsd_bilstm_forward.1} parent=1 // pred_region
      %3005 = dma.done [#allocation6], 256
    $region25: #{wsd_bilstm_forward.1} parent=1 // pred_fallthru
      _
    %3006 = vsyncpa [#allocation5], 1
    %3007 = vsyncpa [#allocation6], 1

</llo_original>
